<compile_context>
chip_gen: v6e
topology: v6e:2x2x1
jax: 0.10.0
libtpu: 0.0.40
codegen_flags: <defaults>
</compile_context>

<pallas_src>
import functools

import jax
import jax.numpy as jnp
from jax.experimental import pallas as pl
from jax.experimental.pallas import tpu as pltpu


def _round_up(x, m):
    return (x + m - 1) // m * m


# ----------------------------------------------------------------------------
# Pallas kernel: transposed conv matmul   y = relu(W @ P + b)
#   W: (Cout, K) bf16 (VMEM resident), P: (K, tm) bf16, b: (Cout, 1) f32
#   y: (Cout, tm) bf16  -- lane-dense output tile
# ----------------------------------------------------------------------------
def _conv_matmul_kernel(w_ref, b_ref, p_ref, o_ref):
    acc = jnp.dot(w_ref[...], p_ref[...], preferred_element_type=jnp.float32)
    acc = jnp.maximum(acc + b_ref[...], 0.0)
    o_ref[...] = acc.astype(o_ref.dtype)


def conv_matmul_t(w_mat, b, patches, *, tm):
    cout, k = w_mat.shape
    _, mp = patches.shape
    assert mp % tm == 0
    return pl.pallas_call(
        _conv_matmul_kernel,
        out_shape=jax.ShapeDtypeStruct((cout, mp), jnp.bfloat16),
        grid=(mp // tm,),
        in_specs=[
            pl.BlockSpec((cout, k), lambda i: (0, 0)),   # weights: stay in VMEM
            pl.BlockSpec((cout, 1), lambda i: (0, 0)),   # bias
            pl.BlockSpec((k, tm), lambda i: (0, i)),     # patch tile (pipelined)
        ],
        out_specs=pl.BlockSpec((cout, tm), lambda i: (0, i)),
        compiler_params=pltpu.CompilerParams(
            dimension_semantics=("parallel",),
            vmem_limit_bytes=32 * 1024 * 1024,
        ),
    )(w_mat, b.reshape(cout, 1), patches)


# ----------------------------------------------------------------------------
# im2col glue (plain JAX; channel-major layout). Heavy compute stays in Pallas.
# ----------------------------------------------------------------------------
def _im2col_t(x_cnhw, kh, kw, stride):
    """(C, N, H, W) -> (KH*KW*C, N*OH*OW); K order (kh, kw, c), M order (n, oh, ow)."""
    c, n, h, w = x_cnhw.shape
    oh = (h - kh) // stride + 1
    ow = (w - kw) // stride + 1
    cols = []
    for i in range(kh):
        for j in range(kw):
            cols.append(x_cnhw[:, :, i:i + stride * oh:stride, j:j + stride * ow:stride])
    p = jnp.stack(cols, axis=0)                      # (KH*KW, C, N, OH, OW)
    return p.reshape(kh * kw * c, n * oh * ow), oh, ow


def conv_relu(x_cnhw, w_oihw, b, stride):
    """Conv2d (valid padding) + ReLU.

    x_cnhw: (Cin, N, H, W) bf16 (channel-major), w_oihw: (Cout, Cin, KH, KW) torch layout.
    Returns (Cout, N, OH, OW) bf16."""
    cout, cin, kh, kw = w_oihw.shape
    _, n, _, _ = x_cnhw.shape
    patches, oh, ow = _im2col_t(x_cnhw, kh, kw, stride)            # (K, M)
    k, m = patches.shape
    w_mat = jnp.transpose(w_oihw, (0, 2, 3, 1)).reshape(cout, k)   # K order (kh, kw, c)

    # Align contraction dim (conv3: 576 -> 640); zero padding is exact.
    kp = _round_up(k, 128)
    if kp != k:
        w_mat = jnp.pad(w_mat, ((0, 0), (0, kp - k)))
        patches = jnp.pad(patches, ((0, kp - k), (0, 0)))

    # Lane tile of the output / patch columns (M axis).
    tm = min(512, _round_up(m, 128))
    mp = _round_up(m, tm)
    if mp != m:
        patches = jnp.pad(patches, ((0, 0), (0, mp - m)))

    y = conv_matmul_t(w_mat, b, patches, tm=tm)                    # (Cout, Mp) bf16
    return y[:, :m].reshape(cout, n, oh, ow)


# ----------------------------------------------------------------------------
# Pallas kernel: fused fc1 + fc2  (out = relu(x@W4+b4) @ W5p + b5p)
#   x: (tb, 3136) bf16, W4: (3136, 256) bf16, W5p: (256, 128) bf16 (padded cols)
# ----------------------------------------------------------------------------
def _fc_head_kernel(x_ref, w4_ref, b4_ref, w5_ref, b5_ref, o_ref):
    h = jnp.dot(x_ref[...], w4_ref[...], preferred_element_type=jnp.float32)
    h = jnp.maximum(h + b4_ref[...], 0.0)
    out = jnp.dot(h.astype(w5_ref.dtype), w5_ref[...],
                  preferred_element_type=jnp.float32)
    o_ref[...] = (out + b5_ref[...]).astype(o_ref.dtype)


def fc_head(x, w4, b4, w5p, b5p, *, tb):
    mp, k = x.shape
    hdim = w4.shape[1]
    pdim = w5p.shape[1]
    assert mp % tb == 0
    return pl.pallas_call(
        _fc_head_kernel,
        out_shape=jax.ShapeDtypeStruct((mp, pdim), jnp.float32),
        grid=(mp // tb,),
        in_specs=[
            pl.BlockSpec((tb, k), lambda i: (i, 0)),
            pl.BlockSpec((k, hdim), lambda i: (0, 0)),
            pl.BlockSpec((1, hdim), lambda i: (0, 0)),
            pl.BlockSpec((hdim, pdim), lambda i: (0, 0)),
            pl.BlockSpec((1, pdim), lambda i: (0, 0)),
        ],
        out_specs=pl.BlockSpec((tb, pdim), lambda i: (i, 0)),
        compiler_params=pltpu.CompilerParams(
            dimension_semantics=("parallel",),
            vmem_limit_bytes=32 * 1024 * 1024,
        ),
    )(x, w4, b4.reshape(1, hdim), w5p, b5p.reshape(1, pdim))


# ----------------------------------------------------------------------------
# Parameter init (kaiming-uniform weights like the torch module, torch-default biases)
# ----------------------------------------------------------------------------
def _kaiming_uniform(key, shape, fan_in):
    bound = jnp.sqrt(6.0 / fan_in)
    return jax.random.uniform(key, shape, jnp.float32, -bound, bound)


def _bias_uniform(key, shape, fan_in):
    bound = 1.0 / jnp.sqrt(float(fan_in))
    return jax.random.uniform(key, shape, jnp.float32, -bound, bound)


def init_params(key, action_space_size):
    ks = jax.random.split(key, 10)
    bf16 = jnp.bfloat16
    p = {}
    p["w1"] = _kaiming_uniform(ks[0], (32, 4, 8, 8), 4 * 8 * 8).astype(bf16)
    p["b1"] = _bias_uniform(ks[1], (32,), 4 * 8 * 8)
    p["w2"] = _kaiming_uniform(ks[2], (64, 32, 4, 4), 32 * 4 * 4).astype(bf16)
    p["b2"] = _bias_uniform(ks[3], (64,), 32 * 4 * 4)
    p["w3"] = _kaiming_uniform(ks[4], (64, 64, 3, 3), 64 * 3 * 3).astype(bf16)
    p["b3"] = _bias_uniform(ks[5], (64,), 64 * 3 * 3)
    # fc1: stored (K, N) = torch weight.T, input index order (c, h, w)
    p["w4"] = _kaiming_uniform(ks[6], (3136, 256), 3136).astype(bf16)
    p["b4"] = _bias_uniform(ks[7], (256,), 3136)
    # fc2: padded to a 128-lane-aligned output slab (real actions in cols [0, A))
    ap = _round_up(action_space_size, 128)
    w5 = _kaiming_uniform(ks[8], (256, action_space_size), 256)
    b5 = _bias_uniform(ks[9], (action_space_size,), 256)
    p["w5p"] = jnp.pad(w5, ((0, 0), (0, ap - action_space_size))).astype(bf16)
    p["b5p"] = jnp.pad(b5, (0, ap - action_space_size))
    return p


# ----------------------------------------------------------------------------
# Forward pass (matches NeuralNetwork.forward)
# ----------------------------------------------------------------------------
@functools.partial(jax.jit, static_argnames=("num_actions",))
def forward(params, x_nchw, *, num_actions):
    n = x_nchw.shape[0]
    # NCHW -> channel-major (C, N, H, W), bf16 operands for the MXU.
    x = jnp.transpose(x_nchw, (1, 0, 2, 3)).astype(jnp.bfloat16)
    x = conv_relu(x, params["w1"], params["b1"], stride=4)   # (32, N, 20, 20)
    x = conv_relu(x, params["w2"], params["b2"], stride=2)   # (64, N, 9, 9)
    x = conv_relu(x, params["w3"], params["b3"], stride=1)   # (64, N, 7, 7)
    # Flatten in PyTorch (C, H, W) order; channel-major layout makes this a cheap
    # leading-dim transpose of a small tensor.
    xf = jnp.transpose(x.reshape(64, n, 49), (1, 0, 2)).reshape(n, 3136)
    # Pad batch rows to the fc row tile.
    tb = min(128, _round_up(max(n, 1), 16))
    mp = _round_up(n, tb)
    if mp != n:
        xf = jnp.pad(xf, ((0, mp - n), (0, 0)))
    out = fc_head(xf, params["w4"], params["b4"], params["w5p"], params["b5p"], tb=tb)
    return out[:n, :num_actions]


if __name__ == "__main__":
    ACTION_SPACE = 6
    BATCH = 2
    key = jax.random.PRNGKey(0)
    k_params, k_x = jax.random.split(key)

    params = init_params(k_params, ACTION_SPACE)
    # fc1 = Linear(3136, 256) pins the spatial size to 84x84 (-> 64*7*7 = 3136).
    x = jax.random.uniform(k_x, (BATCH, 4, 84, 84), jnp.float32)

    out = forward(params, x, num_actions=ACTION_SPACE)
    out = jax.block_until_ready(out)
    assert out.shape == (BATCH, ACTION_SPACE), out.shape
    assert jnp.all(jnp.isfinite(out))
    print("KERNEL_OK")
</pallas_src>

<mosaic_0001>
module attributes {stable_mosaic.version = 11 : i64} {
  func.func @_conv_matmul_kernel(%arg0: i32, %arg1: memref<32x256xbf16, #tpu.memory_space<vmem>>, %arg2: memref<32x1xf32, #tpu.memory_space<vmem>>, %arg3: memref<256x512xbf16, #tpu.memory_space<vmem>>, %arg4: memref<32x512xbf16, #tpu.memory_space<vmem>>) attributes {dimension_semantics = [#tpu.dimension_semantics<parallel>], iteration_bounds = array<i64: 2>, scalar_prefetch = 0 : i64, scratch_operands = 0 : i64, tpu.core_type = #tpu.core_type<tc>, window_params = [{pipeline_mode = #tpu.pipeline_mode<synchronous>, transform_indices = @transform_0, window_bounds = array<i64: 32, 256>}, {pipeline_mode = #tpu.pipeline_mode<synchronous>, transform_indices = @transform_1, window_bounds = array<i64: 32, 1>}, {transform_indices = @transform_2, window_bounds = array<i64: 256, 512>}, {transform_indices = @transform_3, window_bounds = array<i64: 32, 512>}]} {
    %c0 = arith.constant 0 : index
    %c0_0 = arith.constant 0 : index
    %0 = vector.load %arg1[%c0, %c0_0] : memref<32x256xbf16, #tpu.memory_space<vmem>>, vector<32x256xbf16>
    %c0_1 = arith.constant 0 : index
    %c0_2 = arith.constant 0 : index
    %1 = vector.load %arg3[%c0_1, %c0_2] : memref<256x512xbf16, #tpu.memory_space<vmem>>, vector<256x512xbf16>
    %cst = arith.constant dense<0.000000e+00> : vector<32x512xf32>
    %2 = tpu.matmul %0, %1, %cst {dimension_numbers = #tpu.dot_dimension_numbers<[1], [0], [0], [1], [0, 0, 1, 1], [], []>} : vector<32x256xbf16>, vector<256x512xbf16>, vector<32x512xf32> -> vector<32x512xf32>
    %c0_3 = arith.constant 0 : index
    %c0_4 = arith.constant 0 : index
    %3 = vector.load %arg2[%c0_3, %c0_4] : memref<32x1xf32, #tpu.memory_space<vmem>>, vector<32x1xf32>
    %4 = vector.broadcast %3 : vector<32x1xf32> to vector<32x512xf32>
    %5 = arith.addf %2, %4 : vector<32x512xf32>
    %cst_5 = arith.constant 0.000000e+00 : f32
    %6 = vector.broadcast %cst_5 : f32 to vector<32x512xf32>
    %7 = arith.maximumf %5, %6 : vector<32x512xf32>
    %8 = arith.truncf %7 : vector<32x512xf32> to vector<32x512xbf16>
    %c0_6 = arith.constant 0 : index
    %c0_7 = arith.constant 0 : index
    %9 = vector.load %arg4[%c0_6, %c0_7] : memref<32x512xbf16, #tpu.memory_space<vmem>>, vector<32x512xbf16>
    tpu.vector_store %arg4[%c0_6, %c0_7], %8 {strides = array<i32>} : memref<32x512xbf16, #tpu.memory_space<vmem>>, vector<32x512xbf16>,
    return
  }
  func.func @transform_0(%arg0: i32) -> (i32, i32) {
    %c0_i32 = arith.constant 0 : i32
    %c0_i32_0 = arith.constant 0 : i32
    %c0_i32_1 = arith.constant 0 : i32
    return %c0_i32, %c0_i32_0 : i32, i32
  }
  func.func @transform_1(%arg0: i32) -> (i32, i32) {
    %c0_i32 = arith.constant 0 : i32
    %c0_i32_0 = arith.constant 0 : i32
    %c0_i32_1 = arith.constant 0 : i32
    return %c0_i32, %c0_i32_0 : i32, i32
  }
  func.func @transform_2(%arg0: i32) -> (i32, i32) {
    %c0_i32 = arith.constant 0 : i32
    %c0_i32_0 = arith.constant 0 : i32
    return %c0_i32, %arg0 : i32, i32
  }
  func.func @transform_3(%arg0: i32) -> (i32, i32) {
    %c0_i32 = arith.constant 0 : i32
    %c0_i32_0 = arith.constant 0 : i32
    return %c0_i32, %arg0 : i32, i32
  }
}

module attributes {stable_mosaic.version = 11 : i64} {
  func.func @_conv_matmul_kernel(%arg0: i32, %arg1: memref<64x512xbf16, #tpu.memory_space<vmem>>, %arg2: memref<64x1xf32, #tpu.memory_space<vmem>>, %arg3: memref<512x256xbf16, #tpu.memory_space<vmem>>, %arg4: memref<64x256xbf16, #tpu.memory_space<vmem>>) attributes {dimension_semantics = [#tpu.dimension_semantics<parallel>], iteration_bounds = array<i64: 1>, scalar_prefetch = 0 : i64, scratch_operands = 0 : i64, tpu.core_type = #tpu.core_type<tc>, window_params = [{pipeline_mode = #tpu.pipeline_mode<synchronous>, transform_indices = @transform_0, window_bounds = array<i64: 64, 512>}, {pipeline_mode = #tpu.pipeline_mode<synchronous>, transform_indices = @transform_1, window_bounds = array<i64: 64, 1>}, {transform_indices = @transform_2, window_bounds = array<i64: 512, 256>}, {transform_indices = @transform_3, window_bounds = array<i64: 64, 256>}]} {
    %c0 = arith.constant 0 : index
    %c0_0 = arith.constant 0 : index
    %0 = vector.load %arg1[%c0, %c0_0] : memref<64x512xbf16, #tpu.memory_space<vmem>>, vector<64x512xbf16>
    %c0_1 = arith.constant 0 : index
    %c0_2 = arith.constant 0 : index
    %1 = vector.load %arg3[%c0_1, %c0_2] : memref<512x256xbf16, #tpu.memory_space<vmem>>, vector<512x256xbf16>
    %cst = arith.constant dense<0.000000e+00> : vector<64x256xf32>
    %2 = tpu.matmul %0, %1, %cst {dimension_numbers = #tpu.dot_dimension_numbers<[1], [0], [0], [1], [0, 0, 1, 1], [], []>} : vector<64x512xbf16>, vector<512x256xbf16>, vector<64x256xf32> -> vector<64x256xf32>
    %c0_3 = arith.constant 0 : index
    %c0_4 = arith.constant 0 : index
    %3 = vector.load %arg2[%c0_3, %c0_4] : memref<64x1xf32, #tpu.memory_space<vmem>>, vector<64x1xf32>
    %4 = vector.broadcast %3 : vector<64x1xf32> to vector<64x256xf32>
    %5 = arith.addf %2, %4 : vector<64x256xf32>
    %cst_5 = arith.constant 0.000000e+00 : f32
    %6 = vector.broadcast %cst_5 : f32 to vector<64x256xf32>
    %7 = arith.maximumf %5, %6 : vector<64x256xf32>
    %8 = arith.truncf %7 : vector<64x256xf32> to vector<64x256xbf16>
    %c0_6 = arith.constant 0 : index
    %c0_7 = arith.constant 0 : index
    %9 = vector.load %arg4[%c0_6, %c0_7] : memref<64x256xbf16, #tpu.memory_space<vmem>>, vector<64x256xbf16>
    tpu.vector_store %arg4[%c0_6, %c0_7], %8 {strides = array<i32>} : memref<64x256xbf16, #tpu.memory_space<vmem>>, vector<64x256xbf16>,
    return
  }
  func.func @transform_0(%arg0: i32) -> (i32, i32) {
    %c0_i32 = arith.constant 0 : i32
    %c0_i32_0 = arith.constant 0 : i32
    %c0_i32_1 = arith.constant 0 : i32
    return %c0_i32, %c0_i32_0 : i32, i32
  }
  func.func @transform_1(%arg0: i32) -> (i32, i32) {
    %c0_i32 = arith.constant 0 : i32
    %c0_i32_0 = arith.constant 0 : i32
    %c0_i32_1 = arith.constant 0 : i32
    return %c0_i32, %c0_i32_0 : i32, i32
  }
  func.func @transform_2(%arg0: i32) -> (i32, i32) {
    %c0_i32 = arith.constant 0 : i32
    %c0_i32_0 = arith.constant 0 : i32
    return %c0_i32, %arg0 : i32, i32
  }
  func.func @transform_3(%arg0: i32) -> (i32, i32) {
    %c0_i32 = arith.constant 0 : i32
    %c0_i32_0 = arith.constant 0 : i32
    return %c0_i32, %arg0 : i32, i32
  }
}

module attributes {stable_mosaic.version = 11 : i64} {
  func.func @_conv_matmul_kernel(%arg0: i32, %arg1: memref<64x640xbf16, #tpu.memory_space<vmem>>, %arg2: memref<64x1xf32, #tpu.memory_space<vmem>>, %arg3: memref<640x128xbf16, #tpu.memory_space<vmem>>, %arg4: memref<64x128xbf16, #tpu.memory_space<vmem>>) attributes {dimension_semantics = [#tpu.dimension_semantics<parallel>], iteration_bounds = array<i64: 1>, scalar_prefetch = 0 : i64, scratch_operands = 0 : i64, tpu.core_type = #tpu.core_type<tc>, window_params = [{pipeline_mode = #tpu.pipeline_mode<synchronous>, transform_indices = @transform_0, window_bounds = array<i64: 64, 640>}, {pipeline_mode = #tpu.pipeline_mode<synchronous>, transform_indices = @transform_1, window_bounds = array<i64: 64, 1>}, {transform_indices = @transform_2, window_bounds = array<i64: 640, 128>}, {transform_indices = @transform_3, window_bounds = array<i64: 64, 128>}]} {
    %c0 = arith.constant 0 : index
    %c0_0 = arith.constant 0 : index
    %0 = vector.load %arg1[%c0, %c0_0] : memref<64x640xbf16, #tpu.memory_space<vmem>>, vector<64x640xbf16>
    %c0_1 = arith.constant 0 : index
    %c0_2 = arith.constant 0 : index
    %1 = vector.load %arg3[%c0_1, %c0_2] : memref<640x128xbf16, #tpu.memory_space<vmem>>, vector<640x128xbf16>
    %cst = arith.constant dense<0.000000e+00> : vector<64x128xf32>
    %2 = tpu.matmul %0, %1, %cst {dimension_numbers = #tpu.dot_dimension_numbers<[1], [0], [0], [1], [0, 0, 1, 1], [], []>} : vector<64x640xbf16>, vector<640x128xbf16>, vector<64x128xf32> -> vector<64x128xf32>
    %c0_3 = arith.constant 0 : index
    %c0_4 = arith.constant 0 : index
    %3 = vector.load %arg2[%c0_3, %c0_4] : memref<64x1xf32, #tpu.memory_space<vmem>>, vector<64x1xf32>
    %4 = vector.broadcast %3 : vector<64x1xf32> to vector<64x128xf32>
    %5 = arith.addf %2, %4 : vector<64x128xf32>
    %cst_5 = arith.constant 0.000000e+00 : f32
    %6 = vector.broadcast %cst_5 : f32 to vector<64x128xf32>
    %7 = arith.maximumf %5, %6 : vector<64x128xf32>
    %8 = arith.truncf %7 : vector<64x128xf32> to vector<64x128xbf16>
    %c0_6 = arith.constant 0 : index
    %c0_7 = arith.constant 0 : index
    %9 = vector.load %arg4[%c0_6, %c0_7] : memref<64x128xbf16, #tpu.memory_space<vmem>>, vector<64x128xbf16>
    tpu.vector_store %arg4[%c0_6, %c0_7], %8 {strides = array<i32>} : memref<64x128xbf16, #tpu.memory_space<vmem>>, vector<64x128xbf16>,
    return
  }
  func.func @transform_0(%arg0: i32) -> (i32, i32) {
    %c0_i32 = arith.constant 0 : i32
    %c0_i32_0 = arith.constant 0 : i32
    %c0_i32_1 = arith.constant 0 : i32
    return %c0_i32, %c0_i32_0 : i32, i32
  }
  func.func @transform_1(%arg0: i32) -> (i32, i32) {
    %c0_i32 = arith.constant 0 : i32
    %c0_i32_0 = arith.constant 0 : i32
    %c0_i32_1 = arith.constant 0 : i32
    return %c0_i32, %c0_i32_0 : i32, i32
  }
  func.func @transform_2(%arg0: i32) -> (i32, i32) {
    %c0_i32 = arith.constant 0 : i32
    %c0_i32_0 = arith.constant 0 : i32
    return %c0_i32, %arg0 : i32, i32
  }
  func.func @transform_3(%arg0: i32) -> (i32, i32) {
    %c0_i32 = arith.constant 0 : i32
    %c0_i32_0 = arith.constant 0 : i32
    return %c0_i32, %arg0 : i32, i32
  }
}

module attributes {stable_mosaic.version = 11 : i64} {
  func.func @_fc_head_kernel(%arg0: i32, %arg1: memref<16x3136xbf16, #tpu.memory_space<vmem>>, %arg2: memref<3136x256xbf16, #tpu.memory_space<vmem>>, %arg3: memref<1x256xf32, #tpu.memory_space<vmem>>, %arg4: memref<256x128xbf16, #tpu.memory_space<vmem>>, %arg5: memref<1x128xf32, #tpu.memory_space<vmem>>, %arg6: memref<16x128xf32, #tpu.memory_space<vmem>>) attributes {dimension_semantics = [#tpu.dimension_semantics<parallel>], iteration_bounds = array<i64: 1>, scalar_prefetch = 0 : i64, scratch_operands = 0 : i64, tpu.core_type = #tpu.core_type<tc>, window_params = [{transform_indices = @transform_0, window_bounds = array<i64: 16, 3136>}, {pipeline_mode = #tpu.pipeline_mode<synchronous>, transform_indices = @transform_1, window_bounds = array<i64: 3136, 256>}, {pipeline_mode = #tpu.pipeline_mode<synchronous>, transform_indices = @transform_2, window_bounds = array<i64: 1, 256>}, {pipeline_mode = #tpu.pipeline_mode<synchronous>, transform_indices = @transform_3, window_bounds = array<i64: 256, 128>}, {pipeline_mode = #tpu.pipeline_mode<synchronous>, transform_indices = @transform_4, window_bounds = array<i64: 1, 128>}, {transform_indices = @transform_5, window_bounds = array<i64: 16, 128>}]} {
    %c0 = arith.constant 0 : index
    %c0_0 = arith.constant 0 : index
    %0 = vector.load %arg1[%c0, %c0_0] : memref<16x3136xbf16, #tpu.memory_space<vmem>>, vector<16x3136xbf16>
    %c0_1 = arith.constant 0 : index
    %c0_2 = arith.constant 0 : index
    %1 = vector.load %arg2[%c0_1, %c0_2] : memref<3136x256xbf16, #tpu.memory_space<vmem>>, vector<3136x256xbf16>
    %cst = arith.constant dense<0.000000e+00> : vector<16x256xf32>
    %2 = tpu.matmul %0, %1, %cst {dimension_numbers = #tpu.dot_dimension_numbers<[1], [0], [0], [1], [0, 0, 1, 1], [], []>} : vector<16x3136xbf16>, vector<3136x256xbf16>, vector<16x256xf32> -> vector<16x256xf32>
    %c0_3 = arith.constant 0 : index
    %c0_4 = arith.constant 0 : index
    %3 = vector.load %arg3[%c0_3, %c0_4] : memref<1x256xf32, #tpu.memory_space<vmem>>, vector<1x256xf32>
    %4 = vector.broadcast %3 : vector<1x256xf32> to vector<16x256xf32>
    %5 = arith.addf %2, %4 : vector<16x256xf32>
    %cst_5 = arith.constant 0.000000e+00 : f32
    %6 = vector.broadcast %cst_5 : f32 to vector<16x256xf32>
    %7 = arith.maximumf %5, %6 : vector<16x256xf32>
    %8 = arith.truncf %7 : vector<16x256xf32> to vector<16x256xbf16>
    %c0_6 = arith.constant 0 : index
    %c0_7 = arith.constant 0 : index
    %9 = vector.load %arg4[%c0_6, %c0_7] : memref<256x128xbf16, #tpu.memory_space<vmem>>, vector<256x128xbf16>
    %cst_8 = arith.constant dense<0.000000e+00> : vector<16x128xf32>
    %10 = tpu.matmul %8, %9, %cst_8 {dimension_numbers = #tpu.dot_dimension_numbers<[1], [0], [0], [1], [0, 0, 1, 1], [], []>} : vector<16x256xbf16>, vector<256x128xbf16>, vector<16x128xf32> -> vector<16x128xf32>
    %c0_9 = arith.constant 0 : index
    %c0_10 = arith.constant 0 : index
    %11 = vector.load %arg5[%c0_9, %c0_10] : memref<1x128xf32, #tpu.memory_space<vmem>>, vector<1x128xf32>
    %12 = vector.broadcast %11 : vector<1x128xf32> to vector<16x128xf32>
    %13 = arith.addf %10, %12 : vector<16x128xf32>
    %c0_11 = arith.constant 0 : index
    %c0_12 = arith.constant 0 : index
    %14 = vector.load %arg6[%c0_11, %c0_12] : memref<16x128xf32, #tpu.memory_space<vmem>>, vector<16x128xf32>
    tpu.vector_store %arg6[%c0_11, %c0_12], %13 {strides = array<i32>} : memref<16x128xf32, #tpu.memory_space<vmem>>, vector<16x128xf32>,
    return
  }
  func.func @transform_0(%arg0: i32) -> (i32, i32) {
    %c0_i32 = arith.constant 0 : i32
    %c0_i32_0 = arith.constant 0 : i32
    return %arg0, %c0_i32 : i32, i32
  }
  func.func @transform_1(%arg0: i32) -> (i32, i32) {
    %c0_i32 = arith.constant 0 : i32
    %c0_i32_0 = arith.constant 0 : i32
    %c0_i32_1 = arith.constant 0 : i32
    return %c0_i32, %c0_i32_0 : i32, i32
  }
  func.func @transform_2(%arg0: i32) -> (i32, i32) {
    %c0_i32 = arith.constant 0 : i32
    %c0_i32_0 = arith.constant 0 : i32
    %c0_i32_1 = arith.constant 0 : i32
    return %c0_i32, %c0_i32_0 : i32, i32
  }
  func.func @transform_3(%arg0: i32) -> (i32, i32) {
    %c0_i32 = arith.constant 0 : i32
    %c0_i32_0 = arith.constant 0 : i32
    %c0_i32_1 = arith.constant 0 : i32
    return %c0_i32, %c0_i32_0 : i32, i32
  }
  func.func @transform_4(%arg0: i32) -> (i32, i32) {
    %c0_i32 = arith.constant 0 : i32
    %c0_i32_0 = arith.constant 0 : i32
    %c0_i32_1 = arith.constant 0 : i32
    return %c0_i32, %c0_i32_0 : i32, i32
  }
  func.func @transform_5(%arg0: i32) -> (i32, i32) {
    %c0_i32 = arith.constant 0 : i32
    %c0_i32_0 = arith.constant 0 : i32
    return %arg0, %c0_i32 : i32, i32
  }
}

</mosaic_0001>

<llo_original>
// kernel: forward.4
$region0: #{forward.4}
  #allocation0 [shape = 'u32[]', space=smem, size = 0x4, offset = 0x4, fixed_abs, tag = 'smem constant byte address 0x4 - core index']
  #allocation1 [shape = 'u32[144,128]{1,0:T(1,128)}', space=vmem, size = 0x12000, scoped, tag = 'internal scratch']
  %s0 = inlined_call_operand.vmem [shape: bf16[32,256], index: 0, kind: input, shape index: {}]
  %s1 = inlined_call_operand.vmem [shape: f32[32,1], index: 1, kind: input, shape index: {}]
  %s2 = inlined_call_operand.vmem [shape: bf16[256,1024], index: 2, kind: input, shape index: {}]
  %s3 = inlined_call_operand.vmem [shape: bf16[32,1024], index: 3, kind: output, shape index: {}]
  %s4 = sld [smem:[#allocation0]]
  $region87: #{forward.4} parent=0
    _
  %s6 = ssub.s32 1, %s4
  %s7 = scalar_select 0, %s6, %s4
  $region1: #{forward.4} parent=0
    #allocation2 [shape = 'u8[524288]{0}', space=vmem, size = 0x80000, scoped, tag = 'input window, operand 2']
    #allocation3 [shape = 'u8[65536]{0}', space=vmem, size = 0x10000, scoped, tag = 'output window, operand 0']
    loop: start=0, step=1, limit=4
    $region2: #{forward.4} parent=1 // loop_pre_header
      _
    $region3: #{forward.4} parent=1 // loop_header
      %s9 = sphi 0, %s13
      %p10 = scmp.ge.s32.totalorder %s9, 4
      %s17 = sphi 0, %s17
      %s19 = sphi 0, %s17
      %s20 = sphi 0, %s19
      %s34 = sphi 0, %s20
      %s38 = sphi 0, %s38
      %s40 = sphi 0, %s38
      %s41 = sphi 0, %s40
      %s55 = sphi 0, %s41
      %s61 = sphi 0, %s63
      %s64 = sphi 0, %s61
      %s65 = sphi 0, %s64
      %s81 = sphi 0, %s65
      %s87 = sphi 0, %s89
      %s90 = sphi 0, %s87
      %s91 = sphi 0, %s90
      %s107 = sphi 0, %s91
    $region4: #{forward.4} parent=1 // loop_header_branch
      %12 = sbr.rel (%p10) target = $region8
    $region5: #{forward.4} parent=1 // loop_body
      %s14 = ssub.s32 %s9, 1
      %s15 = ssub.s32 %s9, 2
      %s16 = sadd.s32 %s9, 1
      %s18 = sadd.s32 %s17, 1
      %p21 = scmp.eq.s32.totalorder %s9, 1
      %p22 = scmp.ne.s32.totalorder %s17, %s19
      %p23 = scmp.eq.s32.totalorder %s9, 0
      %p24 = por %p22, %p23
      %p25 = scmp.ne.s32.totalorder %s17, %s19
      %p26 = scmp.eq.s32.totalorder %s14, 1
      %p27 = por %p25, %p26
      %p28 = scmp.ne.s32.totalorder %s19, %s20
      %p29 = scmp.eq.s32.totalorder %s14, 0
      %p30 = por %p28, %p29
      %p31 = scmp.ne.s32.totalorder %s19, %s20
      %p32 = scmp.eq.s32.totalorder %s15, 1
      %p33 = por %p31, %p32
      %p35 = scmp.ne.s32.totalorder %s20, %s34
      %p36 = scmp.eq.s32.totalorder %s15, 0
      %p37 = por %p35, %p36
      %s39 = sadd.s32 %s38, 1
      %p42 = scmp.eq.s32.totalorder %s9, 1
      %p43 = scmp.ne.s32.totalorder %s38, %s40
      %p44 = scmp.eq.s32.totalorder %s9, 0
      %p45 = por %p43, %p44
      %p46 = scmp.ne.s32.totalorder %s38, %s40
      %p47 = scmp.eq.s32.totalorder %s14, 1
      %p48 = por %p46, %p47
      %p49 = scmp.ne.s32.totalorder %s40, %s41
      %p50 = scmp.eq.s32.totalorder %s14, 0
      %p51 = por %p49, %p50
      %p52 = scmp.ne.s32.totalorder %s40, %s41
      %p53 = scmp.eq.s32.totalorder %s15, 1
      %p54 = por %p52, %p53
      %p56 = scmp.ne.s32.totalorder %s41, %s55
      %p57 = scmp.eq.s32.totalorder %s15, 0
      %p58 = por %p56, %p57
      %s59 = ssub.s32 %s9, %s16
      %p60 = scmp.eq.s32.totalorder %s59, 0
      %s62 = sadd.s32 %s61, 1
      %s63 = scalar_select %p60, %s61, %s62
      %p66 = pneg %p60
      %p67 = scmp.eq.s32.totalorder %s9, 1
      %p68 = por %p66, %p67
      %p69 = scmp.ne.s32.totalorder %s61, %s64
      %p70 = scmp.eq.s32.totalorder %s9, 0
      %p71 = por %p69, %p70
      %p72 = scmp.ne.s32.totalorder %s61, %s64
      %p73 = scmp.eq.s32.totalorder %s14, 1
      %p74 = por %p72, %p73
      %p75 = scmp.ne.s32.totalorder %s64, %s65
      %p76 = scmp.eq.s32.totalorder %s14, 0
      %p77 = por %p75, %p76
      %p78 = scmp.ne.s32.totalorder %s64, %s65
      %p79 = scmp.eq.s32.totalorder %s15, 1
      %p80 = por %p78, %p79
      %p82 = scmp.ne.s32.totalorder %s65, %s81
      %p83 = scmp.eq.s32.totalorder %s15, 0
      %p84 = por %p82, %p83
      %s85 = ssub.s32 %s9, %s16
      %p86 = scmp.eq.s32.totalorder %s85, 0
      %s88 = sadd.s32 %s87, 1
      %s89 = scalar_select %p86, %s87, %s88
      %p92 = pneg %p86
      %p93 = scmp.eq.s32.totalorder %s9, 1
      %p94 = por %p92, %p93
      %p95 = scmp.ne.s32.totalorder %s87, %s90
      %p96 = scmp.eq.s32.totalorder %s9, 0
      %p97 = por %p95, %p96
      %p98 = scmp.ne.s32.totalorder %s87, %s90
      %p99 = scmp.eq.s32.totalorder %s14, 1
      %p100 = por %p98, %p99
      %p101 = scmp.ne.s32.totalorder %s90, %s91
      %p102 = scmp.eq.s32.totalorder %s14, 0
      %p103 = por %p101, %p102
      %p104 = scmp.ne.s32.totalorder %s90, %s91
      %p105 = scmp.eq.s32.totalorder %s15, 1
      %p106 = por %p104, %p105
      %p108 = scmp.ne.s32.totalorder %s91, %s107
      %p109 = scmp.eq.s32.totalorder %s15, 0
      %p110 = por %p108, %p109
      %p111 = scmp.le.s32.totalorder 1, %s9
      %p112 = scmp.lt.s32.totalorder %s9, 3
      %p113 = pnand %p111, %p112
      %p114 = pneg %p113
      // Predicated region
      $region9: #{forward.4} parent=5 // pred_check
        _
      $region10: #{forward.4} parent=5 // pred_check_branch
        %116 = sbr.rel (%p113) target = $region12
      $region11: #{forward.4} parent=5 // pred_region
        %s117 = ssub.s32 %s9, 1
        // Predicated region
        $region13: #{forward.4} parent=11 // pred_check
          %p118 = pneg %p30
        $region14: #{forward.4} parent=11 // pred_check_branch
          %120 = sbr.rel (%p118) target = $region16
        $region15: #{forward.4} parent=11 // pred_region
          _
        $region16: #{forward.4} parent=11 // pred_fallthru
          _
        // Predicated region
        $region17: #{forward.4} parent=11 // pred_check
          %p121 = pneg %p51
        $region18: #{forward.4} parent=11 // pred_check_branch
          %123 = sbr.rel (%p121) target = $region20
        $region19: #{forward.4} parent=11 // pred_region
          _
        $region20: #{forward.4} parent=11 // pred_fallthru
          _
      $region12: #{forward.4} parent=5 // pred_fallthru
        _
      %p124 = scmp.lt.s32.totalorder %s9, 2
      // Predicated region
      $region21: #{forward.4} parent=5 // pred_check
        %p125 = pneg %p124
      $region22: #{forward.4} parent=5 // pred_check_branch
        %127 = sbr.rel (%p125) target = $region24
      $region23: #{forward.4} parent=5 // pred_region
        // Predicated region
        $region25: #{forward.4} parent=23 // pred_check
          %p128 = pneg %p71
        $region26: #{forward.4} parent=23 // pred_check_branch
          %130 = sbr.rel (%p128) target = $region28
        $region27: #{forward.4} parent=23 // pred_region
          %s131 = sand.u32 %s61, 1
          %s132 = sand.u32 %s61, 1
          %s133 = smul.addr %s132, 512
          %s134 = scalar_lea.vmem [#allocation2], %s133
          %s135 = smul.u32 4, %s9
          %s136 = smul.addr %s135, 4
          %s137 = scalar_lea.vmem %s2, %s136
          // Predicated region
          $region29: #{forward.4} parent=27 // pred_check
            _
          $region30: #{forward.4} parent=27 // pred_check_branch
            %139 = sbr.rel (0) target = $region32
          $region31: #{forward.4} parent=27 // pred_region
            // Predicated region
            $region33: #{forward.4} parent=31 // pred_check
              _
            $region34: #{forward.4} parent=31 // pred_check_branch
              %141 = sbr.rel (0) target = $region36
            $region35: #{forward.4} parent=31 // pred_region
              loop: start=0, step=1, limit=1
              $region37: #{forward.4} parent=35 // loop_pre_header
                _
              $region38: #{forward.4} parent=35 // loop_header
                %s143 = sphi 0, %s147
                %p144 = scmp.ge.s32.totalorder %s143, 1
                %s148 = sphi %s137, %s137
                %s149 = sphi %s134, %s134
              $region39: #{forward.4} parent=35 // loop_header_branch
                %146 = sbr.rel (%p144) target = $region43
              $region40: #{forward.4} parent=35 // loop_body
                %v150 = vld [vmem:[%s148] sm:$0xff]
                %151 = vst [vmem:[%s149] sm:$0xff] %v150
                %v152 = vld [vmem:[%s148 + $0x8] sm:$0xff]
                %153 = vst [vmem:[%s149 + $0x8] sm:$0xff] %v152
                %v154 = vld [vmem:[%s148 + $0x20] sm:$0xff]
                %155 = vst [vmem:[%s149 + $0x10] sm:$0xff] %v154
                %v156 = vld [vmem:[%s148 + $0x28] sm:$0xff]
                %157 = vst [vmem:[%s149 + $0x18] sm:$0xff] %v156
                %v158 = vld [vmem:[%s148 + $0x40] sm:$0xff]
                %159 = vst [vmem:[%s149 + $0x20] sm:$0xff] %v158
                %v160 = vld [vmem:[%s148 + $0x48] sm:$0xff]
                %161 = vst [vmem:[%s149 + $0x28] sm:$0xff] %v160
                %v162 = vld [vmem:[%s148 + $0x60] sm:$0xff]
                %163 = vst [vmem:[%s149 + $0x30] sm:$0xff] %v162
                %v164 = vld [vmem:[%s148 + $0x68] sm:$0xff]
                %165 = vst [vmem:[%s149 + $0x38] sm:$0xff] %v164
                %v166 = vld [vmem:[%s148 + $0x80] sm:$0xff]
                %167 = vst [vmem:[%s149 + $0x40] sm:$0xff] %v166
                %v168 = vld [vmem:[%s148 + $0x88] sm:$0xff]
                %169 = vst [vmem:[%s149 + $0x48] sm:$0xff] %v168
                %v170 = vld [vmem:[%s148 + $0xa0] sm:$0xff]
                %171 = vst [vmem:[%s149 + $0x50] sm:$0xff] %v170
                %v172 = vld [vmem:[%s148 + $0xa8] sm:$0xff]
                %173 = vst [vmem:[%s149 + $0x58] sm:$0xff] %v172
                %v174 = vld [vmem:[%s148 + $0xc0] sm:$0xff]
                %175 = vst [vmem:[%s149 + $0x60] sm:$0xff] %v174
                %v176 = vld [vmem:[%s148 + $0xc8] sm:$0xff]
                %177 = vst [vmem:[%s149 + $0x68] sm:$0xff] %v176
                %v178 = vld [vmem:[%s148 + $0xe0] sm:$0xff]
                %179 = vst [vmem:[%s149 + $0x70] sm:$0xff] %v178
                %v180 = vld [vmem:[%s148 + $0xe8] sm:$0xff]
                %181 = vst [vmem:[%s149 + $0x78] sm:$0xff] %v180
                %v182 = vld [vmem:[%s148 + $0x100] sm:$0xff]
                %183 = vst [vmem:[%s149 + $0x80] sm:$0xff] %v182
                %v184 = vld [vmem:[%s148 + $0x108] sm:$0xff]
                %185 = vst [vmem:[%s149 + $0x88] sm:$0xff] %v184
                %v186 = vld [vmem:[%s148 + $0x120] sm:$0xff]
                %187 = vst [vmem:[%s149 + $0x90] sm:$0xff] %v186
                %v188 = vld [vmem:[%s148 + $0x128] sm:$0xff]
                %189 = vst [vmem:[%s149 + $0x98] sm:$0xff] %v188
                %v190 = vld [vmem:[%s148 + $0x140] sm:$0xff]
                %191 = vst [vmem:[%s149 + $0xa0] sm:$0xff] %v190
                %v192 = vld [vmem:[%s148 + $0x148] sm:$0xff]
                %193 = vst [vmem:[%s149 + $0xa8] sm:$0xff] %v192
                %v194 = vld [vmem:[%s148 + $0x160] sm:$0xff]
                %195 = vst [vmem:[%s149 + $0xb0] sm:$0xff] %v194
                %v196 = vld [vmem:[%s148 + $0x168] sm:$0xff]
                %197 = vst [vmem:[%s149 + $0xb8] sm:$0xff] %v196
                %v198 = vld [vmem:[%s148 + $0x180] sm:$0xff]
                %199 = vst [vmem:[%s149 + $0xc0] sm:$0xff] %v198
                %v200 = vld [vmem:[%s148 + $0x188] sm:$0xff]
                %201 = vst [vmem:[%s149 + $0xc8] sm:$0xff] %v200
                %v202 = vld [vmem:[%s148 + $0x1a0] sm:$0xff]
                %203 = vst [vmem:[%s149 + $0xd0] sm:$0xff] %v202
                %v204 = vld [vmem:[%s148 + $0x1a8] sm:$0xff]
                %205 = vst [vmem:[%s149 + $0xd8] sm:$0xff] %v204
                %v206 = vld [vmem:[%s148 + $0x1c0] sm:$0xff]
                %207 = vst [vmem:[%s149 + $0xe0] sm:$0xff] %v206
                %v208 = vld [vmem:[%s148 + $0x1c8] sm:$0xff]
                %209 = vst [vmem:[%s149 + $0xe8] sm:$0xff] %v208
                %v210 = vld [vmem:[%s148 + $0x1e0] sm:$0xff]
                %211 = vst [vmem:[%s149 + $0xf0] sm:$0xff] %v210
                %v212 = vld [vmem:[%s148 + $0x1e8] sm:$0xff]
                %213 = vst [vmem:[%s149 + $0xf8] sm:$0xff] %v212
                %v214 = vld [vmem:[%s148 + $0x200] sm:$0xff]
                %215 = vst [vmem:[%s149 + $0x100] sm:$0xff] %v214
                %v216 = vld [vmem:[%s148 + $0x208] sm:$0xff]
                %217 = vst [vmem:[%s149 + $0x108] sm:$0xff] %v216
                %v218 = vld [vmem:[%s148 + $0x220] sm:$0xff]
                %219 = vst [vmem:[%s149 + $0x110] sm:$0xff] %v218
                %v220 = vld [vmem:[%s148 + $0x228] sm:$0xff]
                %221 = vst [vmem:[%s149 + $0x118] sm:$0xff] %v220
                %v222 = vld [vmem:[%s148 + $0x240] sm:$0xff]
                %223 = vst [vmem:[%s149 + $0x120] sm:$0xff] %v222
                %v224 = vld [vmem:[%s148 + $0x248] sm:$0xff]
                %225 = vst [vmem:[%s149 + $0x128] sm:$0xff] %v224
                %v226 = vld [vmem:[%s148 + $0x260] sm:$0xff]
                %227 = vst [vmem:[%s149 + $0x130] sm:$0xff] %v226
                %v228 = vld [vmem:[%s148 + $0x268] sm:$0xff]
                %229 = vst [vmem:[%s149 + $0x138] sm:$0xff] %v228
                %v230 = vld [vmem:[%s148 + $0x280] sm:$0xff]
                %231 = vst [vmem:[%s149 + $0x140] sm:$0xff] %v230
                %v232 = vld [vmem:[%s148 + $0x288] sm:$0xff]
                %233 = vst [vmem:[%s149 + $0x148] sm:$0xff] %v232
                %v234 = vld [vmem:[%s148 + $0x2a0] sm:$0xff]
                %235 = vst [vmem:[%s149 + $0x150] sm:$0xff] %v234
                %v236 = vld [vmem:[%s148 + $0x2a8] sm:$0xff]
                %237 = vst [vmem:[%s149 + $0x158] sm:$0xff] %v236
                %v238 = vld [vmem:[%s148 + $0x2c0] sm:$0xff]
                %239 = vst [vmem:[%s149 + $0x160] sm:$0xff] %v238
                %v240 = vld [vmem:[%s148 + $0x2c8] sm:$0xff]
                %241 = vst [vmem:[%s149 + $0x168] sm:$0xff] %v240
                %v242 = vld [vmem:[%s148 + $0x2e0] sm:$0xff]
                %243 = vst [vmem:[%s149 + $0x170] sm:$0xff] %v242
                %v244 = vld [vmem:[%s148 + $0x2e8] sm:$0xff]
                %245 = vst [vmem:[%s149 + $0x178] sm:$0xff] %v244
                %v246 = vld [vmem:[%s148 + $0x300] sm:$0xff]
                %247 = vst [vmem:[%s149 + $0x180] sm:$0xff] %v246
                %v248 = vld [vmem:[%s148 + $0x308] sm:$0xff]
                %249 = vst [vmem:[%s149 + $0x188] sm:$0xff] %v248
                %v250 = vld [vmem:[%s148 + $0x320] sm:$0xff]
                %251 = vst [vmem:[%s149 + $0x190] sm:$0xff] %v250
                %v252 = vld [vmem:[%s148 + $0x328] sm:$0xff]
                %253 = vst [vmem:[%s149 + $0x198] sm:$0xff] %v252
                %v254 = vld [vmem:[%s148 + $0x340] sm:$0xff]
                %255 = vst [vmem:[%s149 + $0x1a0] sm:$0xff] %v254
                %v256 = vld [vmem:[%s148 + $0x348] sm:$0xff]
                %257 = vst [vmem:[%s149 + $0x1a8] sm:$0xff] %v256
                %v258 = vld [vmem:[%s148 + $0x360] sm:$0xff]
                %259 = vst [vmem:[%s149 + $0x1b0] sm:$0xff] %v258
                %v260 = vld [vmem:[%s148 + $0x368] sm:$0xff]
                %261 = vst [vmem:[%s149 + $0x1b8] sm:$0xff] %v260
                %v262 = vld [vmem:[%s148 + $0x380] sm:$0xff]
                %263 = vst [vmem:[%s149 + $0x1c0] sm:$0xff] %v262
                %v264 = vld [vmem:[%s148 + $0x388] sm:$0xff]
                %265 = vst [vmem:[%s149 + $0x1c8] sm:$0xff] %v264
                %v266 = vld [vmem:[%s148 + $0x3a0] sm:$0xff]
                %267 = vst [vmem:[%s149 + $0x1d0] sm:$0xff] %v266
                %v268 = vld [vmem:[%s148 + $0x3a8] sm:$0xff]
                %269 = vst [vmem:[%s149 + $0x1d8] sm:$0xff] %v268
                %v270 = vld [vmem:[%s148 + $0x3c0] sm:$0xff]
                %271 = vst [vmem:[%s149 + $0x1e0] sm:$0xff] %v270
                %v272 = vld [vmem:[%s148 + $0x3c8] sm:$0xff]
                %273 = vst [vmem:[%s149 + $0x1e8] sm:$0xff] %v272
                %v274 = vld [vmem:[%s148 + $0x3e0] sm:$0xff]
                %275 = vst [vmem:[%s149 + $0x1f0] sm:$0xff] %v274
                %v276 = vld [vmem:[%s148 + $0x3e8] sm:$0xff]
                %277 = vst [vmem:[%s149 + $0x1f8] sm:$0xff] %v276
              $region41: #{forward.4} parent=35 // loop_footer
                %s147 = sadd.s32 1, %s143
              $region42: #{forward.4} parent=35 // loop_footer_branch
                %142 = sbr.rel target = $region38
              $region43: #{forward.4} parent=35 // loop_exit
                _
            $region36: #{forward.4} parent=31 // pred_fallthru
              _
            // Predicated region
            $region44: #{forward.4} parent=31 // pred_check
              _
            $region45: #{forward.4} parent=31 // pred_check_branch
              %279 = sbr.rel target = $region47
            $region46: #{forward.4} parent=31 // pred_region
              _
            $region47: #{forward.4} parent=31 // pred_fallthru
              _
          $region32: #{forward.4} parent=27 // pred_fallthru
            _
          %280 = vnop
        $region28: #{forward.4} parent=23 // pred_fallthru
          _
      $region24: #{forward.4} parent=5 // pred_fallthru
        _
      %p281 = scmp.le.s32.totalorder 1, %s9
      %p282 = scmp.lt.s32.totalorder %s9, 3
      %p283 = pnand %p281, %p282
      %p284 = pneg %p283
      // Predicated region
      $region48: #{forward.4} parent=5 // pred_check
        _
      $region49: #{forward.4} parent=5 // pred_check_branch
        %286 = sbr.rel (%p283) target = $region51
      $region50: #{forward.4} parent=5 // pred_region
        %s287 = ssub.s32 %s9, 1
        %s288 = sand.u32 %s64, 1
        %s289 = sand.u32 %s64, 1
        %s290 = smul.addr %s289, 512
        %s291 = scalar_lea.vmem [#allocation2], %s290
        // Predicated region
        $region52: #{forward.4} parent=50 // pred_check
          %p292 = pneg %p77
        $region53: #{forward.4} parent=50 // pred_check_branch
          %294 = sbr.rel (%p292) target = $region55
        $region54: #{forward.4} parent=50 // pred_region
          _
        $region55: #{forward.4} parent=50 // pred_fallthru
          _
        %p295 = pneg %p30
        %p296 = pneg %p27
        %p297 = pneg %p51
        %p298 = pneg %p48
        %s299 = sand.u32 %s64, 1
        %s300 = sand.u32 %s64, 1
        %s301 = smul.addr %s300, 512
        %s302 = scalar_lea.vmem [#allocation2], %s301
        %p303 = pneg %p77
        %p304 = pneg %p74
        %p305 = pneg %p103
        %p306 = pneg %p100
        %s307 = sand.u32 %s90, 1
        %s308 = sand.u32 %s90, 1
        %s309 = smul.addr %s308, 64
        %s310 = scalar_lea.vmem [#allocation3], %s309
        %s311 = smul.u32 4, %s14
        %s312 = smul.u32 4, %s14
        %v313 = vld [vmem:[%s0] sm:$0xff]
        %v314 = vld [vmem:[%s0 + $0x8] sm:$0xff]
        %v315 = vld [vmem:[%s0 + $0x10] sm:$0xff]
        %v316 = vld [vmem:[%s0 + $0x18] sm:$0xff]
        %v317 = vld [vmem:[%s291] sm:$0xff]
        %v318 = vld [vmem:[%s291 + $0x8] sm:$0xff]
        %v319 = vld [vmem:[%s291 + $0x10] sm:$0xff]
        %v320 = vld [vmem:[%s291 + $0x18] sm:$0xff]
        %v321 = vld [vmem:[%s291 + $0x20] sm:$0xff]
        %v322 = vld [vmem:[%s291 + $0x28] sm:$0xff]
        %v323 = vld [vmem:[%s291 + $0x30] sm:$0xff]
        %v324 = vld [vmem:[%s291 + $0x38] sm:$0xff]
        %v325 = vld [vmem:[%s291 + $0x40] sm:$0xff]
        %v326 = vld [vmem:[%s291 + $0x48] sm:$0xff]
        %v327 = vld [vmem:[%s291 + $0x50] sm:$0xff]
        %v328 = vld [vmem:[%s291 + $0x58] sm:$0xff]
        %v329 = vld [vmem:[%s291 + $0x60] sm:$0xff]
        %v330 = vld [vmem:[%s291 + $0x68] sm:$0xff]
        %v331 = vld [vmem:[%s291 + $0x70] sm:$0xff]
        %v332 = vld [vmem:[%s291 + $0x78] sm:$0xff]
        %v333 = vld [vmem:[%s291 + $0x80] sm:$0xff]
        %v334 = vld [vmem:[%s291 + $0x88] sm:$0xff]
        %v335 = vld [vmem:[%s291 + $0x90] sm:$0xff]
        %v336 = vld [vmem:[%s291 + $0x98] sm:$0xff]
        %v337 = vld [vmem:[%s291 + $0xa0] sm:$0xff]
        %v338 = vld [vmem:[%s291 + $0xa8] sm:$0xff]
        %v339 = vld [vmem:[%s291 + $0xb0] sm:$0xff]
        %v340 = vld [vmem:[%s291 + $0xb8] sm:$0xff]
        %v341 = vld [vmem:[%s291 + $0xc0] sm:$0xff]
        %v342 = vld [vmem:[%s291 + $0xc8] sm:$0xff]
        %v343 = vld [vmem:[%s291 + $0xd0] sm:$0xff]
        %v344 = vld [vmem:[%s291 + $0xd8] sm:$0xff]
        %v345 = vld [vmem:[%s291 + $0xe0] sm:$0xff]
        %v346 = vld [vmem:[%s291 + $0xe8] sm:$0xff]
        %v347 = vld [vmem:[%s291 + $0xf0] sm:$0xff]
        %v348 = vld [vmem:[%s291 + $0xf8] sm:$0xff]
        %v349 = vld [vmem:[%s291 + $0x100] sm:$0xff]
        %v350 = vld [vmem:[%s291 + $0x108] sm:$0xff]
        %v351 = vld [vmem:[%s291 + $0x110] sm:$0xff]
        %v352 = vld [vmem:[%s291 + $0x118] sm:$0xff]
        %v353 = vld [vmem:[%s291 + $0x120] sm:$0xff]
        %v354 = vld [vmem:[%s291 + $0x128] sm:$0xff]
        %v355 = vld [vmem:[%s291 + $0x130] sm:$0xff]
        %v356 = vld [vmem:[%s291 + $0x138] sm:$0xff]
        %v357 = vld [vmem:[%s291 + $0x140] sm:$0xff]
        %v358 = vld [vmem:[%s291 + $0x148] sm:$0xff]
        %v359 = vld [vmem:[%s291 + $0x150] sm:$0xff]
        %v360 = vld [vmem:[%s291 + $0x158] sm:$0xff]
        %v361 = vld [vmem:[%s291 + $0x160] sm:$0xff]
        %v362 = vld [vmem:[%s291 + $0x168] sm:$0xff]
        %v363 = vld [vmem:[%s291 + $0x170] sm:$0xff]
        %v364 = vld [vmem:[%s291 + $0x178] sm:$0xff]
        %v365 = vld [vmem:[%s291 + $0x180] sm:$0xff]
        %v366 = vld [vmem:[%s291 + $0x188] sm:$0xff]
        %v367 = vld [vmem:[%s291 + $0x190] sm:$0xff]
        %v368 = vld [vmem:[%s291 + $0x198] sm:$0xff]
        %v369 = vld [vmem:[%s291 + $0x1a0] sm:$0xff]
        %v370 = vld [vmem:[%s291 + $0x1a8] sm:$0xff]
        %v371 = vld [vmem:[%s291 + $0x1b0] sm:$0xff]
        %v372 = vld [vmem:[%s291 + $0x1b8] sm:$0xff]
        %v373 = vld [vmem:[%s291 + $0x1c0] sm:$0xff]
        %v374 = vld [vmem:[%s291 + $0x1c8] sm:$0xff]
        %v375 = vld [vmem:[%s291 + $0x1d0] sm:$0xff]
        %v376 = vld [vmem:[%s291 + $0x1d8] sm:$0xff]
        %v377 = vld [vmem:[%s291 + $0x1e0] sm:$0xff]
        %v378 = vld [vmem:[%s291 + $0x1e8] sm:$0xff]
        %v379 = vld [vmem:[%s291 + $0x1f0] sm:$0xff]
        %v380 = vld [vmem:[%s291 + $0x1f8] sm:$0xff]
        %v381 = vld [vmem:[%s1] sm:$0xff]
        %v382 = vld [vmem:[%s1 + $0x8] sm:$0xff]
        %v383 = vld [vmem:[%s1 + $0x10] sm:$0xff]
        %v384 = vld [vmem:[%s1 + $0x18] sm:$0xff]
        %386 = vset.pattern.permute.xlu0 0
        %387 = vperm.xlu0 %386, %v381
        %v388 = vpop.permute.xlu0 %387
        %391 = vset.pattern.permute.xlu0 0
        %392 = vperm.xlu0 %391, %v382
        %v393 = vpop.permute.xlu0 %392
        %396 = vset.pattern.permute.xlu0 0
        %397 = vperm.xlu0 %396, %v383
        %v398 = vpop.permute.xlu0 %397
        %401 = vset.pattern.permute.xlu0 0
        %402 = vperm.xlu0 %401, %v384
        %v403 = vpop.permute.xlu0 %402
        %v409 = vunpack.c.l.b16 %v313
        %v410 = vunpack.c.h.b16 %v313
        %v411 = vunpack.c.l.b16 %v314
        %v412 = vunpack.c.h.b16 %v314
        %v413 = vunpack.c.l.b16 %v315
        %v414 = vunpack.c.h.b16 %v315
        %v415 = vunpack.c.l.b16 %v316
        %v416 = vunpack.c.h.b16 %v316
        %v417 = vpack.c.b16 %v411, %v409
        %v418 = vpack.c.b16 %v412, %v410
        %v419 = vpack.c.b16 %v415, %v413
        %v420 = vpack.c.b16 %v416, %v414
        %v489 = vunpack.c.l.b16 %v317
        %v490 = vunpack.c.h.b16 %v317
        %v491 = vunpack.c.l.b16 %v318
        %v492 = vunpack.c.h.b16 %v318
        %v493 = vunpack.c.l.b16 %v319
        %v494 = vunpack.c.h.b16 %v319
        %v495 = vunpack.c.l.b16 %v320
        %v496 = vunpack.c.h.b16 %v320
        %v497 = vunpack.c.l.b16 %v321
        %v498 = vunpack.c.h.b16 %v321
        %v499 = vunpack.c.l.b16 %v322
        %v500 = vunpack.c.h.b16 %v322
        %v501 = vunpack.c.l.b16 %v323
        %v502 = vunpack.c.h.b16 %v323
        %v503 = vunpack.c.l.b16 %v324
        %v504 = vunpack.c.h.b16 %v324
        %v505 = vunpack.c.l.b16 %v325
        %v506 = vunpack.c.h.b16 %v325
        %v507 = vunpack.c.l.b16 %v326
        %v508 = vunpack.c.h.b16 %v326
        %v509 = vunpack.c.l.b16 %v327
        %v510 = vunpack.c.h.b16 %v327
        %v511 = vunpack.c.l.b16 %v328
        %v512 = vunpack.c.h.b16 %v328
        %v513 = vunpack.c.l.b16 %v329
        %v514 = vunpack.c.h.b16 %v329
        %v515 = vunpack.c.l.b16 %v330
        %v516 = vunpack.c.h.b16 %v330
        %v517 = vunpack.c.l.b16 %v331
        %v518 = vunpack.c.h.b16 %v331
        %v519 = vunpack.c.l.b16 %v332
        %v520 = vunpack.c.h.b16 %v332
        %v521 = vunpack.c.l.b16 %v333
        %v522 = vunpack.c.h.b16 %v333
        %v523 = vunpack.c.l.b16 %v334
        %v524 = vunpack.c.h.b16 %v334
        %v525 = vunpack.c.l.b16 %v335
        %v526 = vunpack.c.h.b16 %v335
        %v527 = vunpack.c.l.b16 %v336
        %v528 = vunpack.c.h.b16 %v336
        %v529 = vunpack.c.l.b16 %v337
        %v530 = vunpack.c.h.b16 %v337
        %v531 = vunpack.c.l.b16 %v338
        %v532 = vunpack.c.h.b16 %v338
        %v533 = vunpack.c.l.b16 %v339
        %v534 = vunpack.c.h.b16 %v339
        %v535 = vunpack.c.l.b16 %v340
        %v536 = vunpack.c.h.b16 %v340
        %v537 = vunpack.c.l.b16 %v341
        %v538 = vunpack.c.h.b16 %v341
        %v539 = vunpack.c.l.b16 %v342
        %v540 = vunpack.c.h.b16 %v342
        %v541 = vunpack.c.l.b16 %v343
        %v542 = vunpack.c.h.b16 %v343
        %v543 = vunpack.c.l.b16 %v344
        %v544 = vunpack.c.h.b16 %v344
        %v545 = vunpack.c.l.b16 %v345
        %v546 = vunpack.c.h.b16 %v345
        %v547 = vunpack.c.l.b16 %v346
        %v548 = vunpack.c.h.b16 %v346
        %v549 = vunpack.c.l.b16 %v347
        %v550 = vunpack.c.h.b16 %v347
        %v551 = vunpack.c.l.b16 %v348
        %v552 = vunpack.c.h.b16 %v348
        %v553 = vunpack.c.l.b16 %v349
        %v554 = vunpack.c.h.b16 %v349
        %v555 = vunpack.c.l.b16 %v350
        %v556 = vunpack.c.h.b16 %v350
        %v557 = vunpack.c.l.b16 %v351
        %v558 = vunpack.c.h.b16 %v351
        %v559 = vunpack.c.l.b16 %v352
        %v560 = vunpack.c.h.b16 %v352
        %v561 = vunpack.c.l.b16 %v353
        %v562 = vunpack.c.h.b16 %v353
        %v563 = vunpack.c.l.b16 %v354
        %v564 = vunpack.c.h.b16 %v354
        %v565 = vunpack.c.l.b16 %v355
        %v566 = vunpack.c.h.b16 %v355
        %v567 = vunpack.c.l.b16 %v356
        %v568 = vunpack.c.h.b16 %v356
        %v569 = vunpack.c.l.b16 %v357
        %v570 = vunpack.c.h.b16 %v357
        %v571 = vunpack.c.l.b16 %v358
        %v572 = vunpack.c.h.b16 %v358
        %v573 = vunpack.c.l.b16 %v359
        %v574 = vunpack.c.h.b16 %v359
        %v575 = vunpack.c.l.b16 %v360
        %v576 = vunpack.c.h.b16 %v360
        %v577 = vunpack.c.l.b16 %v361
        %v578 = vunpack.c.h.b16 %v361
        %v579 = vunpack.c.l.b16 %v362
        %v580 = vunpack.c.h.b16 %v362
        %v581 = vunpack.c.l.b16 %v363
        %v582 = vunpack.c.h.b16 %v363
        %v583 = vunpack.c.l.b16 %v364
        %v584 = vunpack.c.h.b16 %v364
        %v585 = vunpack.c.l.b16 %v365
        %v586 = vunpack.c.h.b16 %v365
        %v587 = vunpack.c.l.b16 %v366
        %v588 = vunpack.c.h.b16 %v366
        %v589 = vunpack.c.l.b16 %v367
        %v590 = vunpack.c.h.b16 %v367
        %v591 = vunpack.c.l.b16 %v368
        %v592 = vunpack.c.h.b16 %v368
        %v593 = vunpack.c.l.b16 %v369
        %v594 = vunpack.c.h.b16 %v369
        %v595 = vunpack.c.l.b16 %v370
        %v596 = vunpack.c.h.b16 %v370
        %v597 = vunpack.c.l.b16 %v371
        %v598 = vunpack.c.h.b16 %v371
        %v599 = vunpack.c.l.b16 %v372
        %v600 = vunpack.c.h.b16 %v372
        %v601 = vunpack.c.l.b16 %v373
        %v602 = vunpack.c.h.b16 %v373
        %v603 = vunpack.c.l.b16 %v374
        %v604 = vunpack.c.h.b16 %v374
        %v605 = vunpack.c.l.b16 %v375
        %v606 = vunpack.c.h.b16 %v375
        %v607 = vunpack.c.l.b16 %v376
        %v608 = vunpack.c.h.b16 %v376
        %v609 = vunpack.c.l.b16 %v377
        %v610 = vunpack.c.h.b16 %v377
        %v611 = vunpack.c.l.b16 %v378
        %v612 = vunpack.c.h.b16 %v378
        %v613 = vunpack.c.l.b16 %v379
        %v614 = vunpack.c.h.b16 %v379
        %v615 = vunpack.c.l.b16 %v380
        %v616 = vunpack.c.h.b16 %v380
        %v617 = vpack.c.b16 %v493, %v489
        %v618 = vpack.c.b16 %v494, %v490
        %v619 = vpack.c.b16 %v495, %v491
        %v620 = vpack.c.b16 %v496, %v492
        %v621 = vpack.c.b16 %v501, %v497
        %v622 = vpack.c.b16 %v502, %v498
        %v623 = vpack.c.b16 %v503, %v499
        %v624 = vpack.c.b16 %v504, %v500
        %v625 = vpack.c.b16 %v509, %v505
        %v626 = vpack.c.b16 %v510, %v506
        %v627 = vpack.c.b16 %v511, %v507
        %v628 = vpack.c.b16 %v512, %v508
        %v629 = vpack.c.b16 %v517, %v513
        %v630 = vpack.c.b16 %v518, %v514
        %v631 = vpack.c.b16 %v519, %v515
        %v632 = vpack.c.b16 %v520, %v516
        %v633 = vpack.c.b16 %v525, %v521
        %v634 = vpack.c.b16 %v526, %v522
        %v635 = vpack.c.b16 %v527, %v523
        %v636 = vpack.c.b16 %v528, %v524
        %v637 = vpack.c.b16 %v533, %v529
        %v638 = vpack.c.b16 %v534, %v530
        %v639 = vpack.c.b16 %v535, %v531
        %v640 = vpack.c.b16 %v536, %v532
        %v641 = vpack.c.b16 %v541, %v537
        %v642 = vpack.c.b16 %v542, %v538
        %v643 = vpack.c.b16 %v543, %v539
        %v644 = vpack.c.b16 %v544, %v540
        %v645 = vpack.c.b16 %v549, %v545
        %v646 = vpack.c.b16 %v550, %v546
        %v647 = vpack.c.b16 %v551, %v547
        %v648 = vpack.c.b16 %v552, %v548
        %v649 = vpack.c.b16 %v557, %v553
        %v650 = vpack.c.b16 %v558, %v554
        %v651 = vpack.c.b16 %v559, %v555
        %v652 = vpack.c.b16 %v560, %v556
        %v653 = vpack.c.b16 %v565, %v561
        %v654 = vpack.c.b16 %v566, %v562
        %v655 = vpack.c.b16 %v567, %v563
        %v656 = vpack.c.b16 %v568, %v564
        %v657 = vpack.c.b16 %v573, %v569
        %v658 = vpack.c.b16 %v574, %v570
        %v659 = vpack.c.b16 %v575, %v571
        %v660 = vpack.c.b16 %v576, %v572
        %v661 = vpack.c.b16 %v581, %v577
        %v662 = vpack.c.b16 %v582, %v578
        %v663 = vpack.c.b16 %v583, %v579
        %v664 = vpack.c.b16 %v584, %v580
        %v665 = vpack.c.b16 %v589, %v585
        %v666 = vpack.c.b16 %v590, %v586
        %v667 = vpack.c.b16 %v591, %v587
        %v668 = vpack.c.b16 %v592, %v588
        %v669 = vpack.c.b16 %v597, %v593
        %v670 = vpack.c.b16 %v598, %v594
        %v671 = vpack.c.b16 %v599, %v595
        %v672 = vpack.c.b16 %v600, %v596
        %v673 = vpack.c.b16 %v605, %v601
        %v674 = vpack.c.b16 %v606, %v602
        %v675 = vpack.c.b16 %v607, %v603
        %v676 = vpack.c.b16 %v608, %v604
        %v677 = vpack.c.b16 %v613, %v609
        %v678 = vpack.c.b16 %v614, %v610
        %v679 = vpack.c.b16 %v615, %v611
        %v680 = vpack.c.b16 %v616, %v612
        %745 = vmatprep.subr.bf16.mxu0 %v646
        %746 = vmatpush1.bf16.msra.mxu0 %v645
        %747 = vmatprep.subr.bf16.mxu0 %v642
        %748 = vmatpush1.bf16.msra.mxu0 %v641
        %749 = vmatprep.subr.bf16.mxu0 %v638
        %750 = vmatpush1.bf16.msra.mxu0 %v637
        %751 = vmatprep.subr.bf16.mxu0 %v634
        %752 = vmatpush1.bf16.msra.mxu0 %v633
        %753 = vmatprep.subr.bf16.mxu0 %v630
        %754 = vmatpush1.bf16.msra.mxu0 %v629
        %755 = vmatprep.subr.bf16.mxu0 %v626
        %756 = vmatpush1.bf16.msra.mxu0 %v625
        %757 = vmatprep.subr.bf16.mxu0 %v622
        %758 = vmatpush1.bf16.msra.mxu0 %v621
        %759 = vmatprep.subr.bf16.mxu0 %v618
        %760 = vmatpush1.bf16.msra.mxu0 %v617
        %761 = vmatprep.subr.bf16.mxu0 %v678
        %762 = vmatpush2.bf16.msra.mxu0 %v677
        %763 = vmatprep.subr.bf16.mxu0 %v674
        %764 = vmatpush2.bf16.msra.mxu0 %v673
        %765 = vmatprep.subr.bf16.mxu0 %v670
        %766 = vmatpush2.bf16.msra.mxu0 %v669
        %767 = vmatprep.subr.bf16.mxu0 %v666
        %768 = vmatpush2.bf16.msra.mxu0 %v665
        %769 = vmatprep.subr.bf16.mxu0 %v662
        %770 = vmatpush2.bf16.msra.mxu0 %v661
        %771 = vmatprep.subr.bf16.mxu0 %v658
        %772 = vmatpush2.bf16.msra.mxu0 %v657
        %773 = vmatprep.subr.bf16.mxu0 %v654
        %774 = vmatpush2.bf16.msra.mxu0 %v653
        %775 = vmatprep.subr.bf16.mxu0 %v650
        %776 = vmatpush2.bf16.msra.mxu0 %v649
        %777 = vmatprep.mubr.bf16.mxu0 %v418
        %778 = vmatmul.mubr.bf16.gmra.mxu0 %v417
        %v779 = vpop.f32.mrf.mxu0
        %v780 = vadd.f32 %v388, %v779
        %v781 = vpop.f32.mrf.mxu0
        %v782 = vadd.f32 %v388, %v781
        %v783 = vpop.f32.mrf.mxu0
        %v784 = vadd.f32 %v393, %v783
        %v785 = vpop.f32.mrf.mxu0
        %v786 = vadd.f32 %v393, %v785
        %787 = vmatprep.mubr.bf16.mxu0 %v420
        %788 = vmatmul.mubr.bf16.gmra.mxu0 %v419
        %v789 = vpop.f32.mrf.mxu0
        %v790 = vadd.f32 %v398, %v789
        %v791 = vpop.f32.mrf.mxu0
        %v792 = vadd.f32 %v398, %v791
        %v793 = vpop.f32.mrf.mxu0
        %v794 = vadd.f32 %v403, %v793
        %v795 = vpop.f32.mrf.mxu0
        %v796 = vadd.f32 %v403, %v795
        %797 = vdwg.mxu0
        %798 = vmatprep.subr.bf16.mxu0 %v648
        %799 = vmatpush1.bf16.msra.mxu0 %v647
        %800 = vmatprep.subr.bf16.mxu0 %v644
        %801 = vmatpush1.bf16.msra.mxu0 %v643
        %802 = vmatprep.subr.bf16.mxu0 %v640
        %803 = vmatpush1.bf16.msra.mxu0 %v639
        %804 = vmatprep.subr.bf16.mxu0 %v636
        %805 = vmatpush1.bf16.msra.mxu0 %v635
        %806 = vmatprep.subr.bf16.mxu0 %v632
        %807 = vmatpush1.bf16.msra.mxu0 %v631
        %808 = vmatprep.subr.bf16.mxu0 %v628
        %809 = vmatpush1.bf16.msra.mxu0 %v627
        %810 = vmatprep.subr.bf16.mxu0 %v624
        %811 = vmatpush1.bf16.msra.mxu0 %v623
        %812 = vmatprep.subr.bf16.mxu0 %v620
        %813 = vmatpush1.bf16.msra.mxu0 %v619
        %814 = vmatprep.subr.bf16.mxu0 %v680
        %815 = vmatpush2.bf16.msra.mxu0 %v679
        %816 = vmatprep.subr.bf16.mxu0 %v676
        %817 = vmatpush2.bf16.msra.mxu0 %v675
        %818 = vmatprep.subr.bf16.mxu0 %v672
        %819 = vmatpush2.bf16.msra.mxu0 %v671
        %820 = vmatprep.subr.bf16.mxu0 %v668
        %821 = vmatpush2.bf16.msra.mxu0 %v667
        %822 = vmatprep.subr.bf16.mxu0 %v664
        %823 = vmatpush2.bf16.msra.mxu0 %v663
        %824 = vmatprep.subr.bf16.mxu0 %v660
        %825 = vmatpush2.bf16.msra.mxu0 %v659
        %826 = vmatprep.subr.bf16.mxu0 %v656
        %827 = vmatpush2.bf16.msra.mxu0 %v655
        %828 = vmatprep.subr.bf16.mxu0 %v652
        %829 = vmatpush2.bf16.msra.mxu0 %v651
        %830 = vmatprep.mubr.bf16.mxu0 %v418
        %831 = vmatmul.mubr.bf16.gmra.mxu0 %v417
        %v832 = vpop.f32.mrf.mxu0
        %v833 = vadd.f32 %v388, %v832
        %v834 = vpop.f32.mrf.mxu0
        %v835 = vadd.f32 %v388, %v834
        %v836 = vpop.f32.mrf.mxu0
        %v837 = vadd.f32 %v393, %v836
        %v838 = vpop.f32.mrf.mxu0
        %v839 = vadd.f32 %v393, %v838
        %840 = vmatprep.mubr.bf16.mxu0 %v420
        %841 = vmatmul.mubr.bf16.gmra.mxu0 %v419
        %v842 = vpop.f32.mrf.mxu0
        %v843 = vadd.f32 %v398, %v842
        %v844 = vpop.f32.mrf.mxu0
        %v845 = vadd.f32 %v398, %v844
        %v846 = vpop.f32.mrf.mxu0
        %v847 = vadd.f32 %v403, %v846
        %v848 = vpop.f32.mrf.mxu0
        %v849 = vadd.f32 %v403, %v848
        %850 = vdwg.mxu0
        %v851 = vmax.f32 %v780, 0.0
        %v852 = vmax.f32 %v782, 0.0
        %v853 = vmax.f32 %v833, 0.0
        %v854 = vmax.f32 %v835, 0.0
        %v855 = vmax.f32 %v784, 0.0
        %v856 = vmax.f32 %v786, 0.0
        %v857 = vmax.f32 %v837, 0.0
        %v858 = vmax.f32 %v839, 0.0
        %v859 = vmax.f32 %v790, 0.0
        %v860 = vmax.f32 %v792, 0.0
        %v861 = vmax.f32 %v843, 0.0
        %v862 = vmax.f32 %v845, 0.0
        %v863 = vmax.f32 %v794, 0.0
        %v864 = vmax.f32 %v796, 0.0
        %v865 = vmax.f32 %v847, 0.0
        %v866 = vmax.f32 %v849, 0.0
        %v867 = vpack.c.bf16 %v855, %v851
        %v868 = vpack.c.bf16 %v856, %v852
        %v869 = vpack.c.bf16 %v857, %v853
        %v870 = vpack.c.bf16 %v858, %v854
        %v871 = vpack.c.bf16 %v863, %v859
        %v872 = vpack.c.bf16 %v864, %v860
        %v873 = vpack.c.bf16 %v865, %v861
        %v874 = vpack.c.bf16 %v866, %v862
        %v883 = vunpack.c.l.b16 %v867
        %v884 = vunpack.c.l.b16 %v868
        %v885 = vunpack.c.l.b16 %v869
        %v886 = vunpack.c.l.b16 %v870
        %v887 = vunpack.c.h.b16 %v867
        %v888 = vunpack.c.h.b16 %v868
        %v889 = vunpack.c.h.b16 %v869
        %v890 = vunpack.c.h.b16 %v870
        %v891 = vunpack.c.l.b16 %v871
        %v892 = vunpack.c.l.b16 %v872
        %v893 = vunpack.c.l.b16 %v873
        %v894 = vunpack.c.l.b16 %v874
        %v895 = vunpack.c.h.b16 %v871
        %v896 = vunpack.c.h.b16 %v872
        %v897 = vunpack.c.h.b16 %v873
        %v898 = vunpack.c.h.b16 %v874
        %v899 = vpack.c.b16 %v884, %v883
        %v900 = vpack.c.b16 %v886, %v885
        %v901 = vpack.c.b16 %v888, %v887
        %v902 = vpack.c.b16 %v890, %v889
        %v903 = vpack.c.b16 %v892, %v891
        %v904 = vpack.c.b16 %v894, %v893
        %v905 = vpack.c.b16 %v896, %v895
        %v906 = vpack.c.b16 %v898, %v897
        %915 = vst [vmem:[%s310] sm:$0xff] %v899
        %916 = vst [vmem:[%s310 + $0x8] sm:$0xff] %v900
        %917 = vst [vmem:[%s310 + $0x10] sm:$0xff] %v901
        %918 = vst [vmem:[%s310 + $0x18] sm:$0xff] %v902
        %919 = vst [vmem:[%s310 + $0x20] sm:$0xff] %v903
        %920 = vst [vmem:[%s310 + $0x28] sm:$0xff] %v904
        %921 = vst [vmem:[%s310 + $0x30] sm:$0xff] %v905
        %922 = vst [vmem:[%s310 + $0x38] sm:$0xff] %v906
        %s923 = sand.u32 %s90, 1
        %s924 = sand.u32 %s90, 1
        %s925 = smul.addr %s924, 64
        %s926 = scalar_lea.vmem [#allocation3], %s925
        // Predicated region
        $region56: #{forward.4} parent=50 // pred_check
          %p927 = pneg %p100
        $region57: #{forward.4} parent=50 // pred_check_branch
          %929 = sbr.rel (%p927) target = $region59
        $region58: #{forward.4} parent=50 // pred_region
          %s930 = smul.u32 4, %s14
          %s931 = smul.addr %s930, 4
          %s932 = scalar_lea.vmem %s3, %s931
          // Predicated region
          $region60: #{forward.4} parent=58 // pred_check
            _
          $region61: #{forward.4} parent=58 // pred_check_branch
            %934 = sbr.rel (0) target = $region63
          $region62: #{forward.4} parent=58 // pred_region
            // Predicated region
            $region64: #{forward.4} parent=62 // pred_check
              _
            $region65: #{forward.4} parent=62 // pred_check_branch
              %936 = sbr.rel (0) target = $region67
            $region66: #{forward.4} parent=62 // pred_region
              loop: start=0, step=1, limit=1
              $region68: #{forward.4} parent=66 // loop_pre_header
                _
              $region69: #{forward.4} parent=66 // loop_header
                %s938 = sphi 0, %s942
                %p939 = scmp.ge.s32.totalorder %s938, 1
                %s943 = sphi %s926, %s926
                %s944 = sphi %s932, %s932
              $region70: #{forward.4} parent=66 // loop_header_branch
                %941 = sbr.rel (%p939) target = $region74
              $region71: #{forward.4} parent=66 // loop_body
                %v945 = vld [vmem:[%s943] sm:$0xff]
                %946 = vst [vmem:[%s944] sm:$0xff] %v945
                %v947 = vld [vmem:[%s943 + $0x8] sm:$0xff]
                %948 = vst [vmem:[%s944 + $0x8] sm:$0xff] %v947
                %v949 = vld [vmem:[%s943 + $0x10] sm:$0xff]
                %950 = vst [vmem:[%s944 + $0x20] sm:$0xff] %v949
                %v951 = vld [vmem:[%s943 + $0x18] sm:$0xff]
                %952 = vst [vmem:[%s944 + $0x28] sm:$0xff] %v951
                %v953 = vld [vmem:[%s943 + $0x20] sm:$0xff]
                %954 = vst [vmem:[%s944 + $0x40] sm:$0xff] %v953
                %v955 = vld [vmem:[%s943 + $0x28] sm:$0xff]
                %956 = vst [vmem:[%s944 + $0x48] sm:$0xff] %v955
                %v957 = vld [vmem:[%s943 + $0x30] sm:$0xff]
                %958 = vst [vmem:[%s944 + $0x60] sm:$0xff] %v957
                %v959 = vld [vmem:[%s943 + $0x38] sm:$0xff]
                %960 = vst [vmem:[%s944 + $0x68] sm:$0xff] %v959
              $region72: #{forward.4} parent=66 // loop_footer
                %s942 = sadd.s32 1, %s938
              $region73: #{forward.4} parent=66 // loop_footer_branch
                %937 = sbr.rel target = $region69
              $region74: #{forward.4} parent=66 // loop_exit
                _
            $region67: #{forward.4} parent=62 // pred_fallthru
              _
            // Predicated region
            $region75: #{forward.4} parent=62 // pred_check
              _
            $region76: #{forward.4} parent=62 // pred_check_branch
              %962 = sbr.rel target = $region78
            $region77: #{forward.4} parent=62 // pred_region
              _
            $region78: #{forward.4} parent=62 // pred_fallthru
              _
          $region63: #{forward.4} parent=58 // pred_fallthru
            _
          %963 = vnop
        $region59: #{forward.4} parent=50 // pred_fallthru
          _
      $region51: #{forward.4} parent=5 // pred_fallthru
        _
      %p964 = scmp.le.s32.totalorder 2, %s9
      // Predicated region
      $region79: #{forward.4} parent=5 // pred_check
        %p965 = pneg %p964
      $region80: #{forward.4} parent=5 // pred_check_branch
        %967 = sbr.rel (%p965) target = $region82
      $region81: #{forward.4} parent=5 // pred_region
        %s968 = ssub.s32 %s9, 2
        // Predicated region
        $region83: #{forward.4} parent=81 // pred_check
          %p969 = pneg %p106
        $region84: #{forward.4} parent=81 // pred_check_branch
          %971 = sbr.rel (%p969) target = $region86
        $region85: #{forward.4} parent=81 // pred_region
          %s972 = sand.u32 %s91, 1
          %s973 = sand.u32 %s91, 1
          %s974 = smul.addr %s973, 64
          %s975 = scalar_lea.vmem [#allocation3], %s974
        $region86: #{forward.4} parent=81 // pred_fallthru
          _
      $region82: #{forward.4} parent=5 // pred_fallthru
        _
    $region6: #{forward.4} parent=1 // loop_footer
      %s13 = sadd.s32 1, %s9
    $region7: #{forward.4} parent=1 // loop_footer_branch
      %8 = sbr.rel target = $region3
    $region8: #{forward.4} parent=1 // loop_exit
      _

// kernel: forward.5
$region0: #{forward.5}
  #allocation0 [shape = 'u32[]', space=smem, size = 0x4, offset = 0x4, fixed_abs, tag = 'smem constant byte address 0x4 - core index']
  #allocation1 [shape = 'u32[144,128]{1,0:T(1,128)}', space=vmem, size = 0x12000, scoped, tag = 'internal scratch']
  %s0 = inlined_call_operand.vmem [shape: bf16[64,512], index: 0, kind: input, shape index: {}]
  %s1 = inlined_call_operand.vmem [shape: f32[64,1], index: 1, kind: input, shape index: {}]
  %s2 = inlined_call_operand.vmem [shape: bf16[512,256], index: 2, kind: input, shape index: {}]
  %s3 = inlined_call_operand.vmem [shape: bf16[64,256], index: 3, kind: output, shape index: {}]
  %s4 = sld [smem:[#allocation0]]
  $region22: #{forward.5} parent=0
    _
  %s6 = ssub.s32 1, %s4
  %s7 = scalar_select 0, %s6, %s4
  // Predicated region
  $region2: #{forward.5} parent=0 // pred_check
    _
  $region3: #{forward.5} parent=0 // pred_check_branch
    %9 = sbr.rel (0) target = $region5
  $region4: #{forward.5} parent=0 // pred_region
    _
  $region5: #{forward.5} parent=0 // pred_fallthru
    _
  // Predicated region
  $region6: #{forward.5} parent=0 // pred_check
    _
  $region7: #{forward.5} parent=0 // pred_check_branch
    %11 = sbr.rel (0) target = $region9
  $region8: #{forward.5} parent=0 // pred_region
    _
  $region9: #{forward.5} parent=0 // pred_fallthru
    _
  // Predicated region
  $region10: #{forward.5} parent=0 // pred_check
    _
  $region11: #{forward.5} parent=0 // pred_check_branch
    %13 = sbr.rel (0) target = $region13
  $region12: #{forward.5} parent=0 // pred_region
    _
  $region13: #{forward.5} parent=0 // pred_fallthru
    _
  %v14 = vld [vmem:[%s0] sm:$0xff]
  %v15 = vld [vmem:[%s0 + $0x8] sm:$0xff]
  %v16 = vld [vmem:[%s0 + $0x10] sm:$0xff]
  %v17 = vld [vmem:[%s0 + $0x18] sm:$0xff]
  %v18 = vld [vmem:[%s0 + $0x20] sm:$0xff]
  %v19 = vld [vmem:[%s0 + $0x28] sm:$0xff]
  %v20 = vld [vmem:[%s0 + $0x30] sm:$0xff]
  %v21 = vld [vmem:[%s0 + $0x38] sm:$0xff]
  %v22 = vld [vmem:[%s0 + $0x40] sm:$0xff]
  %v23 = vld [vmem:[%s0 + $0x48] sm:$0xff]
  %v24 = vld [vmem:[%s0 + $0x50] sm:$0xff]
  %v25 = vld [vmem:[%s0 + $0x58] sm:$0xff]
  %v26 = vld [vmem:[%s0 + $0x60] sm:$0xff]
  %v27 = vld [vmem:[%s0 + $0x68] sm:$0xff]
  %v28 = vld [vmem:[%s0 + $0x70] sm:$0xff]
  %v29 = vld [vmem:[%s0 + $0x78] sm:$0xff]
  %v30 = vld [vmem:[%s2] sm:$0xff]
  %v31 = vld [vmem:[%s2 + $0x8] sm:$0xff]
  %v32 = vld [vmem:[%s2 + $0x10] sm:$0xff]
  %v33 = vld [vmem:[%s2 + $0x18] sm:$0xff]
  %v34 = vld [vmem:[%s2 + $0x20] sm:$0xff]
  %v35 = vld [vmem:[%s2 + $0x28] sm:$0xff]
  %v36 = vld [vmem:[%s2 + $0x30] sm:$0xff]
  %v37 = vld [vmem:[%s2 + $0x38] sm:$0xff]
  %v38 = vld [vmem:[%s2 + $0x40] sm:$0xff]
  %v39 = vld [vmem:[%s2 + $0x48] sm:$0xff]
  %v40 = vld [vmem:[%s2 + $0x50] sm:$0xff]
  %v41 = vld [vmem:[%s2 + $0x58] sm:$0xff]
  %v42 = vld [vmem:[%s2 + $0x60] sm:$0xff]
  %v43 = vld [vmem:[%s2 + $0x68] sm:$0xff]
  %v44 = vld [vmem:[%s2 + $0x70] sm:$0xff]
  %v45 = vld [vmem:[%s2 + $0x78] sm:$0xff]
  %v46 = vld [vmem:[%s2 + $0x80] sm:$0xff]
  %v47 = vld [vmem:[%s2 + $0x88] sm:$0xff]
  %v48 = vld [vmem:[%s2 + $0x90] sm:$0xff]
  %v49 = vld [vmem:[%s2 + $0x98] sm:$0xff]
  %v50 = vld [vmem:[%s2 + $0xa0] sm:$0xff]
  %v51 = vld [vmem:[%s2 + $0xa8] sm:$0xff]
  %v52 = vld [vmem:[%s2 + $0xb0] sm:$0xff]
  %v53 = vld [vmem:[%s2 + $0xb8] sm:$0xff]
  %v54 = vld [vmem:[%s2 + $0xc0] sm:$0xff]
  %v55 = vld [vmem:[%s2 + $0xc8] sm:$0xff]
  %v56 = vld [vmem:[%s2 + $0xd0] sm:$0xff]
  %v57 = vld [vmem:[%s2 + $0xd8] sm:$0xff]
  %v58 = vld [vmem:[%s2 + $0xe0] sm:$0xff]
  %v59 = vld [vmem:[%s2 + $0xe8] sm:$0xff]
  %v60 = vld [vmem:[%s2 + $0xf0] sm:$0xff]
  %v61 = vld [vmem:[%s2 + $0xf8] sm:$0xff]
  %v62 = vld [vmem:[%s2 + $0x100] sm:$0xff]
  %v63 = vld [vmem:[%s2 + $0x108] sm:$0xff]
  %v64 = vld [vmem:[%s2 + $0x110] sm:$0xff]
  %v65 = vld [vmem:[%s2 + $0x118] sm:$0xff]
  %v66 = vld [vmem:[%s2 + $0x120] sm:$0xff]
  %v67 = vld [vmem:[%s2 + $0x128] sm:$0xff]
  %v68 = vld [vmem:[%s2 + $0x130] sm:$0xff]
  %v69 = vld [vmem:[%s2 + $0x138] sm:$0xff]
  %v70 = vld [vmem:[%s2 + $0x140] sm:$0xff]
  %v71 = vld [vmem:[%s2 + $0x148] sm:$0xff]
  %v72 = vld [vmem:[%s2 + $0x150] sm:$0xff]
  %v73 = vld [vmem:[%s2 + $0x158] sm:$0xff]
  %v74 = vld [vmem:[%s2 + $0x160] sm:$0xff]
  %v75 = vld [vmem:[%s2 + $0x168] sm:$0xff]
  %v76 = vld [vmem:[%s2 + $0x170] sm:$0xff]
  %v77 = vld [vmem:[%s2 + $0x178] sm:$0xff]
  %v78 = vld [vmem:[%s2 + $0x180] sm:$0xff]
  %v79 = vld [vmem:[%s2 + $0x188] sm:$0xff]
  %v80 = vld [vmem:[%s2 + $0x190] sm:$0xff]
  %v81 = vld [vmem:[%s2 + $0x198] sm:$0xff]
  %v82 = vld [vmem:[%s2 + $0x1a0] sm:$0xff]
  %v83 = vld [vmem:[%s2 + $0x1a8] sm:$0xff]
  %v84 = vld [vmem:[%s2 + $0x1b0] sm:$0xff]
  %v85 = vld [vmem:[%s2 + $0x1b8] sm:$0xff]
  %v86 = vld [vmem:[%s2 + $0x1c0] sm:$0xff]
  %v87 = vld [vmem:[%s2 + $0x1c8] sm:$0xff]
  %v88 = vld [vmem:[%s2 + $0x1d0] sm:$0xff]
  %v89 = vld [vmem:[%s2 + $0x1d8] sm:$0xff]
  %v90 = vld [vmem:[%s2 + $0x1e0] sm:$0xff]
  %v91 = vld [vmem:[%s2 + $0x1e8] sm:$0xff]
  %v92 = vld [vmem:[%s2 + $0x1f0] sm:$0xff]
  %v93 = vld [vmem:[%s2 + $0x1f8] sm:$0xff]
  %v94 = vld [vmem:[%s1] sm:$0xff]
  %v95 = vld [vmem:[%s1 + $0x8] sm:$0xff]
  %v96 = vld [vmem:[%s1 + $0x10] sm:$0xff]
  %v97 = vld [vmem:[%s1 + $0x18] sm:$0xff]
  %v98 = vld [vmem:[%s1 + $0x20] sm:$0xff]
  %v99 = vld [vmem:[%s1 + $0x28] sm:$0xff]
  %v100 = vld [vmem:[%s1 + $0x30] sm:$0xff]
  %v101 = vld [vmem:[%s1 + $0x38] sm:$0xff]
  %103 = vset.pattern.permute.xlu0 0
  %104 = vperm.xlu0 %103, %v94
  %v105 = vpop.permute.xlu0 %104
  %108 = vset.pattern.permute.xlu0 0
  %109 = vperm.xlu0 %108, %v95
  %v110 = vpop.permute.xlu0 %109
  %113 = vset.pattern.permute.xlu0 0
  %114 = vperm.xlu0 %113, %v96
  %v115 = vpop.permute.xlu0 %114
  %118 = vset.pattern.permute.xlu0 0
  %119 = vperm.xlu0 %118, %v97
  %v120 = vpop.permute.xlu0 %119
  %123 = vset.pattern.permute.xlu0 0
  %124 = vperm.xlu0 %123, %v98
  %v125 = vpop.permute.xlu0 %124
  %128 = vset.pattern.permute.xlu0 0
  %129 = vperm.xlu0 %128, %v99
  %v130 = vpop.permute.xlu0 %129
  %133 = vset.pattern.permute.xlu0 0
  %134 = vperm.xlu0 %133, %v100
  %v135 = vpop.permute.xlu0 %134
  %138 = vset.pattern.permute.xlu0 0
  %139 = vperm.xlu0 %138, %v101
  %v140 = vpop.permute.xlu0 %139
  %v158 = vunpack.c.l.b16 %v14
  %v159 = vunpack.c.h.b16 %v14
  %v160 = vunpack.c.l.b16 %v15
  %v161 = vunpack.c.h.b16 %v15
  %v162 = vunpack.c.l.b16 %v16
  %v163 = vunpack.c.h.b16 %v16
  %v164 = vunpack.c.l.b16 %v17
  %v165 = vunpack.c.h.b16 %v17
  %v166 = vunpack.c.l.b16 %v18
  %v167 = vunpack.c.h.b16 %v18
  %v168 = vunpack.c.l.b16 %v19
  %v169 = vunpack.c.h.b16 %v19
  %v170 = vunpack.c.l.b16 %v20
  %v171 = vunpack.c.h.b16 %v20
  %v172 = vunpack.c.l.b16 %v21
  %v173 = vunpack.c.h.b16 %v21
  %v174 = vunpack.c.l.b16 %v22
  %v175 = vunpack.c.h.b16 %v22
  %v176 = vunpack.c.l.b16 %v23
  %v177 = vunpack.c.h.b16 %v23
  %v178 = vunpack.c.l.b16 %v24
  %v179 = vunpack.c.h.b16 %v24
  %v180 = vunpack.c.l.b16 %v25
  %v181 = vunpack.c.h.b16 %v25
  %v182 = vunpack.c.l.b16 %v26
  %v183 = vunpack.c.h.b16 %v26
  %v184 = vunpack.c.l.b16 %v27
  %v185 = vunpack.c.h.b16 %v27
  %v186 = vunpack.c.l.b16 %v28
  %v187 = vunpack.c.h.b16 %v28
  %v188 = vunpack.c.l.b16 %v29
  %v189 = vunpack.c.h.b16 %v29
  %v190 = vpack.c.b16 %v162, %v158
  %v191 = vpack.c.b16 %v163, %v159
  %v192 = vpack.c.b16 %v164, %v160
  %v193 = vpack.c.b16 %v165, %v161
  %v194 = vpack.c.b16 %v170, %v166
  %v195 = vpack.c.b16 %v171, %v167
  %v196 = vpack.c.b16 %v172, %v168
  %v197 = vpack.c.b16 %v173, %v169
  %v198 = vpack.c.b16 %v178, %v174
  %v199 = vpack.c.b16 %v179, %v175
  %v200 = vpack.c.b16 %v180, %v176
  %v201 = vpack.c.b16 %v181, %v177
  %v202 = vpack.c.b16 %v186, %v182
  %v203 = vpack.c.b16 %v187, %v183
  %v204 = vpack.c.b16 %v188, %v184
  %v205 = vpack.c.b16 %v189, %v185
  %v286 = vunpack.c.l.b16 %v30
  %v287 = vunpack.c.h.b16 %v30
  %v288 = vunpack.c.l.b16 %v31
  %v289 = vunpack.c.h.b16 %v31
  %v290 = vunpack.c.l.b16 %v32
  %v291 = vunpack.c.h.b16 %v32
  %v292 = vunpack.c.l.b16 %v33
  %v293 = vunpack.c.h.b16 %v33
  %v294 = vunpack.c.l.b16 %v34
  %v295 = vunpack.c.h.b16 %v34
  %v296 = vunpack.c.l.b16 %v35
  %v297 = vunpack.c.h.b16 %v35
  %v298 = vunpack.c.l.b16 %v36
  %v299 = vunpack.c.h.b16 %v36
  %v300 = vunpack.c.l.b16 %v37
  %v301 = vunpack.c.h.b16 %v37
  %v302 = vunpack.c.l.b16 %v38
  %v303 = vunpack.c.h.b16 %v38
  %v304 = vunpack.c.l.b16 %v39
  %v305 = vunpack.c.h.b16 %v39
  %v306 = vunpack.c.l.b16 %v40
  %v307 = vunpack.c.h.b16 %v40
  %v308 = vunpack.c.l.b16 %v41
  %v309 = vunpack.c.h.b16 %v41
  %v310 = vunpack.c.l.b16 %v42
  %v311 = vunpack.c.h.b16 %v42
  %v312 = vunpack.c.l.b16 %v43
  %v313 = vunpack.c.h.b16 %v43
  %v314 = vunpack.c.l.b16 %v44
  %v315 = vunpack.c.h.b16 %v44
  %v316 = vunpack.c.l.b16 %v45
  %v317 = vunpack.c.h.b16 %v45
  %v318 = vunpack.c.l.b16 %v46
  %v319 = vunpack.c.h.b16 %v46
  %v320 = vunpack.c.l.b16 %v47
  %v321 = vunpack.c.h.b16 %v47
  %v322 = vunpack.c.l.b16 %v48
  %v323 = vunpack.c.h.b16 %v48
  %v324 = vunpack.c.l.b16 %v49
  %v325 = vunpack.c.h.b16 %v49
  %v326 = vunpack.c.l.b16 %v50
  %v327 = vunpack.c.h.b16 %v50
  %v328 = vunpack.c.l.b16 %v51
  %v329 = vunpack.c.h.b16 %v51
  %v330 = vunpack.c.l.b16 %v52
  %v331 = vunpack.c.h.b16 %v52
  %v332 = vunpack.c.l.b16 %v53
  %v333 = vunpack.c.h.b16 %v53
  %v334 = vunpack.c.l.b16 %v54
  %v335 = vunpack.c.h.b16 %v54
  %v336 = vunpack.c.l.b16 %v55
  %v337 = vunpack.c.h.b16 %v55
  %v338 = vunpack.c.l.b16 %v56
  %v339 = vunpack.c.h.b16 %v56
  %v340 = vunpack.c.l.b16 %v57
  %v341 = vunpack.c.h.b16 %v57
  %v342 = vunpack.c.l.b16 %v58
  %v343 = vunpack.c.h.b16 %v58
  %v344 = vunpack.c.l.b16 %v59
  %v345 = vunpack.c.h.b16 %v59
  %v346 = vunpack.c.l.b16 %v60
  %v347 = vunpack.c.h.b16 %v60
  %v348 = vunpack.c.l.b16 %v61
  %v349 = vunpack.c.h.b16 %v61
  %v350 = vunpack.c.l.b16 %v62
  %v351 = vunpack.c.h.b16 %v62
  %v352 = vunpack.c.l.b16 %v63
  %v353 = vunpack.c.h.b16 %v63
  %v354 = vunpack.c.l.b16 %v64
  %v355 = vunpack.c.h.b16 %v64
  %v356 = vunpack.c.l.b16 %v65
  %v357 = vunpack.c.h.b16 %v65
  %v358 = vunpack.c.l.b16 %v66
  %v359 = vunpack.c.h.b16 %v66
  %v360 = vunpack.c.l.b16 %v67
  %v361 = vunpack.c.h.b16 %v67
  %v362 = vunpack.c.l.b16 %v68
  %v363 = vunpack.c.h.b16 %v68
  %v364 = vunpack.c.l.b16 %v69
  %v365 = vunpack.c.h.b16 %v69
  %v366 = vunpack.c.l.b16 %v70
  %v367 = vunpack.c.h.b16 %v70
  %v368 = vunpack.c.l.b16 %v71
  %v369 = vunpack.c.h.b16 %v71
  %v370 = vunpack.c.l.b16 %v72
  %v371 = vunpack.c.h.b16 %v72
  %v372 = vunpack.c.l.b16 %v73
  %v373 = vunpack.c.h.b16 %v73
  %v374 = vunpack.c.l.b16 %v74
  %v375 = vunpack.c.h.b16 %v74
  %v376 = vunpack.c.l.b16 %v75
  %v377 = vunpack.c.h.b16 %v75
  %v378 = vunpack.c.l.b16 %v76
  %v379 = vunpack.c.h.b16 %v76
  %v380 = vunpack.c.l.b16 %v77
  %v381 = vunpack.c.h.b16 %v77
  %v382 = vunpack.c.l.b16 %v78
  %v383 = vunpack.c.h.b16 %v78
  %v384 = vunpack.c.l.b16 %v79
  %v385 = vunpack.c.h.b16 %v79
  %v386 = vunpack.c.l.b16 %v80
  %v387 = vunpack.c.h.b16 %v80
  %v388 = vunpack.c.l.b16 %v81
  %v389 = vunpack.c.h.b16 %v81
  %v390 = vunpack.c.l.b16 %v82
  %v391 = vunpack.c.h.b16 %v82
  %v392 = vunpack.c.l.b16 %v83
  %v393 = vunpack.c.h.b16 %v83
  %v394 = vunpack.c.l.b16 %v84
  %v395 = vunpack.c.h.b16 %v84
  %v396 = vunpack.c.l.b16 %v85
  %v397 = vunpack.c.h.b16 %v85
  %v398 = vunpack.c.l.b16 %v86
  %v399 = vunpack.c.h.b16 %v86
  %v400 = vunpack.c.l.b16 %v87
  %v401 = vunpack.c.h.b16 %v87
  %v402 = vunpack.c.l.b16 %v88
  %v403 = vunpack.c.h.b16 %v88
  %v404 = vunpack.c.l.b16 %v89
  %v405 = vunpack.c.h.b16 %v89
  %v406 = vunpack.c.l.b16 %v90
  %v407 = vunpack.c.h.b16 %v90
  %v408 = vunpack.c.l.b16 %v91
  %v409 = vunpack.c.h.b16 %v91
  %v410 = vunpack.c.l.b16 %v92
  %v411 = vunpack.c.h.b16 %v92
  %v412 = vunpack.c.l.b16 %v93
  %v413 = vunpack.c.h.b16 %v93
  %v414 = vpack.c.b16 %v288, %v286
  %v415 = vpack.c.b16 %v289, %v287
  %v416 = vpack.c.b16 %v292, %v290
  %v417 = vpack.c.b16 %v293, %v291
  %v418 = vpack.c.b16 %v296, %v294
  %v419 = vpack.c.b16 %v297, %v295
  %v420 = vpack.c.b16 %v300, %v298
  %v421 = vpack.c.b16 %v301, %v299
  %v422 = vpack.c.b16 %v304, %v302
  %v423 = vpack.c.b16 %v305, %v303
  %v424 = vpack.c.b16 %v308, %v306
  %v425 = vpack.c.b16 %v309, %v307
  %v426 = vpack.c.b16 %v312, %v310
  %v427 = vpack.c.b16 %v313, %v311
  %v428 = vpack.c.b16 %v316, %v314
  %v429 = vpack.c.b16 %v317, %v315
  %v430 = vpack.c.b16 %v320, %v318
  %v431 = vpack.c.b16 %v321, %v319
  %v432 = vpack.c.b16 %v324, %v322
  %v433 = vpack.c.b16 %v325, %v323
  %v434 = vpack.c.b16 %v328, %v326
  %v435 = vpack.c.b16 %v329, %v327
  %v436 = vpack.c.b16 %v332, %v330
  %v437 = vpack.c.b16 %v333, %v331
  %v438 = vpack.c.b16 %v336, %v334
  %v439 = vpack.c.b16 %v337, %v335
  %v440 = vpack.c.b16 %v340, %v338
  %v441 = vpack.c.b16 %v341, %v339
  %v442 = vpack.c.b16 %v344, %v342
  %v443 = vpack.c.b16 %v345, %v343
  %v444 = vpack.c.b16 %v348, %v346
  %v445 = vpack.c.b16 %v349, %v347
  %v446 = vpack.c.b16 %v352, %v350
  %v447 = vpack.c.b16 %v353, %v351
  %v448 = vpack.c.b16 %v356, %v354
  %v449 = vpack.c.b16 %v357, %v355
  %v450 = vpack.c.b16 %v360, %v358
  %v451 = vpack.c.b16 %v361, %v359
  %v452 = vpack.c.b16 %v364, %v362
  %v453 = vpack.c.b16 %v365, %v363
  %v454 = vpack.c.b16 %v368, %v366
  %v455 = vpack.c.b16 %v369, %v367
  %v456 = vpack.c.b16 %v372, %v370
  %v457 = vpack.c.b16 %v373, %v371
  %v458 = vpack.c.b16 %v376, %v374
  %v459 = vpack.c.b16 %v377, %v375
  %v460 = vpack.c.b16 %v380, %v378
  %v461 = vpack.c.b16 %v381, %v379
  %v462 = vpack.c.b16 %v384, %v382
  %v463 = vpack.c.b16 %v385, %v383
  %v464 = vpack.c.b16 %v388, %v386
  %v465 = vpack.c.b16 %v389, %v387
  %v466 = vpack.c.b16 %v392, %v390
  %v467 = vpack.c.b16 %v393, %v391
  %v468 = vpack.c.b16 %v396, %v394
  %v469 = vpack.c.b16 %v397, %v395
  %v470 = vpack.c.b16 %v400, %v398
  %v471 = vpack.c.b16 %v401, %v399
  %v472 = vpack.c.b16 %v404, %v402
  %v473 = vpack.c.b16 %v405, %v403
  %v474 = vpack.c.b16 %v408, %v406
  %v475 = vpack.c.b16 %v409, %v407
  %v476 = vpack.c.b16 %v412, %v410
  %v477 = vpack.c.b16 %v413, %v411
  %542 = vmatprep.subr.bf16.mxu0 %v429
  %543 = vmatpush1.bf16.msra.mxu0 %v428
  %544 = vmatprep.subr.bf16.mxu0 %v427
  %545 = vmatpush1.bf16.msra.mxu0 %v426
  %546 = vmatprep.subr.bf16.mxu0 %v425
  %547 = vmatpush1.bf16.msra.mxu0 %v424
  %548 = vmatprep.subr.bf16.mxu0 %v423
  %549 = vmatpush1.bf16.msra.mxu0 %v422
  %550 = vmatprep.subr.bf16.mxu0 %v421
  %551 = vmatpush1.bf16.msra.mxu0 %v420
  %552 = vmatprep.subr.bf16.mxu0 %v419
  %553 = vmatpush1.bf16.msra.mxu0 %v418
  %554 = vmatprep.subr.bf16.mxu0 %v417
  %555 = vmatpush1.bf16.msra.mxu0 %v416
  %556 = vmatprep.subr.bf16.mxu0 %v415
  %557 = vmatpush1.bf16.msra.mxu0 %v414
  %558 = vmatprep.subr.bf16.mxu0 %v445
  %559 = vmatpush2.bf16.msra.mxu0 %v444
  %560 = vmatprep.subr.bf16.mxu0 %v443
  %561 = vmatpush2.bf16.msra.mxu0 %v442
  %562 = vmatprep.subr.bf16.mxu0 %v441
  %563 = vmatpush2.bf16.msra.mxu0 %v440
  %564 = vmatprep.subr.bf16.mxu0 %v439
  %565 = vmatpush2.bf16.msra.mxu0 %v438
  %566 = vmatprep.subr.bf16.mxu0 %v437
  %567 = vmatpush2.bf16.msra.mxu0 %v436
  %568 = vmatprep.subr.bf16.mxu0 %v435
  %569 = vmatpush2.bf16.msra.mxu0 %v434
  %570 = vmatprep.subr.bf16.mxu0 %v433
  %571 = vmatpush2.bf16.msra.mxu0 %v432
  %572 = vmatprep.subr.bf16.mxu0 %v431
  %573 = vmatpush2.bf16.msra.mxu0 %v430
  %574 = vmatprep.mubr.bf16.mxu0 %v191
  %575 = vmatmul.mubr.bf16.gmra.mxu0 %v190
  %v576 = vpop.f32.mrf.mxu0
  %v577 = vadd.f32 %v105, %v576
  %v578 = vpop.f32.mrf.mxu0
  %v579 = vadd.f32 %v105, %v578
  %v580 = vpop.f32.mrf.mxu0
  %v581 = vadd.f32 %v110, %v580
  %v582 = vpop.f32.mrf.mxu0
  %v583 = vadd.f32 %v110, %v582
  %584 = vmatprep.mubr.bf16.mxu0 %v195
  %585 = vmatmul.mubr.bf16.gmra.mxu0 %v194
  %v586 = vpop.f32.mrf.mxu0
  %v587 = vadd.f32 %v115, %v586
  %v588 = vpop.f32.mrf.mxu0
  %v589 = vadd.f32 %v115, %v588
  %v590 = vpop.f32.mrf.mxu0
  %v591 = vadd.f32 %v120, %v590
  %v592 = vpop.f32.mrf.mxu0
  %v593 = vadd.f32 %v120, %v592
  %594 = vmatprep.mubr.bf16.mxu0 %v199
  %595 = vmatmul.mubr.bf16.gmra.mxu0 %v198
  %v596 = vpop.f32.mrf.mxu0
  %v597 = vadd.f32 %v125, %v596
  %v598 = vpop.f32.mrf.mxu0
  %v599 = vadd.f32 %v125, %v598
  %v600 = vpop.f32.mrf.mxu0
  %v601 = vadd.f32 %v130, %v600
  %v602 = vpop.f32.mrf.mxu0
  %v603 = vadd.f32 %v130, %v602
  %604 = vmatprep.mubr.bf16.mxu0 %v203
  %605 = vmatmul.mubr.bf16.gmra.mxu0 %v202
  %v606 = vpop.f32.mrf.mxu0
  %v607 = vadd.f32 %v135, %v606
  %v608 = vpop.f32.mrf.mxu0
  %v609 = vadd.f32 %v135, %v608
  %v610 = vpop.f32.mrf.mxu0
  %v611 = vadd.f32 %v140, %v610
  %v612 = vpop.f32.mrf.mxu0
  %v613 = vadd.f32 %v140, %v612
  %614 = vdwg.mxu0
  %615 = vmatprep.subr.bf16.mxu0 %v461
  %616 = vmatpush1.bf16.msra.mxu0 %v460
  %617 = vmatprep.subr.bf16.mxu0 %v459
  %618 = vmatpush1.bf16.msra.mxu0 %v458
  %619 = vmatprep.subr.bf16.mxu0 %v457
  %620 = vmatpush1.bf16.msra.mxu0 %v456
  %621 = vmatprep.subr.bf16.mxu0 %v455
  %622 = vmatpush1.bf16.msra.mxu0 %v454
  %623 = vmatprep.subr.bf16.mxu0 %v453
  %624 = vmatpush1.bf16.msra.mxu0 %v452
  %625 = vmatprep.subr.bf16.mxu0 %v451
  %626 = vmatpush1.bf16.msra.mxu0 %v450
  %627 = vmatprep.subr.bf16.mxu0 %v449
  %628 = vmatpush1.bf16.msra.mxu0 %v448
  %629 = vmatprep.subr.bf16.mxu0 %v447
  %630 = vmatpush1.bf16.msra.mxu0 %v446
  %631 = vmatprep.subr.bf16.mxu0 %v477
  %632 = vmatpush2.bf16.msra.mxu0 %v476
  %633 = vmatprep.subr.bf16.mxu0 %v475
  %634 = vmatpush2.bf16.msra.mxu0 %v474
  %635 = vmatprep.subr.bf16.mxu0 %v473
  %636 = vmatpush2.bf16.msra.mxu0 %v472
  %637 = vmatprep.subr.bf16.mxu0 %v471
  %638 = vmatpush2.bf16.msra.mxu0 %v470
  %639 = vmatprep.subr.bf16.mxu0 %v469
  %640 = vmatpush2.bf16.msra.mxu0 %v468
  %641 = vmatprep.subr.bf16.mxu0 %v467
  %642 = vmatpush2.bf16.msra.mxu0 %v466
  %643 = vmatprep.subr.bf16.mxu0 %v465
  %644 = vmatpush2.bf16.msra.mxu0 %v464
  %645 = vmatprep.subr.bf16.mxu0 %v463
  %646 = vmatpush2.bf16.msra.mxu0 %v462
  %647 = vmatprep.mubr.bf16.mxu0 %v193
  %648 = vmatmul.mubr.bf16.gmra.mxu0 %v192
  %v649 = vpop.f32.mrf.mxu0
  %v650 = vadd.f32 %v577, %v649
  %v651 = vpop.f32.mrf.mxu0
  %v652 = vadd.f32 %v579, %v651
  %v653 = vpop.f32.mrf.mxu0
  %v654 = vadd.f32 %v581, %v653
  %v655 = vpop.f32.mrf.mxu0
  %v656 = vadd.f32 %v583, %v655
  %657 = vmatprep.mubr.bf16.mxu0 %v197
  %658 = vmatmul.mubr.bf16.gmra.mxu0 %v196
  %v659 = vpop.f32.mrf.mxu0
  %v660 = vadd.f32 %v587, %v659
  %v661 = vpop.f32.mrf.mxu0
  %v662 = vadd.f32 %v589, %v661
  %v663 = vpop.f32.mrf.mxu0
  %v664 = vadd.f32 %v591, %v663
  %v665 = vpop.f32.mrf.mxu0
  %v666 = vadd.f32 %v593, %v665
  %667 = vmatprep.mubr.bf16.mxu0 %v201
  %668 = vmatmul.mubr.bf16.gmra.mxu0 %v200
  %v669 = vpop.f32.mrf.mxu0
  %v670 = vadd.f32 %v597, %v669
  %v671 = vpop.f32.mrf.mxu0
  %v672 = vadd.f32 %v599, %v671
  %v673 = vpop.f32.mrf.mxu0
  %v674 = vadd.f32 %v601, %v673
  %v675 = vpop.f32.mrf.mxu0
  %v676 = vadd.f32 %v603, %v675
  %677 = vmatprep.mubr.bf16.mxu0 %v205
  %678 = vmatmul.mubr.bf16.gmra.mxu0 %v204
  %v679 = vpop.f32.mrf.mxu0
  %v680 = vadd.f32 %v607, %v679
  %v681 = vpop.f32.mrf.mxu0
  %v682 = vadd.f32 %v609, %v681
  %v683 = vpop.f32.mrf.mxu0
  %v684 = vadd.f32 %v611, %v683
  %v685 = vpop.f32.mrf.mxu0
  %v686 = vadd.f32 %v613, %v685
  %687 = vdwg.mxu0
  %v688 = vmax.f32 %v650, 0.0
  %v689 = vmax.f32 %v652, 0.0
  %v690 = vmax.f32 %v654, 0.0
  %v691 = vmax.f32 %v656, 0.0
  %v692 = vmax.f32 %v660, 0.0
  %v693 = vmax.f32 %v662, 0.0
  %v694 = vmax.f32 %v664, 0.0
  %v695 = vmax.f32 %v666, 0.0
  %v696 = vmax.f32 %v670, 0.0
  %v697 = vmax.f32 %v672, 0.0
  %v698 = vmax.f32 %v674, 0.0
  %v699 = vmax.f32 %v676, 0.0
  %v700 = vmax.f32 %v680, 0.0
  %v701 = vmax.f32 %v682, 0.0
  %v702 = vmax.f32 %v684, 0.0
  %v703 = vmax.f32 %v686, 0.0
  %v704 = vpack.c.bf16 %v690, %v688
  %v705 = vpack.c.bf16 %v691, %v689
  %v706 = vpack.c.bf16 %v694, %v692
  %v707 = vpack.c.bf16 %v695, %v693
  %v708 = vpack.c.bf16 %v698, %v696
  %v709 = vpack.c.bf16 %v699, %v697
  %v710 = vpack.c.bf16 %v702, %v700
  %v711 = vpack.c.bf16 %v703, %v701
  %v720 = vunpack.c.l.b16 %v704
  %v721 = vunpack.c.l.b16 %v705
  %v722 = vunpack.c.h.b16 %v704
  %v723 = vunpack.c.h.b16 %v705
  %v724 = vunpack.c.l.b16 %v706
  %v725 = vunpack.c.l.b16 %v707
  %v726 = vunpack.c.h.b16 %v706
  %v727 = vunpack.c.h.b16 %v707
  %v728 = vunpack.c.l.b16 %v708
  %v729 = vunpack.c.l.b16 %v709
  %v730 = vunpack.c.h.b16 %v708
  %v731 = vunpack.c.h.b16 %v709
  %v732 = vunpack.c.l.b16 %v710
  %v733 = vunpack.c.l.b16 %v711
  %v734 = vunpack.c.h.b16 %v710
  %v735 = vunpack.c.h.b16 %v711
  %v736 = vpack.c.b16 %v721, %v720
  %v737 = vpack.c.b16 %v723, %v722
  %v738 = vpack.c.b16 %v725, %v724
  %v739 = vpack.c.b16 %v727, %v726
  %v740 = vpack.c.b16 %v729, %v728
  %v741 = vpack.c.b16 %v731, %v730
  %v742 = vpack.c.b16 %v733, %v732
  %v743 = vpack.c.b16 %v735, %v734
  %752 = vst [vmem:[%s3] sm:$0xff] %v736
  %753 = vst [vmem:[%s3 + $0x8] sm:$0xff] %v737
  %754 = vst [vmem:[%s3 + $0x10] sm:$0xff] %v738
  %755 = vst [vmem:[%s3 + $0x18] sm:$0xff] %v739
  %756 = vst [vmem:[%s3 + $0x20] sm:$0xff] %v740
  %757 = vst [vmem:[%s3 + $0x28] sm:$0xff] %v741
  %758 = vst [vmem:[%s3 + $0x30] sm:$0xff] %v742
  %759 = vst [vmem:[%s3 + $0x38] sm:$0xff] %v743
  // Predicated region
  $region14: #{forward.5} parent=0 // pred_check
    _
  $region15: #{forward.5} parent=0 // pred_check_branch
    %761 = sbr.rel (0) target = $region17
  $region16: #{forward.5} parent=0 // pred_region
    _
  $region17: #{forward.5} parent=0 // pred_fallthru
    _
  // Predicated region
  $region18: #{forward.5} parent=0 // pred_check
    _
  $region19: #{forward.5} parent=0 // pred_check_branch
    %763 = sbr.rel (0) target = $region21
  $region20: #{forward.5} parent=0 // pred_region
    _
  $region21: #{forward.5} parent=0 // pred_fallthru
    _

// kernel: forward.6
$region0: #{forward.6}
  #allocation0 [shape = 'u32[]', space=smem, size = 0x4, offset = 0x4, fixed_abs, tag = 'smem constant byte address 0x4 - core index']
  #allocation1 [shape = 'u32[144,128]{1,0:T(1,128)}', space=vmem, size = 0x12000, scoped, tag = 'internal scratch']
  %s0 = inlined_call_operand.vmem [shape: bf16[64,640], index: 0, kind: input, shape index: {}]
  %s1 = inlined_call_operand.vmem [shape: f32[64,1], index: 1, kind: input, shape index: {}]
  %s2 = inlined_call_operand.vmem [shape: bf16[640,128], index: 2, kind: input, shape index: {}]
  %s3 = inlined_call_operand.vmem [shape: bf16[64,128], index: 3, kind: output, shape index: {}]
  %s4 = sld [smem:[#allocation0]]
  $region22: #{forward.6} parent=0
    _
  %s6 = ssub.s32 1, %s4
  %s7 = scalar_select 0, %s6, %s4
  // Predicated region
  $region2: #{forward.6} parent=0 // pred_check
    _
  $region3: #{forward.6} parent=0 // pred_check_branch
    %9 = sbr.rel (0) target = $region5
  $region4: #{forward.6} parent=0 // pred_region
    _
  $region5: #{forward.6} parent=0 // pred_fallthru
    _
  // Predicated region
  $region6: #{forward.6} parent=0 // pred_check
    _
  $region7: #{forward.6} parent=0 // pred_check_branch
    %11 = sbr.rel (0) target = $region9
  $region8: #{forward.6} parent=0 // pred_region
    _
  $region9: #{forward.6} parent=0 // pred_fallthru
    _
  // Predicated region
  $region10: #{forward.6} parent=0 // pred_check
    _
  $region11: #{forward.6} parent=0 // pred_check_branch
    %13 = sbr.rel (0) target = $region13
  $region12: #{forward.6} parent=0 // pred_region
    _
  $region13: #{forward.6} parent=0 // pred_fallthru
    _
  %v15 = vld [vmem:[%s0] sm:$0xff]
  %v16 = vld [vmem:[%s0 + $0x8] sm:$0xff]
  %v17 = vld [vmem:[%s0 + $0x10] sm:$0xf]
  %v18 = vld [vmem:[%s0 + $0x14] sm:$0xff]
  %v19 = vld [vmem:[%s0 + $0x1c] sm:$0xff]
  %v20 = vld [vmem:[%s0 + $0x24] sm:$0xf]
  %v21 = vld [vmem:[%s0 + $0x28] sm:$0xff]
  %v22 = vld [vmem:[%s0 + $0x30] sm:$0xff]
  %v23 = vld [vmem:[%s0 + $0x38] sm:$0xf]
  %v24 = vld [vmem:[%s0 + $0x3c] sm:$0xff]
  %v25 = vld [vmem:[%s0 + $0x44] sm:$0xff]
  %v26 = vld [vmem:[%s0 + $0x4c] sm:$0xf]
  %v27 = vld [vmem:[%s0 + $0x50] sm:$0xff]
  %v28 = vld [vmem:[%s0 + $0x58] sm:$0xff]
  %v29 = vld [vmem:[%s0 + $0x60] sm:$0xf]
  %v30 = vld [vmem:[%s0 + $0x64] sm:$0xff]
  %v31 = vld [vmem:[%s0 + $0x6c] sm:$0xff]
  %v32 = vld [vmem:[%s0 + $0x74] sm:$0xf]
  %v33 = vld [vmem:[%s0 + $0x78] sm:$0xff]
  %v34 = vld [vmem:[%s0 + $0x80] sm:$0xff]
  %v35 = vld [vmem:[%s0 + $0x88] sm:$0xf]
  %v36 = vld [vmem:[%s0 + $0x8c] sm:$0xff]
  %v37 = vld [vmem:[%s0 + $0x94] sm:$0xff]
  %v38 = vld [vmem:[%s0 + $0x9c] sm:$0xf]
  %v39 = vld [vmem:[%s2] sm:$0xf]
  %v40 = vld [vmem:[%s2 + $0x4] sm:$0xf]
  %v41 = vld [vmem:[%s2 + $0x8] sm:$0xf]
  %v42 = vld [vmem:[%s2 + $0xc] sm:$0xf]
  %v43 = vld [vmem:[%s2 + $0x10] sm:$0xf]
  %v44 = vld [vmem:[%s2 + $0x14] sm:$0xf]
  %v45 = vld [vmem:[%s2 + $0x18] sm:$0xf]
  %v46 = vld [vmem:[%s2 + $0x1c] sm:$0xf]
  %v47 = vld [vmem:[%s2 + $0x20] sm:$0xf]
  %v48 = vld [vmem:[%s2 + $0x24] sm:$0xf]
  %v49 = vld [vmem:[%s2 + $0x28] sm:$0xf]
  %v50 = vld [vmem:[%s2 + $0x2c] sm:$0xf]
  %v51 = vld [vmem:[%s2 + $0x30] sm:$0xf]
  %v52 = vld [vmem:[%s2 + $0x34] sm:$0xf]
  %v53 = vld [vmem:[%s2 + $0x38] sm:$0xf]
  %v54 = vld [vmem:[%s2 + $0x3c] sm:$0xf]
  %v55 = vld [vmem:[%s2 + $0x40] sm:$0xf]
  %v56 = vld [vmem:[%s2 + $0x44] sm:$0xf]
  %v57 = vld [vmem:[%s2 + $0x48] sm:$0xf]
  %v58 = vld [vmem:[%s2 + $0x4c] sm:$0xf]
  %v59 = vld [vmem:[%s2 + $0x50] sm:$0xf]
  %v60 = vld [vmem:[%s2 + $0x54] sm:$0xf]
  %v61 = vld [vmem:[%s2 + $0x58] sm:$0xf]
  %v62 = vld [vmem:[%s2 + $0x5c] sm:$0xf]
  %v63 = vld [vmem:[%s2 + $0x60] sm:$0xf]
  %v64 = vld [vmem:[%s2 + $0x64] sm:$0xf]
  %v65 = vld [vmem:[%s2 + $0x68] sm:$0xf]
  %v66 = vld [vmem:[%s2 + $0x6c] sm:$0xf]
  %v67 = vld [vmem:[%s2 + $0x70] sm:$0xf]
  %v68 = vld [vmem:[%s2 + $0x74] sm:$0xf]
  %v69 = vld [vmem:[%s2 + $0x78] sm:$0xf]
  %v70 = vld [vmem:[%s2 + $0x7c] sm:$0xf]
  %v71 = vld [vmem:[%s2 + $0x80] sm:$0xf]
  %v72 = vld [vmem:[%s2 + $0x84] sm:$0xf]
  %v73 = vld [vmem:[%s2 + $0x88] sm:$0xf]
  %v74 = vld [vmem:[%s2 + $0x8c] sm:$0xf]
  %v75 = vld [vmem:[%s2 + $0x90] sm:$0xf]
  %v76 = vld [vmem:[%s2 + $0x94] sm:$0xf]
  %v77 = vld [vmem:[%s2 + $0x98] sm:$0xf]
  %v78 = vld [vmem:[%s2 + $0x9c] sm:$0xf]
  %v79 = vld [vmem:[%s2 + $0xa0] sm:$0xf]
  %v80 = vld [vmem:[%s2 + $0xa4] sm:$0xf]
  %v81 = vld [vmem:[%s2 + $0xa8] sm:$0xf]
  %v82 = vld [vmem:[%s2 + $0xac] sm:$0xf]
  %v83 = vld [vmem:[%s2 + $0xb0] sm:$0xf]
  %v84 = vld [vmem:[%s2 + $0xb4] sm:$0xf]
  %v85 = vld [vmem:[%s2 + $0xb8] sm:$0xf]
  %v86 = vld [vmem:[%s2 + $0xbc] sm:$0xf]
  %v87 = vld [vmem:[%s2 + $0xc0] sm:$0xf]
  %v88 = vld [vmem:[%s2 + $0xc4] sm:$0xf]
  %v89 = vld [vmem:[%s2 + $0xc8] sm:$0xf]
  %v90 = vld [vmem:[%s2 + $0xcc] sm:$0xf]
  %v91 = vld [vmem:[%s2 + $0xd0] sm:$0xf]
  %v92 = vld [vmem:[%s2 + $0xd4] sm:$0xf]
  %v93 = vld [vmem:[%s2 + $0xd8] sm:$0xf]
  %v94 = vld [vmem:[%s2 + $0xdc] sm:$0xf]
  %v95 = vld [vmem:[%s2 + $0xe0] sm:$0xf]
  %v96 = vld [vmem:[%s2 + $0xe4] sm:$0xf]
  %v97 = vld [vmem:[%s2 + $0xe8] sm:$0xf]
  %v98 = vld [vmem:[%s2 + $0xec] sm:$0xf]
  %v99 = vld [vmem:[%s2 + $0xf0] sm:$0xf]
  %v100 = vld [vmem:[%s2 + $0xf4] sm:$0xf]
  %v101 = vld [vmem:[%s2 + $0xf8] sm:$0xf]
  %v102 = vld [vmem:[%s2 + $0xfc] sm:$0xf]
  %v103 = vld [vmem:[%s2 + $0x100] sm:$0xf]
  %v104 = vld [vmem:[%s2 + $0x104] sm:$0xf]
  %v105 = vld [vmem:[%s2 + $0x108] sm:$0xf]
  %v106 = vld [vmem:[%s2 + $0x10c] sm:$0xf]
  %v107 = vld [vmem:[%s2 + $0x110] sm:$0xf]
  %v108 = vld [vmem:[%s2 + $0x114] sm:$0xf]
  %v109 = vld [vmem:[%s2 + $0x118] sm:$0xf]
  %v110 = vld [vmem:[%s2 + $0x11c] sm:$0xf]
  %v111 = vld [vmem:[%s2 + $0x120] sm:$0xf]
  %v112 = vld [vmem:[%s2 + $0x124] sm:$0xf]
  %v113 = vld [vmem:[%s2 + $0x128] sm:$0xf]
  %v114 = vld [vmem:[%s2 + $0x12c] sm:$0xf]
  %v115 = vld [vmem:[%s2 + $0x130] sm:$0xf]
  %v116 = vld [vmem:[%s2 + $0x134] sm:$0xf]
  %v117 = vld [vmem:[%s2 + $0x138] sm:$0xf]
  %v118 = vld [vmem:[%s2 + $0x13c] sm:$0xf]
  %v119 = vld [vmem:[%s1] sm:$0xff]
  %v120 = vld [vmem:[%s1 + $0x8] sm:$0xff]
  %v121 = vld [vmem:[%s1 + $0x10] sm:$0xff]
  %v122 = vld [vmem:[%s1 + $0x18] sm:$0xff]
  %v123 = vld [vmem:[%s1 + $0x20] sm:$0xff]
  %v124 = vld [vmem:[%s1 + $0x28] sm:$0xff]
  %v125 = vld [vmem:[%s1 + $0x30] sm:$0xff]
  %v126 = vld [vmem:[%s1 + $0x38] sm:$0xff]
  %128 = vset.pattern.permute.xlu0 0
  %129 = vperm.xlu0 %128, %v119
  %v130 = vpop.permute.xlu0 %129
  %133 = vset.pattern.permute.xlu0 0
  %134 = vperm.xlu0 %133, %v120
  %v135 = vpop.permute.xlu0 %134
  %138 = vset.pattern.permute.xlu0 0
  %139 = vperm.xlu0 %138, %v121
  %v140 = vpop.permute.xlu0 %139
  %143 = vset.pattern.permute.xlu0 0
  %144 = vperm.xlu0 %143, %v122
  %v145 = vpop.permute.xlu0 %144
  %148 = vset.pattern.permute.xlu0 0
  %149 = vperm.xlu0 %148, %v123
  %v150 = vpop.permute.xlu0 %149
  %153 = vset.pattern.permute.xlu0 0
  %154 = vperm.xlu0 %153, %v124
  %v155 = vpop.permute.xlu0 %154
  %158 = vset.pattern.permute.xlu0 0
  %159 = vperm.xlu0 %158, %v125
  %v160 = vpop.permute.xlu0 %159
  %163 = vset.pattern.permute.xlu0 0
  %164 = vperm.xlu0 %163, %v126
  %v165 = vpop.permute.xlu0 %164
  %v191 = vunpack.c.l.b16 %v15
  %v192 = vunpack.c.h.b16 %v15
  %v193 = vunpack.c.l.b16 %v16
  %v194 = vunpack.c.h.b16 %v16
  %v195 = vunpack.c.l.b16 %v17
  %v196 = vunpack.c.l.b16 %v18
  %v197 = vunpack.c.h.b16 %v18
  %v198 = vunpack.c.l.b16 %v19
  %v199 = vunpack.c.h.b16 %v19
  %v200 = vunpack.c.l.b16 %v20
  %v201 = vunpack.c.l.b16 %v21
  %v202 = vunpack.c.h.b16 %v21
  %v203 = vunpack.c.l.b16 %v22
  %v204 = vunpack.c.h.b16 %v22
  %v205 = vunpack.c.l.b16 %v23
  %v206 = vunpack.c.l.b16 %v24
  %v207 = vunpack.c.h.b16 %v24
  %v208 = vunpack.c.l.b16 %v25
  %v209 = vunpack.c.h.b16 %v25
  %v210 = vunpack.c.l.b16 %v26
  %v211 = vunpack.c.l.b16 %v27
  %v212 = vunpack.c.h.b16 %v27
  %v213 = vunpack.c.l.b16 %v28
  %v214 = vunpack.c.h.b16 %v28
  %v215 = vunpack.c.l.b16 %v29
  %v216 = vunpack.c.l.b16 %v30
  %v217 = vunpack.c.h.b16 %v30
  %v218 = vunpack.c.l.b16 %v31
  %v219 = vunpack.c.h.b16 %v31
  %v220 = vunpack.c.l.b16 %v32
  %v221 = vunpack.c.l.b16 %v33
  %v222 = vunpack.c.h.b16 %v33
  %v223 = vunpack.c.l.b16 %v34
  %v224 = vunpack.c.h.b16 %v34
  %v225 = vunpack.c.l.b16 %v35
  %v226 = vunpack.c.l.b16 %v36
  %v227 = vunpack.c.h.b16 %v36
  %v228 = vunpack.c.l.b16 %v37
  %v229 = vunpack.c.h.b16 %v37
  %v230 = vunpack.c.l.b16 %v38
  %v231 = vpack.c.b16 %v196, %v191
  %v232 = vpack.c.b16 %v197, %v192
  %v233 = vpack.c.b16 %v198, %v193
  %v234 = vpack.c.b16 %v199, %v194
  %v235 = vpack.c.b16 %v200, %v195
  %v236 = vpack.c.b16 %v206, %v201
  %v237 = vpack.c.b16 %v207, %v202
  %v238 = vpack.c.b16 %v208, %v203
  %v239 = vpack.c.b16 %v209, %v204
  %v240 = vpack.c.b16 %v210, %v205
  %v241 = vpack.c.b16 %v216, %v211
  %v242 = vpack.c.b16 %v217, %v212
  %v243 = vpack.c.b16 %v218, %v213
  %v244 = vpack.c.b16 %v219, %v214
  %v245 = vpack.c.b16 %v220, %v215
  %v246 = vpack.c.b16 %v226, %v221
  %v247 = vpack.c.b16 %v227, %v222
  %v248 = vpack.c.b16 %v228, %v223
  %v249 = vpack.c.b16 %v229, %v224
  %v250 = vpack.c.b16 %v230, %v225
  %v351 = vunpack.c.l.b16 %v39
  %v352 = vunpack.c.l.b16 %v40
  %v353 = vunpack.c.l.b16 %v41
  %v354 = vunpack.c.l.b16 %v42
  %v355 = vunpack.c.l.b16 %v43
  %v356 = vunpack.c.l.b16 %v44
  %v357 = vunpack.c.l.b16 %v45
  %v358 = vunpack.c.l.b16 %v46
  %v359 = vunpack.c.l.b16 %v47
  %v360 = vunpack.c.l.b16 %v48
  %v361 = vunpack.c.l.b16 %v49
  %v362 = vunpack.c.l.b16 %v50
  %v363 = vunpack.c.l.b16 %v51
  %v364 = vunpack.c.l.b16 %v52
  %v365 = vunpack.c.l.b16 %v53
  %v366 = vunpack.c.l.b16 %v54
  %v367 = vunpack.c.l.b16 %v55
  %v368 = vunpack.c.l.b16 %v56
  %v369 = vunpack.c.l.b16 %v57
  %v370 = vunpack.c.l.b16 %v58
  %v371 = vunpack.c.l.b16 %v59
  %v372 = vunpack.c.l.b16 %v60
  %v373 = vunpack.c.l.b16 %v61
  %v374 = vunpack.c.l.b16 %v62
  %v375 = vunpack.c.l.b16 %v63
  %v376 = vunpack.c.l.b16 %v64
  %v377 = vunpack.c.l.b16 %v65
  %v378 = vunpack.c.l.b16 %v66
  %v379 = vunpack.c.l.b16 %v67
  %v380 = vunpack.c.l.b16 %v68
  %v381 = vunpack.c.l.b16 %v69
  %v382 = vunpack.c.l.b16 %v70
  %v383 = vunpack.c.l.b16 %v71
  %v384 = vunpack.c.l.b16 %v72
  %v385 = vunpack.c.l.b16 %v73
  %v386 = vunpack.c.l.b16 %v74
  %v387 = vunpack.c.l.b16 %v75
  %v388 = vunpack.c.l.b16 %v76
  %v389 = vunpack.c.l.b16 %v77
  %v390 = vunpack.c.l.b16 %v78
  %v391 = vunpack.c.l.b16 %v79
  %v392 = vunpack.c.l.b16 %v80
  %v393 = vunpack.c.l.b16 %v81
  %v394 = vunpack.c.l.b16 %v82
  %v395 = vunpack.c.l.b16 %v83
  %v396 = vunpack.c.l.b16 %v84
  %v397 = vunpack.c.l.b16 %v85
  %v398 = vunpack.c.l.b16 %v86
  %v399 = vunpack.c.l.b16 %v87
  %v400 = vunpack.c.l.b16 %v88
  %v401 = vunpack.c.l.b16 %v89
  %v402 = vunpack.c.l.b16 %v90
  %v403 = vunpack.c.l.b16 %v91
  %v404 = vunpack.c.l.b16 %v92
  %v405 = vunpack.c.l.b16 %v93
  %v406 = vunpack.c.l.b16 %v94
  %v407 = vunpack.c.l.b16 %v95
  %v408 = vunpack.c.l.b16 %v96
  %v409 = vunpack.c.l.b16 %v97
  %v410 = vunpack.c.l.b16 %v98
  %v411 = vunpack.c.l.b16 %v99
  %v412 = vunpack.c.l.b16 %v100
  %v413 = vunpack.c.l.b16 %v101
  %v414 = vunpack.c.l.b16 %v102
  %v415 = vunpack.c.l.b16 %v103
  %v416 = vunpack.c.l.b16 %v104
  %v417 = vunpack.c.l.b16 %v105
  %v418 = vunpack.c.l.b16 %v106
  %v419 = vunpack.c.l.b16 %v107
  %v420 = vunpack.c.l.b16 %v108
  %v421 = vunpack.c.l.b16 %v109
  %v422 = vunpack.c.l.b16 %v110
  %v423 = vunpack.c.l.b16 %v111
  %v424 = vunpack.c.l.b16 %v112
  %v425 = vunpack.c.l.b16 %v113
  %v426 = vunpack.c.l.b16 %v114
  %v427 = vunpack.c.l.b16 %v115
  %v428 = vunpack.c.l.b16 %v116
  %v429 = vunpack.c.l.b16 %v117
  %v430 = vunpack.c.l.b16 %v118
  %v431 = vpack.c.b16 %v352, %v351
  %v432 = vpack.c.b16 %v354, %v353
  %v433 = vpack.c.b16 %v356, %v355
  %v434 = vpack.c.b16 %v358, %v357
  %v435 = vpack.c.b16 %v360, %v359
  %v436 = vpack.c.b16 %v362, %v361
  %v437 = vpack.c.b16 %v364, %v363
  %v438 = vpack.c.b16 %v366, %v365
  %v439 = vpack.c.b16 %v368, %v367
  %v440 = vpack.c.b16 %v370, %v369
  %v441 = vpack.c.b16 %v372, %v371
  %v442 = vpack.c.b16 %v374, %v373
  %v443 = vpack.c.b16 %v376, %v375
  %v444 = vpack.c.b16 %v378, %v377
  %v445 = vpack.c.b16 %v380, %v379
  %v446 = vpack.c.b16 %v382, %v381
  %v447 = vpack.c.b16 %v384, %v383
  %v448 = vpack.c.b16 %v386, %v385
  %v449 = vpack.c.b16 %v388, %v387
  %v450 = vpack.c.b16 %v390, %v389
  %v451 = vpack.c.b16 %v392, %v391
  %v452 = vpack.c.b16 %v394, %v393
  %v453 = vpack.c.b16 %v396, %v395
  %v454 = vpack.c.b16 %v398, %v397
  %v455 = vpack.c.b16 %v400, %v399
  %v456 = vpack.c.b16 %v402, %v401
  %v457 = vpack.c.b16 %v404, %v403
  %v458 = vpack.c.b16 %v406, %v405
  %v459 = vpack.c.b16 %v408, %v407
  %v460 = vpack.c.b16 %v410, %v409
  %v461 = vpack.c.b16 %v412, %v411
  %v462 = vpack.c.b16 %v414, %v413
  %v463 = vpack.c.b16 %v416, %v415
  %v464 = vpack.c.b16 %v418, %v417
  %v465 = vpack.c.b16 %v420, %v419
  %v466 = vpack.c.b16 %v422, %v421
  %v467 = vpack.c.b16 %v424, %v423
  %v468 = vpack.c.b16 %v426, %v425
  %v469 = vpack.c.b16 %v428, %v427
  %v470 = vpack.c.b16 %v430, %v429
  %511 = vmatprep.subr.bf16.mxu0 0
  %512 = vmatpush1.bf16.msra.mxu0 %v438
  %513 = vmatprep.subr.bf16.mxu0 0
  %514 = vmatpush1.bf16.msra.mxu0 %v437
  %515 = vmatprep.subr.bf16.mxu0 0
  %516 = vmatpush1.bf16.msra.mxu0 %v436
  %517 = vmatprep.subr.bf16.mxu0 0
  %518 = vmatpush1.bf16.msra.mxu0 %v435
  %519 = vmatprep.subr.bf16.mxu0 0
  %520 = vmatpush1.bf16.msra.mxu0 %v434
  %521 = vmatprep.subr.bf16.mxu0 0
  %522 = vmatpush1.bf16.msra.mxu0 %v433
  %523 = vmatprep.subr.bf16.mxu0 0
  %524 = vmatpush1.bf16.msra.mxu0 %v432
  %525 = vmatprep.subr.bf16.mxu0 0
  %526 = vmatpush1.bf16.msra.mxu0 %v431
  %527 = vmatprep.subr.bf16.mxu0 0
  %528 = vmatpush2.bf16.msra.mxu0 %v446
  %529 = vmatprep.subr.bf16.mxu0 0
  %530 = vmatpush2.bf16.msra.mxu0 %v445
  %531 = vmatprep.subr.bf16.mxu0 0
  %532 = vmatpush2.bf16.msra.mxu0 %v444
  %533 = vmatprep.subr.bf16.mxu0 0
  %534 = vmatpush2.bf16.msra.mxu0 %v443
  %535 = vmatprep.subr.bf16.mxu0 0
  %536 = vmatpush2.bf16.msra.mxu0 %v442
  %537 = vmatprep.subr.bf16.mxu0 0
  %538 = vmatpush2.bf16.msra.mxu0 %v441
  %539 = vmatprep.subr.bf16.mxu0 0
  %540 = vmatpush2.bf16.msra.mxu0 %v440
  %541 = vmatprep.subr.bf16.mxu0 0
  %542 = vmatpush2.bf16.msra.mxu0 %v439
  %543 = vmatprep.mubr.bf16.mxu0 %v232
  %544 = vmatmul.mubr.bf16.gmra.mxu0 %v231
  %v545 = vpop.f32.mrf.mxu0
  %v546 = vadd.f32 %v130, %v545
  %v547 = vpop.f32.mrf.mxu0
  %v548 = vpop.f32.mrf.mxu0
  %v549 = vadd.f32 %v135, %v548
  %v550 = vpop.f32.mrf.mxu0
  %551 = vmatprep.mubr.bf16.mxu0 %v237
  %552 = vmatmul.mubr.bf16.gmra.mxu0 %v236
  %v553 = vpop.f32.mrf.mxu0
  %v554 = vadd.f32 %v140, %v553
  %v555 = vpop.f32.mrf.mxu0
  %v556 = vpop.f32.mrf.mxu0
  %v557 = vadd.f32 %v145, %v556
  %v558 = vpop.f32.mrf.mxu0
  %559 = vmatprep.mubr.bf16.mxu0 %v242
  %560 = vmatmul.mubr.bf16.gmra.mxu0 %v241
  %v561 = vpop.f32.mrf.mxu0
  %v562 = vadd.f32 %v150, %v561
  %v563 = vpop.f32.mrf.mxu0
  %v564 = vpop.f32.mrf.mxu0
  %v565 = vadd.f32 %v155, %v564
  %v566 = vpop.f32.mrf.mxu0
  %567 = vmatprep.mubr.bf16.mxu0 %v247
  %568 = vmatmul.mubr.bf16.gmra.mxu0 %v246
  %v569 = vpop.f32.mrf.mxu0
  %v570 = vadd.f32 %v160, %v569
  %v571 = vpop.f32.mrf.mxu0
  %v572 = vpop.f32.mrf.mxu0
  %v573 = vadd.f32 %v165, %v572
  %v574 = vpop.f32.mrf.mxu0
  %575 = vdwg.mxu0
  %576 = vmatprep.subr.bf16.mxu0 0
  %577 = vmatpush1.bf16.msra.mxu0 %v454
  %578 = vmatprep.subr.bf16.mxu0 0
  %579 = vmatpush1.bf16.msra.mxu0 %v453
  %580 = vmatprep.subr.bf16.mxu0 0
  %581 = vmatpush1.bf16.msra.mxu0 %v452
  %582 = vmatprep.subr.bf16.mxu0 0
  %583 = vmatpush1.bf16.msra.mxu0 %v451
  %584 = vmatprep.subr.bf16.mxu0 0
  %585 = vmatpush1.bf16.msra.mxu0 %v450
  %586 = vmatprep.subr.bf16.mxu0 0
  %587 = vmatpush1.bf16.msra.mxu0 %v449
  %588 = vmatprep.subr.bf16.mxu0 0
  %589 = vmatpush1.bf16.msra.mxu0 %v448
  %590 = vmatprep.subr.bf16.mxu0 0
  %591 = vmatpush1.bf16.msra.mxu0 %v447
  %592 = vmatprep.subr.bf16.mxu0 0
  %593 = vmatpush2.bf16.msra.mxu0 %v462
  %594 = vmatprep.subr.bf16.mxu0 0
  %595 = vmatpush2.bf16.msra.mxu0 %v461
  %596 = vmatprep.subr.bf16.mxu0 0
  %597 = vmatpush2.bf16.msra.mxu0 %v460
  %598 = vmatprep.subr.bf16.mxu0 0
  %599 = vmatpush2.bf16.msra.mxu0 %v459
  %600 = vmatprep.subr.bf16.mxu0 0
  %601 = vmatpush2.bf16.msra.mxu0 %v458
  %602 = vmatprep.subr.bf16.mxu0 0
  %603 = vmatpush2.bf16.msra.mxu0 %v457
  %604 = vmatprep.subr.bf16.mxu0 0
  %605 = vmatpush2.bf16.msra.mxu0 %v456
  %606 = vmatprep.subr.bf16.mxu0 0
  %607 = vmatpush2.bf16.msra.mxu0 %v455
  %608 = vmatprep.mubr.bf16.mxu0 %v234
  %609 = vmatmul.mubr.bf16.gmra.mxu0 %v233
  %v610 = vpop.f32.mrf.mxu0
  %v611 = vadd.f32 %v546, %v610
  %v612 = vpop.f32.mrf.mxu0
  %v613 = vpop.f32.mrf.mxu0
  %v614 = vadd.f32 %v549, %v613
  %v615 = vpop.f32.mrf.mxu0
  %616 = vmatprep.mubr.bf16.mxu0 %v239
  %617 = vmatmul.mubr.bf16.gmra.mxu0 %v238
  %v618 = vpop.f32.mrf.mxu0
  %v619 = vadd.f32 %v554, %v618
  %v620 = vpop.f32.mrf.mxu0
  %v621 = vpop.f32.mrf.mxu0
  %v622 = vadd.f32 %v557, %v621
  %v623 = vpop.f32.mrf.mxu0
  %624 = vmatprep.mubr.bf16.mxu0 %v244
  %625 = vmatmul.mubr.bf16.gmra.mxu0 %v243
  %v626 = vpop.f32.mrf.mxu0
  %v627 = vadd.f32 %v562, %v626
  %v628 = vpop.f32.mrf.mxu0
  %v629 = vpop.f32.mrf.mxu0
  %v630 = vadd.f32 %v565, %v629
  %v631 = vpop.f32.mrf.mxu0
  %632 = vmatprep.mubr.bf16.mxu0 %v249
  %633 = vmatmul.mubr.bf16.gmra.mxu0 %v248
  %v634 = vpop.f32.mrf.mxu0
  %v635 = vadd.f32 %v570, %v634
  %v636 = vpop.f32.mrf.mxu0
  %v637 = vpop.f32.mrf.mxu0
  %v638 = vadd.f32 %v573, %v637
  %v639 = vpop.f32.mrf.mxu0
  %640 = vdwg.mxu0
  %641 = vmatprep.subr.bf16.mxu0 0
  %642 = vmatpush1.bf16.msra.mxu0 %v470
  %643 = vmatprep.subr.bf16.mxu0 0
  %644 = vmatpush1.bf16.msra.mxu0 %v469
  %645 = vmatprep.subr.bf16.mxu0 0
  %646 = vmatpush1.bf16.msra.mxu0 %v468
  %647 = vmatprep.subr.bf16.mxu0 0
  %648 = vmatpush1.bf16.msra.mxu0 %v467
  %649 = vmatprep.subr.bf16.mxu0 0
  %650 = vmatpush1.bf16.msra.mxu0 %v466
  %651 = vmatprep.subr.bf16.mxu0 0
  %652 = vmatpush1.bf16.msra.mxu0 %v465
  %653 = vmatprep.subr.bf16.mxu0 0
  %654 = vmatpush1.bf16.msra.mxu0 %v464
  %655 = vmatprep.subr.bf16.mxu0 0
  %656 = vmatpush1.bf16.msra.mxu0 %v463
  %657 = vmatprep.subr.bf16.mxu0 0
  %658 = vmatpush2.bf16.msra.mxu0 0
  %659 = vmatprep.subr.bf16.mxu0 0
  %660 = vmatpush2.bf16.msra.mxu0 0
  %661 = vmatprep.subr.bf16.mxu0 0
  %662 = vmatpush2.bf16.msra.mxu0 0
  %663 = vmatprep.subr.bf16.mxu0 0
  %664 = vmatpush2.bf16.msra.mxu0 0
  %665 = vmatprep.subr.bf16.mxu0 0
  %666 = vmatpush2.bf16.msra.mxu0 0
  %667 = vmatprep.subr.bf16.mxu0 0
  %668 = vmatpush2.bf16.msra.mxu0 0
  %669 = vmatprep.subr.bf16.mxu0 0
  %670 = vmatpush2.bf16.msra.mxu0 0
  %671 = vmatprep.subr.bf16.mxu0 0
  %672 = vmatpush2.bf16.msra.mxu0 0
  %673 = vmatprep.mubr.bf16.mxu0 0
  %674 = vmatmul.mubr.bf16.gmra.mxu0 %v235
  %v675 = vpop.f32.mrf.mxu0
  %v676 = vadd.f32 %v611, %v675
  %v677 = vpop.f32.mrf.mxu0
  %v678 = vpop.f32.mrf.mxu0
  %v679 = vadd.f32 %v614, %v678
  %v680 = vpop.f32.mrf.mxu0
  %681 = vmatprep.mubr.bf16.mxu0 0
  %682 = vmatmul.mubr.bf16.gmra.mxu0 %v240
  %v683 = vpop.f32.mrf.mxu0
  %v684 = vadd.f32 %v619, %v683
  %v685 = vpop.f32.mrf.mxu0
  %v686 = vpop.f32.mrf.mxu0
  %v687 = vadd.f32 %v622, %v686
  %v688 = vpop.f32.mrf.mxu0
  %689 = vmatprep.mubr.bf16.mxu0 0
  %690 = vmatmul.mubr.bf16.gmra.mxu0 %v245
  %v691 = vpop.f32.mrf.mxu0
  %v692 = vadd.f32 %v627, %v691
  %v693 = vpop.f32.mrf.mxu0
  %v694 = vpop.f32.mrf.mxu0
  %v695 = vadd.f32 %v630, %v694
  %v696 = vpop.f32.mrf.mxu0
  %697 = vmatprep.mubr.bf16.mxu0 0
  %698 = vmatmul.mubr.bf16.gmra.mxu0 %v250
  %v699 = vpop.f32.mrf.mxu0
  %v700 = vadd.f32 %v635, %v699
  %v701 = vpop.f32.mrf.mxu0
  %v702 = vpop.f32.mrf.mxu0
  %v703 = vadd.f32 %v638, %v702
  %v704 = vpop.f32.mrf.mxu0
  %705 = vdwg.mxu0
  %v706 = vmax.f32 %v676, 0.0
  %v707 = vmax.f32 %v679, 0.0
  %v708 = vmax.f32 %v684, 0.0
  %v709 = vmax.f32 %v687, 0.0
  %v710 = vmax.f32 %v692, 0.0
  %v711 = vmax.f32 %v695, 0.0
  %v712 = vmax.f32 %v700, 0.0
  %v713 = vmax.f32 %v703, 0.0
  %v714 = vpack.c.bf16 %v707, %v706
  %v715 = vpack.c.bf16 %v709, %v708
  %v716 = vpack.c.bf16 %v711, %v710
  %v717 = vpack.c.bf16 %v713, %v712
  %v722 = vunpack.c.l.b16 %v714
  %v723 = vunpack.c.h.b16 %v714
  %v724 = vunpack.c.l.b16 %v715
  %v725 = vunpack.c.h.b16 %v715
  %v726 = vunpack.c.l.b16 %v716
  %v727 = vunpack.c.h.b16 %v716
  %v728 = vunpack.c.l.b16 %v717
  %v729 = vunpack.c.h.b16 %v717
  %v730 = vpack.c.b16 %v722, %v722
  %v731 = vpack.c.b16 %v723, %v723
  %v732 = vpack.c.b16 %v724, %v724
  %v733 = vpack.c.b16 %v725, %v725
  %v734 = vpack.c.b16 %v726, %v726
  %v735 = vpack.c.b16 %v727, %v727
  %v736 = vpack.c.b16 %v728, %v728
  %v737 = vpack.c.b16 %v729, %v729
  %746 = vst [vmem:[%s3] sm:$0xf] %v730
  %747 = vst [vmem:[%s3 + $0x4] sm:$0xf] %v731
  %748 = vst [vmem:[%s3 + $0x8] sm:$0xf] %v732
  %749 = vst [vmem:[%s3 + $0xc] sm:$0xf] %v733
  %750 = vst [vmem:[%s3 + $0x10] sm:$0xf] %v734
  %751 = vst [vmem:[%s3 + $0x14] sm:$0xf] %v735
  %752 = vst [vmem:[%s3 + $0x18] sm:$0xf] %v736
  %753 = vst [vmem:[%s3 + $0x1c] sm:$0xf] %v737
  // Predicated region
  $region14: #{forward.6} parent=0 // pred_check
    _
  $region15: #{forward.6} parent=0 // pred_check_branch
    %755 = sbr.rel (0) target = $region17
  $region16: #{forward.6} parent=0 // pred_region
    _
  $region17: #{forward.6} parent=0 // pred_fallthru
    _
  // Predicated region
  $region18: #{forward.6} parent=0 // pred_check
    _
  $region19: #{forward.6} parent=0 // pred_check_branch
    %757 = sbr.rel (0) target = $region21
  $region20: #{forward.6} parent=0 // pred_region
    _
  $region21: #{forward.6} parent=0 // pred_fallthru
    _

// kernel: forward.7
$region0: #{forward.7}
  #allocation0 [shape = 'u32[]', space=smem, size = 0x4, offset = 0x4, fixed_abs, tag = 'smem constant byte address 0x4 - core index']
  #allocation1 [shape = 'u32[144,128]{1,0:T(1,128)}', space=vmem, size = 0x12000, scoped, tag = 'internal scratch']
  %s0 = inlined_call_operand.vmem [shape: bf16[16,3136], index: 0, kind: input, shape index: {}]
  %s1 = inlined_call_operand.vmem [shape: bf16[3136,256], index: 1, kind: input, shape index: {}]
  %s2 = inlined_call_operand.vmem [shape: f32[1,256], index: 2, kind: input, shape index: {}]
  %s3 = inlined_call_operand.vmem [shape: bf16[256,128], index: 3, kind: input, shape index: {}]
  %s4 = inlined_call_operand.vmem [shape: f32[1,128], index: 4, kind: input, shape index: {}]
  %s5 = inlined_call_operand.vmem [shape: f32[16,128], index: 5, kind: output, shape index: {}]
  %s6 = sld [smem:[#allocation0]]
  $region30: #{forward.7} parent=0
    _
  %s8 = ssub.s32 1, %s6
  %s9 = scalar_select 0, %s8, %s6
  // Predicated region
  $region2: #{forward.7} parent=0 // pred_check
    _
  $region3: #{forward.7} parent=0 // pred_check_branch
    %11 = sbr.rel (0) target = $region5
  $region4: #{forward.7} parent=0 // pred_region
    _
  $region5: #{forward.7} parent=0 // pred_fallthru
    _
  // Predicated region
  $region6: #{forward.7} parent=0 // pred_check
    _
  $region7: #{forward.7} parent=0 // pred_check_branch
    %13 = sbr.rel (0) target = $region9
  $region8: #{forward.7} parent=0 // pred_region
    _
  $region9: #{forward.7} parent=0 // pred_fallthru
    _
  // Predicated region
  $region10: #{forward.7} parent=0 // pred_check
    _
  $region11: #{forward.7} parent=0 // pred_check_branch
    %15 = sbr.rel (0) target = $region13
  $region12: #{forward.7} parent=0 // pred_region
    _
  $region13: #{forward.7} parent=0 // pred_fallthru
    _
  // Predicated region
  $region14: #{forward.7} parent=0 // pred_check
    _
  $region15: #{forward.7} parent=0 // pred_check_branch
    %17 = sbr.rel (0) target = $region17
  $region16: #{forward.7} parent=0 // pred_region
    _
  $region17: #{forward.7} parent=0 // pred_fallthru
    _
  // Predicated region
  $region18: #{forward.7} parent=0 // pred_check
    _
  $region19: #{forward.7} parent=0 // pred_check_branch
    %19 = sbr.rel (0) target = $region21
  $region20: #{forward.7} parent=0 // pred_region
    _
  $region21: #{forward.7} parent=0 // pred_fallthru
    _
  %v21 = vld [vmem:[%s0] sm:$0xff]
  %v22 = vld [vmem:[%s0 + $0x8] sm:$0xff]
  %v23 = vld [vmem:[%s0 + $0x10] sm:$0xff]
  %v24 = vld [vmem:[%s0 + $0x18] sm:$0xff]
  %v25 = vld [vmem:[%s0 + $0x20] sm:$0xff]
  %v26 = vld [vmem:[%s0 + $0x28] sm:$0xff]
  %v27 = vld [vmem:[%s0 + $0x30] sm:$0xff]
  %v28 = vld [vmem:[%s0 + $0x38] sm:$0xff]
  %v29 = vld [vmem:[%s0 + $0x40] sm:$0xff]
  %v30 = vld [vmem:[%s0 + $0x48] sm:$0xff]
  %v31 = vld [vmem:[%s0 + $0x50] sm:$0xff]
  %v32 = vld [vmem:[%s0 + $0x58] sm:$0xff]
  %v33 = vld [vmem:[%s0 + $0x60] sm:$0xf]
  %v34 = vld [vmem:[%s0 + $0x64] sm:$0xff]
  %v35 = vld [vmem:[%s0 + $0x6c] sm:$0xff]
  %v36 = vld [vmem:[%s0 + $0x74] sm:$0xff]
  %v37 = vld [vmem:[%s0 + $0x7c] sm:$0xff]
  %v38 = vld [vmem:[%s0 + $0x84] sm:$0xff]
  %v39 = vld [vmem:[%s0 + $0x8c] sm:$0xff]
  %v40 = vld [vmem:[%s0 + $0x94] sm:$0xff]
  %v41 = vld [vmem:[%s0 + $0x9c] sm:$0xff]
  %v42 = vld [vmem:[%s0 + $0xa4] sm:$0xff]
  %v43 = vld [vmem:[%s0 + $0xac] sm:$0xff]
  %v44 = vld [vmem:[%s0 + $0xb4] sm:$0xff]
  %v45 = vld [vmem:[%s0 + $0xbc] sm:$0xff]
  %v46 = vld [vmem:[%s0 + $0xc4] sm:$0xf]
  %v47 = vld [vmem:[%s1] sm:$0xff]
  %v48 = vld [vmem:[%s1 + $0x8] sm:$0xff]
  %v49 = vld [vmem:[%s1 + $0x10] sm:$0xff]
  %v50 = vld [vmem:[%s1 + $0x18] sm:$0xff]
  %v51 = vld [vmem:[%s1 + $0x20] sm:$0xff]
  %v52 = vld [vmem:[%s1 + $0x28] sm:$0xff]
  %v53 = vld [vmem:[%s1 + $0x30] sm:$0xff]
  %v54 = vld [vmem:[%s1 + $0x38] sm:$0xff]
  %v55 = vld [vmem:[%s1 + $0x40] sm:$0xff]
  %v56 = vld [vmem:[%s1 + $0x48] sm:$0xff]
  %v57 = vld [vmem:[%s1 + $0x50] sm:$0xff]
  %v58 = vld [vmem:[%s1 + $0x58] sm:$0xff]
  %v59 = vld [vmem:[%s1 + $0x60] sm:$0xff]
  %v60 = vld [vmem:[%s1 + $0x68] sm:$0xff]
  %v61 = vld [vmem:[%s1 + $0x70] sm:$0xff]
  %v62 = vld [vmem:[%s1 + $0x78] sm:$0xff]
  %v63 = vld [vmem:[%s1 + $0x80] sm:$0xff]
  %v64 = vld [vmem:[%s1 + $0x88] sm:$0xff]
  %v65 = vld [vmem:[%s1 + $0x90] sm:$0xff]
  %v66 = vld [vmem:[%s1 + $0x98] sm:$0xff]
  %v67 = vld [vmem:[%s1 + $0xa0] sm:$0xff]
  %v68 = vld [vmem:[%s1 + $0xa8] sm:$0xff]
  %v69 = vld [vmem:[%s1 + $0xb0] sm:$0xff]
  %v70 = vld [vmem:[%s1 + $0xb8] sm:$0xff]
  %v71 = vld [vmem:[%s1 + $0xc0] sm:$0xff]
  %v72 = vld [vmem:[%s1 + $0xc8] sm:$0xff]
  %v73 = vld [vmem:[%s1 + $0xd0] sm:$0xff]
  %v74 = vld [vmem:[%s1 + $0xd8] sm:$0xff]
  %v75 = vld [vmem:[%s1 + $0xe0] sm:$0xff]
  %v76 = vld [vmem:[%s1 + $0xe8] sm:$0xff]
  %v77 = vld [vmem:[%s1 + $0xf0] sm:$0xff]
  %v78 = vld [vmem:[%s1 + $0xf8] sm:$0xff]
  %v79 = vld [vmem:[%s1 + $0x100] sm:$0xff]
  %v80 = vld [vmem:[%s1 + $0x108] sm:$0xff]
  %v81 = vld [vmem:[%s1 + $0x110] sm:$0xff]
  %v82 = vld [vmem:[%s1 + $0x118] sm:$0xff]
  %v83 = vld [vmem:[%s1 + $0x120] sm:$0xff]
  %v84 = vld [vmem:[%s1 + $0x128] sm:$0xff]
  %v85 = vld [vmem:[%s1 + $0x130] sm:$0xff]
  %v86 = vld [vmem:[%s1 + $0x138] sm:$0xff]
  %v87 = vld [vmem:[%s1 + $0x140] sm:$0xff]
  %v88 = vld [vmem:[%s1 + $0x148] sm:$0xff]
  %v89 = vld [vmem:[%s1 + $0x150] sm:$0xff]
  %v90 = vld [vmem:[%s1 + $0x158] sm:$0xff]
  %v91 = vld [vmem:[%s1 + $0x160] sm:$0xff]
  %v92 = vld [vmem:[%s1 + $0x168] sm:$0xff]
  %v93 = vld [vmem:[%s1 + $0x170] sm:$0xff]
  %v94 = vld [vmem:[%s1 + $0x178] sm:$0xff]
  %v95 = vld [vmem:[%s1 + $0x180] sm:$0xff]
  %v96 = vld [vmem:[%s1 + $0x188] sm:$0xff]
  %v97 = vld [vmem:[%s1 + $0x190] sm:$0xff]
  %v98 = vld [vmem:[%s1 + $0x198] sm:$0xff]
  %v99 = vld [vmem:[%s1 + $0x1a0] sm:$0xff]
  %v100 = vld [vmem:[%s1 + $0x1a8] sm:$0xff]
  %v101 = vld [vmem:[%s1 + $0x1b0] sm:$0xff]
  %v102 = vld [vmem:[%s1 + $0x1b8] sm:$0xff]
  %v103 = vld [vmem:[%s1 + $0x1c0] sm:$0xff]
  %v104 = vld [vmem:[%s1 + $0x1c8] sm:$0xff]
  %v105 = vld [vmem:[%s1 + $0x1d0] sm:$0xff]
  %v106 = vld [vmem:[%s1 + $0x1d8] sm:$0xff]
  %v107 = vld [vmem:[%s1 + $0x1e0] sm:$0xff]
  %v108 = vld [vmem:[%s1 + $0x1e8] sm:$0xff]
  %v109 = vld [vmem:[%s1 + $0x1f0] sm:$0xff]
  %v110 = vld [vmem:[%s1 + $0x1f8] sm:$0xff]
  %v111 = vld [vmem:[%s1 + $0x200] sm:$0xff]
  %v112 = vld [vmem:[%s1 + $0x208] sm:$0xff]
  %v113 = vld [vmem:[%s1 + $0x210] sm:$0xff]
  %v114 = vld [vmem:[%s1 + $0x218] sm:$0xff]
  %v115 = vld [vmem:[%s1 + $0x220] sm:$0xff]
  %v116 = vld [vmem:[%s1 + $0x228] sm:$0xff]
  %v117 = vld [vmem:[%s1 + $0x230] sm:$0xff]
  %v118 = vld [vmem:[%s1 + $0x238] sm:$0xff]
  %v119 = vld [vmem:[%s1 + $0x240] sm:$0xff]
  %v120 = vld [vmem:[%s1 + $0x248] sm:$0xff]
  %v121 = vld [vmem:[%s1 + $0x250] sm:$0xff]
  %v122 = vld [vmem:[%s1 + $0x258] sm:$0xff]
  %v123 = vld [vmem:[%s1 + $0x260] sm:$0xff]
  %v124 = vld [vmem:[%s1 + $0x268] sm:$0xff]
  %v125 = vld [vmem:[%s1 + $0x270] sm:$0xff]
  %v126 = vld [vmem:[%s1 + $0x278] sm:$0xff]
  %v127 = vld [vmem:[%s1 + $0x280] sm:$0xff]
  %v128 = vld [vmem:[%s1 + $0x288] sm:$0xff]
  %v129 = vld [vmem:[%s1 + $0x290] sm:$0xff]
  %v130 = vld [vmem:[%s1 + $0x298] sm:$0xff]
  %v131 = vld [vmem:[%s1 + $0x2a0] sm:$0xff]
  %v132 = vld [vmem:[%s1 + $0x2a8] sm:$0xff]
  %v133 = vld [vmem:[%s1 + $0x2b0] sm:$0xff]
  %v134 = vld [vmem:[%s1 + $0x2b8] sm:$0xff]
  %v135 = vld [vmem:[%s1 + $0x2c0] sm:$0xff]
  %v136 = vld [vmem:[%s1 + $0x2c8] sm:$0xff]
  %v137 = vld [vmem:[%s1 + $0x2d0] sm:$0xff]
  %v138 = vld [vmem:[%s1 + $0x2d8] sm:$0xff]
  %v139 = vld [vmem:[%s1 + $0x2e0] sm:$0xff]
  %v140 = vld [vmem:[%s1 + $0x2e8] sm:$0xff]
  %v141 = vld [vmem:[%s1 + $0x2f0] sm:$0xff]
  %v142 = vld [vmem:[%s1 + $0x2f8] sm:$0xff]
  %v143 = vld [vmem:[%s1 + $0x300] sm:$0xff]
  %v144 = vld [vmem:[%s1 + $0x308] sm:$0xff]
  %v145 = vld [vmem:[%s1 + $0x310] sm:$0xff]
  %v146 = vld [vmem:[%s1 + $0x318] sm:$0xff]
  %v147 = vld [vmem:[%s1 + $0x320] sm:$0xff]
  %v148 = vld [vmem:[%s1 + $0x328] sm:$0xff]
  %v149 = vld [vmem:[%s1 + $0x330] sm:$0xff]
  %v150 = vld [vmem:[%s1 + $0x338] sm:$0xff]
  %v151 = vld [vmem:[%s1 + $0x340] sm:$0xff]
  %v152 = vld [vmem:[%s1 + $0x348] sm:$0xff]
  %v153 = vld [vmem:[%s1 + $0x350] sm:$0xff]
  %v154 = vld [vmem:[%s1 + $0x358] sm:$0xff]
  %v155 = vld [vmem:[%s1 + $0x360] sm:$0xff]
  %v156 = vld [vmem:[%s1 + $0x368] sm:$0xff]
  %v157 = vld [vmem:[%s1 + $0x370] sm:$0xff]
  %v158 = vld [vmem:[%s1 + $0x378] sm:$0xff]
  %v159 = vld [vmem:[%s1 + $0x380] sm:$0xff]
  %v160 = vld [vmem:[%s1 + $0x388] sm:$0xff]
  %v161 = vld [vmem:[%s1 + $0x390] sm:$0xff]
  %v162 = vld [vmem:[%s1 + $0x398] sm:$0xff]
  %v163 = vld [vmem:[%s1 + $0x3a0] sm:$0xff]
  %v164 = vld [vmem:[%s1 + $0x3a8] sm:$0xff]
  %v165 = vld [vmem:[%s1 + $0x3b0] sm:$0xff]
  %v166 = vld [vmem:[%s1 + $0x3b8] sm:$0xff]
  %v167 = vld [vmem:[%s1 + $0x3c0] sm:$0xff]
  %v168 = vld [vmem:[%s1 + $0x3c8] sm:$0xff]
  %v169 = vld [vmem:[%s1 + $0x3d0] sm:$0xff]
  %v170 = vld [vmem:[%s1 + $0x3d8] sm:$0xff]
  %v171 = vld [vmem:[%s1 + $0x3e0] sm:$0xff]
  %v172 = vld [vmem:[%s1 + $0x3e8] sm:$0xff]
  %v173 = vld [vmem:[%s1 + $0x3f0] sm:$0xff]
  %v174 = vld [vmem:[%s1 + $0x3f8] sm:$0xff]
  %v175 = vld [vmem:[%s1 + $0x400] sm:$0xff]
  %v176 = vld [vmem:[%s1 + $0x408] sm:$0xff]
  %v177 = vld [vmem:[%s1 + $0x410] sm:$0xff]
  %v178 = vld [vmem:[%s1 + $0x418] sm:$0xff]
  %v179 = vld [vmem:[%s1 + $0x420] sm:$0xff]
  %v180 = vld [vmem:[%s1 + $0x428] sm:$0xff]
  %v181 = vld [vmem:[%s1 + $0x430] sm:$0xff]
  %v182 = vld [vmem:[%s1 + $0x438] sm:$0xff]
  %v183 = vld [vmem:[%s1 + $0x440] sm:$0xff]
  %v184 = vld [vmem:[%s1 + $0x448] sm:$0xff]
  %v185 = vld [vmem:[%s1 + $0x450] sm:$0xff]
  %v186 = vld [vmem:[%s1 + $0x458] sm:$0xff]
  %v187 = vld [vmem:[%s1 + $0x460] sm:$0xff]
  %v188 = vld [vmem:[%s1 + $0x468] sm:$0xff]
  %v189 = vld [vmem:[%s1 + $0x470] sm:$0xff]
  %v190 = vld [vmem:[%s1 + $0x478] sm:$0xff]
  %v191 = vld [vmem:[%s1 + $0x480] sm:$0xff]
  %v192 = vld [vmem:[%s1 + $0x488] sm:$0xff]
  %v193 = vld [vmem:[%s1 + $0x490] sm:$0xff]
  %v194 = vld [vmem:[%s1 + $0x498] sm:$0xff]
  %v195 = vld [vmem:[%s1 + $0x4a0] sm:$0xff]
  %v196 = vld [vmem:[%s1 + $0x4a8] sm:$0xff]
  %v197 = vld [vmem:[%s1 + $0x4b0] sm:$0xff]
  %v198 = vld [vmem:[%s1 + $0x4b8] sm:$0xff]
  %v199 = vld [vmem:[%s1 + $0x4c0] sm:$0xff]
  %v200 = vld [vmem:[%s1 + $0x4c8] sm:$0xff]
  %v201 = vld [vmem:[%s1 + $0x4d0] sm:$0xff]
  %v202 = vld [vmem:[%s1 + $0x4d8] sm:$0xff]
  %v203 = vld [vmem:[%s1 + $0x4e0] sm:$0xff]
  %v204 = vld [vmem:[%s1 + $0x4e8] sm:$0xff]
  %v205 = vld [vmem:[%s1 + $0x4f0] sm:$0xff]
  %v206 = vld [vmem:[%s1 + $0x4f8] sm:$0xff]
  %v207 = vld [vmem:[%s1 + $0x500] sm:$0xff]
  %v208 = vld [vmem:[%s1 + $0x508] sm:$0xff]
  %v209 = vld [vmem:[%s1 + $0x510] sm:$0xff]
  %v210 = vld [vmem:[%s1 + $0x518] sm:$0xff]
  %v211 = vld [vmem:[%s1 + $0x520] sm:$0xff]
  %v212 = vld [vmem:[%s1 + $0x528] sm:$0xff]
  %v213 = vld [vmem:[%s1 + $0x530] sm:$0xff]
  %v214 = vld [vmem:[%s1 + $0x538] sm:$0xff]
  %v215 = vld [vmem:[%s1 + $0x540] sm:$0xff]
  %v216 = vld [vmem:[%s1 + $0x548] sm:$0xff]
  %v217 = vld [vmem:[%s1 + $0x550] sm:$0xff]
  %v218 = vld [vmem:[%s1 + $0x558] sm:$0xff]
  %v219 = vld [vmem:[%s1 + $0x560] sm:$0xff]
  %v220 = vld [vmem:[%s1 + $0x568] sm:$0xff]
  %v221 = vld [vmem:[%s1 + $0x570] sm:$0xff]
  %v222 = vld [vmem:[%s1 + $0x578] sm:$0xff]
  %v223 = vld [vmem:[%s1 + $0x580] sm:$0xff]
  %v224 = vld [vmem:[%s1 + $0x588] sm:$0xff]
  %v225 = vld [vmem:[%s1 + $0x590] sm:$0xff]
  %v226 = vld [vmem:[%s1 + $0x598] sm:$0xff]
  %v227 = vld [vmem:[%s1 + $0x5a0] sm:$0xff]
  %v228 = vld [vmem:[%s1 + $0x5a8] sm:$0xff]
  %v229 = vld [vmem:[%s1 + $0x5b0] sm:$0xff]
  %v230 = vld [vmem:[%s1 + $0x5b8] sm:$0xff]
  %v231 = vld [vmem:[%s1 + $0x5c0] sm:$0xff]
  %v232 = vld [vmem:[%s1 + $0x5c8] sm:$0xff]
  %v233 = vld [vmem:[%s1 + $0x5d0] sm:$0xff]
  %v234 = vld [vmem:[%s1 + $0x5d8] sm:$0xff]
  %v235 = vld [vmem:[%s1 + $0x5e0] sm:$0xff]
  %v236 = vld [vmem:[%s1 + $0x5e8] sm:$0xff]
  %v237 = vld [vmem:[%s1 + $0x5f0] sm:$0xff]
  %v238 = vld [vmem:[%s1 + $0x5f8] sm:$0xff]
  %v239 = vld [vmem:[%s1 + $0x600] sm:$0xff]
  %v240 = vld [vmem:[%s1 + $0x608] sm:$0xff]
  %v241 = vld [vmem:[%s1 + $0x610] sm:$0xff]
  %v242 = vld [vmem:[%s1 + $0x618] sm:$0xff]
  %v243 = vld [vmem:[%s1 + $0x620] sm:$0xff]
  %v244 = vld [vmem:[%s1 + $0x628] sm:$0xff]
  %v245 = vld [vmem:[%s1 + $0x630] sm:$0xff]
  %v246 = vld [vmem:[%s1 + $0x638] sm:$0xff]
  %v247 = vld [vmem:[%s1 + $0x640] sm:$0xff]
  %v248 = vld [vmem:[%s1 + $0x648] sm:$0xff]
  %v249 = vld [vmem:[%s1 + $0x650] sm:$0xff]
  %v250 = vld [vmem:[%s1 + $0x658] sm:$0xff]
  %v251 = vld [vmem:[%s1 + $0x660] sm:$0xff]
  %v252 = vld [vmem:[%s1 + $0x668] sm:$0xff]
  %v253 = vld [vmem:[%s1 + $0x670] sm:$0xff]
  %v254 = vld [vmem:[%s1 + $0x678] sm:$0xff]
  %v255 = vld [vmem:[%s1 + $0x680] sm:$0xff]
  %v256 = vld [vmem:[%s1 + $0x688] sm:$0xff]
  %v257 = vld [vmem:[%s1 + $0x690] sm:$0xff]
  %v258 = vld [vmem:[%s1 + $0x698] sm:$0xff]
  %v259 = vld [vmem:[%s1 + $0x6a0] sm:$0xff]
  %v260 = vld [vmem:[%s1 + $0x6a8] sm:$0xff]
  %v261 = vld [vmem:[%s1 + $0x6b0] sm:$0xff]
  %v262 = vld [vmem:[%s1 + $0x6b8] sm:$0xff]
  %v263 = vld [vmem:[%s1 + $0x6c0] sm:$0xff]
  %v264 = vld [vmem:[%s1 + $0x6c8] sm:$0xff]
  %v265 = vld [vmem:[%s1 + $0x6d0] sm:$0xff]
  %v266 = vld [vmem:[%s1 + $0x6d8] sm:$0xff]
  %v267 = vld [vmem:[%s1 + $0x6e0] sm:$0xff]
  %v268 = vld [vmem:[%s1 + $0x6e8] sm:$0xff]
  %v269 = vld [vmem:[%s1 + $0x6f0] sm:$0xff]
  %v270 = vld [vmem:[%s1 + $0x6f8] sm:$0xff]
  %v271 = vld [vmem:[%s1 + $0x700] sm:$0xff]
  %v272 = vld [vmem:[%s1 + $0x708] sm:$0xff]
  %v273 = vld [vmem:[%s1 + $0x710] sm:$0xff]
  %v274 = vld [vmem:[%s1 + $0x718] sm:$0xff]
  %v275 = vld [vmem:[%s1 + $0x720] sm:$0xff]
  %v276 = vld [vmem:[%s1 + $0x728] sm:$0xff]
  %v277 = vld [vmem:[%s1 + $0x730] sm:$0xff]
  %v278 = vld [vmem:[%s1 + $0x738] sm:$0xff]
  %v279 = vld [vmem:[%s1 + $0x740] sm:$0xff]
  %v280 = vld [vmem:[%s1 + $0x748] sm:$0xff]
  %v281 = vld [vmem:[%s1 + $0x750] sm:$0xff]
  %v282 = vld [vmem:[%s1 + $0x758] sm:$0xff]
  %v283 = vld [vmem:[%s1 + $0x760] sm:$0xff]
  %v284 = vld [vmem:[%s1 + $0x768] sm:$0xff]
  %v285 = vld [vmem:[%s1 + $0x770] sm:$0xff]
  %v286 = vld [vmem:[%s1 + $0x778] sm:$0xff]
  %v287 = vld [vmem:[%s1 + $0x780] sm:$0xff]
  %v288 = vld [vmem:[%s1 + $0x788] sm:$0xff]
  %v289 = vld [vmem:[%s1 + $0x790] sm:$0xff]
  %v290 = vld [vmem:[%s1 + $0x798] sm:$0xff]
  %v291 = vld [vmem:[%s1 + $0x7a0] sm:$0xff]
  %v292 = vld [vmem:[%s1 + $0x7a8] sm:$0xff]
  %v293 = vld [vmem:[%s1 + $0x7b0] sm:$0xff]
  %v294 = vld [vmem:[%s1 + $0x7b8] sm:$0xff]
  %v295 = vld [vmem:[%s1 + $0x7c0] sm:$0xff]
  %v296 = vld [vmem:[%s1 + $0x7c8] sm:$0xff]
  %v297 = vld [vmem:[%s1 + $0x7d0] sm:$0xff]
  %v298 = vld [vmem:[%s1 + $0x7d8] sm:$0xff]
  %v299 = vld [vmem:[%s1 + $0x7e0] sm:$0xff]
  %v300 = vld [vmem:[%s1 + $0x7e8] sm:$0xff]
  %v301 = vld [vmem:[%s1 + $0x7f0] sm:$0xff]
  %v302 = vld [vmem:[%s1 + $0x7f8] sm:$0xff]
  %v303 = vld [vmem:[%s1 + $0x800] sm:$0xff]
  %v304 = vld [vmem:[%s1 + $0x808] sm:$0xff]
  %v305 = vld [vmem:[%s1 + $0x810] sm:$0xff]
  %v306 = vld [vmem:[%s1 + $0x818] sm:$0xff]
  %v307 = vld [vmem:[%s1 + $0x820] sm:$0xff]
  %v308 = vld [vmem:[%s1 + $0x828] sm:$0xff]
  %v309 = vld [vmem:[%s1 + $0x830] sm:$0xff]
  %v310 = vld [vmem:[%s1 + $0x838] sm:$0xff]
  %v311 = vld [vmem:[%s1 + $0x840] sm:$0xff]
  %v312 = vld [vmem:[%s1 + $0x848] sm:$0xff]
  %v313 = vld [vmem:[%s1 + $0x850] sm:$0xff]
  %v314 = vld [vmem:[%s1 + $0x858] sm:$0xff]
  %v315 = vld [vmem:[%s1 + $0x860] sm:$0xff]
  %v316 = vld [vmem:[%s1 + $0x868] sm:$0xff]
  %v317 = vld [vmem:[%s1 + $0x870] sm:$0xff]
  %v318 = vld [vmem:[%s1 + $0x878] sm:$0xff]
  %v319 = vld [vmem:[%s1 + $0x880] sm:$0xff]
  %v320 = vld [vmem:[%s1 + $0x888] sm:$0xff]
  %v321 = vld [vmem:[%s1 + $0x890] sm:$0xff]
  %v322 = vld [vmem:[%s1 + $0x898] sm:$0xff]
  %v323 = vld [vmem:[%s1 + $0x8a0] sm:$0xff]
  %v324 = vld [vmem:[%s1 + $0x8a8] sm:$0xff]
  %v325 = vld [vmem:[%s1 + $0x8b0] sm:$0xff]
  %v326 = vld [vmem:[%s1 + $0x8b8] sm:$0xff]
  %v327 = vld [vmem:[%s1 + $0x8c0] sm:$0xff]
  %v328 = vld [vmem:[%s1 + $0x8c8] sm:$0xff]
  %v329 = vld [vmem:[%s1 + $0x8d0] sm:$0xff]
  %v330 = vld [vmem:[%s1 + $0x8d8] sm:$0xff]
  %v331 = vld [vmem:[%s1 + $0x8e0] sm:$0xff]
  %v332 = vld [vmem:[%s1 + $0x8e8] sm:$0xff]
  %v333 = vld [vmem:[%s1 + $0x8f0] sm:$0xff]
  %v334 = vld [vmem:[%s1 + $0x8f8] sm:$0xff]
  %v335 = vld [vmem:[%s1 + $0x900] sm:$0xff]
  %v336 = vld [vmem:[%s1 + $0x908] sm:$0xff]
  %v337 = vld [vmem:[%s1 + $0x910] sm:$0xff]
  %v338 = vld [vmem:[%s1 + $0x918] sm:$0xff]
  %v339 = vld [vmem:[%s1 + $0x920] sm:$0xff]
  %v340 = vld [vmem:[%s1 + $0x928] sm:$0xff]
  %v341 = vld [vmem:[%s1 + $0x930] sm:$0xff]
  %v342 = vld [vmem:[%s1 + $0x938] sm:$0xff]
  %v343 = vld [vmem:[%s1 + $0x940] sm:$0xff]
  %v344 = vld [vmem:[%s1 + $0x948] sm:$0xff]
  %v345 = vld [vmem:[%s1 + $0x950] sm:$0xff]
  %v346 = vld [vmem:[%s1 + $0x958] sm:$0xff]
  %v347 = vld [vmem:[%s1 + $0x960] sm:$0xff]
  %v348 = vld [vmem:[%s1 + $0x968] sm:$0xff]
  %v349 = vld [vmem:[%s1 + $0x970] sm:$0xff]
  %v350 = vld [vmem:[%s1 + $0x978] sm:$0xff]
  %v351 = vld [vmem:[%s1 + $0x980] sm:$0xff]
  %v352 = vld [vmem:[%s1 + $0x988] sm:$0xff]
  %v353 = vld [vmem:[%s1 + $0x990] sm:$0xff]
  %v354 = vld [vmem:[%s1 + $0x998] sm:$0xff]
  %v355 = vld [vmem:[%s1 + $0x9a0] sm:$0xff]
  %v356 = vld [vmem:[%s1 + $0x9a8] sm:$0xff]
  %v357 = vld [vmem:[%s1 + $0x9b0] sm:$0xff]
  %v358 = vld [vmem:[%s1 + $0x9b8] sm:$0xff]
  %v359 = vld [vmem:[%s1 + $0x9c0] sm:$0xff]
  %v360 = vld [vmem:[%s1 + $0x9c8] sm:$0xff]
  %v361 = vld [vmem:[%s1 + $0x9d0] sm:$0xff]
  %v362 = vld [vmem:[%s1 + $0x9d8] sm:$0xff]
  %v363 = vld [vmem:[%s1 + $0x9e0] sm:$0xff]
  %v364 = vld [vmem:[%s1 + $0x9e8] sm:$0xff]
  %v365 = vld [vmem:[%s1 + $0x9f0] sm:$0xff]
  %v366 = vld [vmem:[%s1 + $0x9f8] sm:$0xff]
  %v367 = vld [vmem:[%s1 + $0xa00] sm:$0xff]
  %v368 = vld [vmem:[%s1 + $0xa08] sm:$0xff]
  %v369 = vld [vmem:[%s1 + $0xa10] sm:$0xff]
  %v370 = vld [vmem:[%s1 + $0xa18] sm:$0xff]
  %v371 = vld [vmem:[%s1 + $0xa20] sm:$0xff]
  %v372 = vld [vmem:[%s1 + $0xa28] sm:$0xff]
  %v373 = vld [vmem:[%s1 + $0xa30] sm:$0xff]
  %v374 = vld [vmem:[%s1 + $0xa38] sm:$0xff]
  %v375 = vld [vmem:[%s1 + $0xa40] sm:$0xff]
  %v376 = vld [vmem:[%s1 + $0xa48] sm:$0xff]
  %v377 = vld [vmem:[%s1 + $0xa50] sm:$0xff]
  %v378 = vld [vmem:[%s1 + $0xa58] sm:$0xff]
  %v379 = vld [vmem:[%s1 + $0xa60] sm:$0xff]
  %v380 = vld [vmem:[%s1 + $0xa68] sm:$0xff]
  %v381 = vld [vmem:[%s1 + $0xa70] sm:$0xff]
  %v382 = vld [vmem:[%s1 + $0xa78] sm:$0xff]
  %v383 = vld [vmem:[%s1 + $0xa80] sm:$0xff]
  %v384 = vld [vmem:[%s1 + $0xa88] sm:$0xff]
  %v385 = vld [vmem:[%s1 + $0xa90] sm:$0xff]
  %v386 = vld [vmem:[%s1 + $0xa98] sm:$0xff]
  %v387 = vld [vmem:[%s1 + $0xaa0] sm:$0xff]
  %v388 = vld [vmem:[%s1 + $0xaa8] sm:$0xff]
  %v389 = vld [vmem:[%s1 + $0xab0] sm:$0xff]
  %v390 = vld [vmem:[%s1 + $0xab8] sm:$0xff]
  %v391 = vld [vmem:[%s1 + $0xac0] sm:$0xff]
  %v392 = vld [vmem:[%s1 + $0xac8] sm:$0xff]
  %v393 = vld [vmem:[%s1 + $0xad0] sm:$0xff]
  %v394 = vld [vmem:[%s1 + $0xad8] sm:$0xff]
  %v395 = vld [vmem:[%s1 + $0xae0] sm:$0xff]
  %v396 = vld [vmem:[%s1 + $0xae8] sm:$0xff]
  %v397 = vld [vmem:[%s1 + $0xaf0] sm:$0xff]
  %v398 = vld [vmem:[%s1 + $0xaf8] sm:$0xff]
  %v399 = vld [vmem:[%s1 + $0xb00] sm:$0xff]
  %v400 = vld [vmem:[%s1 + $0xb08] sm:$0xff]
  %v401 = vld [vmem:[%s1 + $0xb10] sm:$0xff]
  %v402 = vld [vmem:[%s1 + $0xb18] sm:$0xff]
  %v403 = vld [vmem:[%s1 + $0xb20] sm:$0xff]
  %v404 = vld [vmem:[%s1 + $0xb28] sm:$0xff]
  %v405 = vld [vmem:[%s1 + $0xb30] sm:$0xff]
  %v406 = vld [vmem:[%s1 + $0xb38] sm:$0xff]
  %v407 = vld [vmem:[%s1 + $0xb40] sm:$0xff]
  %v408 = vld [vmem:[%s1 + $0xb48] sm:$0xff]
  %v409 = vld [vmem:[%s1 + $0xb50] sm:$0xff]
  %v410 = vld [vmem:[%s1 + $0xb58] sm:$0xff]
  %v411 = vld [vmem:[%s1 + $0xb60] sm:$0xff]
  %v412 = vld [vmem:[%s1 + $0xb68] sm:$0xff]
  %v413 = vld [vmem:[%s1 + $0xb70] sm:$0xff]
  %v414 = vld [vmem:[%s1 + $0xb78] sm:$0xff]
  %v415 = vld [vmem:[%s1 + $0xb80] sm:$0xff]
  %v416 = vld [vmem:[%s1 + $0xb88] sm:$0xff]
  %v417 = vld [vmem:[%s1 + $0xb90] sm:$0xff]
  %v418 = vld [vmem:[%s1 + $0xb98] sm:$0xff]
  %v419 = vld [vmem:[%s1 + $0xba0] sm:$0xff]
  %v420 = vld [vmem:[%s1 + $0xba8] sm:$0xff]
  %v421 = vld [vmem:[%s1 + $0xbb0] sm:$0xff]
  %v422 = vld [vmem:[%s1 + $0xbb8] sm:$0xff]
  %v423 = vld [vmem:[%s1 + $0xbc0] sm:$0xff]
  %v424 = vld [vmem:[%s1 + $0xbc8] sm:$0xff]
  %v425 = vld [vmem:[%s1 + $0xbd0] sm:$0xff]
  %v426 = vld [vmem:[%s1 + $0xbd8] sm:$0xff]
  %v427 = vld [vmem:[%s1 + $0xbe0] sm:$0xff]
  %v428 = vld [vmem:[%s1 + $0xbe8] sm:$0xff]
  %v429 = vld [vmem:[%s1 + $0xbf0] sm:$0xff]
  %v430 = vld [vmem:[%s1 + $0xbf8] sm:$0xff]
  %v431 = vld [vmem:[%s1 + $0xc00] sm:$0xff]
  %v432 = vld [vmem:[%s1 + $0xc08] sm:$0xff]
  %v433 = vld [vmem:[%s1 + $0xc10] sm:$0xff]
  %v434 = vld [vmem:[%s1 + $0xc18] sm:$0xff]
  %v435 = vld [vmem:[%s1 + $0xc20] sm:$0xff]
  %v436 = vld [vmem:[%s1 + $0xc28] sm:$0xff]
  %v437 = vld [vmem:[%s1 + $0xc30] sm:$0xff]
  %v438 = vld [vmem:[%s1 + $0xc38] sm:$0xff]
  %v439 = vld [vmem:[%s2] sm:$0x3]
  %v441 = vlaneseq
  %v442 = vshrl.u32 %v441, 7
  %v443 = vsub.s32 0, %v442
  %v444 = vrot.slane %v439, %v443
  %v445 = vlaneseq
  %v446 = vshrl.u32 %v445, 7
  %v447 = vsub.s32 1, %v446
  %v448 = vrot.slane %v439, %v447
  %v477 = vunpack.c.l.b16 %v21
  %v478 = vunpack.c.h.b16 %v21
  %v479 = vunpack.c.l.b16 %v22
  %v480 = vunpack.c.h.b16 %v22
  %v481 = vunpack.c.l.b16 %v23
  %v482 = vunpack.c.h.b16 %v23
  %v483 = vunpack.c.l.b16 %v24
  %v484 = vunpack.c.h.b16 %v24
  %v485 = vunpack.c.l.b16 %v25
  %v486 = vunpack.c.h.b16 %v25
  %v487 = vunpack.c.l.b16 %v26
  %v488 = vunpack.c.h.b16 %v26
  %v489 = vunpack.c.l.b16 %v27
  %v490 = vunpack.c.h.b16 %v27
  %v491 = vunpack.c.l.b16 %v28
  %v492 = vunpack.c.h.b16 %v28
  %v493 = vunpack.c.l.b16 %v29
  %v494 = vunpack.c.h.b16 %v29
  %v495 = vunpack.c.l.b16 %v30
  %v496 = vunpack.c.h.b16 %v30
  %v497 = vunpack.c.l.b16 %v31
  %v498 = vunpack.c.h.b16 %v31
  %v499 = vunpack.c.l.b16 %v32
  %v500 = vunpack.c.h.b16 %v32
  %v501 = vunpack.c.l.b16 %v33
  %v502 = vunpack.c.l.b16 %v34
  %v503 = vunpack.c.h.b16 %v34
  %v504 = vunpack.c.l.b16 %v35
  %v505 = vunpack.c.h.b16 %v35
  %v506 = vunpack.c.l.b16 %v36
  %v507 = vunpack.c.h.b16 %v36
  %v508 = vunpack.c.l.b16 %v37
  %v509 = vunpack.c.h.b16 %v37
  %v510 = vunpack.c.l.b16 %v38
  %v511 = vunpack.c.h.b16 %v38
  %v512 = vunpack.c.l.b16 %v39
  %v513 = vunpack.c.h.b16 %v39
  %v514 = vunpack.c.l.b16 %v40
  %v515 = vunpack.c.h.b16 %v40
  %v516 = vunpack.c.l.b16 %v41
  %v517 = vunpack.c.h.b16 %v41
  %v518 = vunpack.c.l.b16 %v42
  %v519 = vunpack.c.h.b16 %v42
  %v520 = vunpack.c.l.b16 %v43
  %v521 = vunpack.c.h.b16 %v43
  %v522 = vunpack.c.l.b16 %v44
  %v523 = vunpack.c.h.b16 %v44
  %v524 = vunpack.c.l.b16 %v45
  %v525 = vunpack.c.h.b16 %v45
  %v526 = vunpack.c.l.b16 %v46
  %v527 = vpack.c.b16 %v502, %v477
  %v528 = vpack.c.b16 %v503, %v478
  %v529 = vpack.c.b16 %v504, %v479
  %v530 = vpack.c.b16 %v505, %v480
  %v531 = vpack.c.b16 %v506, %v481
  %v532 = vpack.c.b16 %v507, %v482
  %v533 = vpack.c.b16 %v508, %v483
  %v534 = vpack.c.b16 %v509, %v484
  %v535 = vpack.c.b16 %v510, %v485
  %v536 = vpack.c.b16 %v511, %v486
  %v537 = vpack.c.b16 %v512, %v487
  %v538 = vpack.c.b16 %v513, %v488
  %v539 = vpack.c.b16 %v514, %v489
  %v540 = vpack.c.b16 %v515, %v490
  %v541 = vpack.c.b16 %v516, %v491
  %v542 = vpack.c.b16 %v517, %v492
  %v543 = vpack.c.b16 %v518, %v493
  %v544 = vpack.c.b16 %v519, %v494
  %v545 = vpack.c.b16 %v520, %v495
  %v546 = vpack.c.b16 %v521, %v496
  %v547 = vpack.c.b16 %v522, %v497
  %v548 = vpack.c.b16 %v523, %v498
  %v549 = vpack.c.b16 %v524, %v499
  %v550 = vpack.c.b16 %v525, %v500
  %v551 = vpack.c.b16 %v526, %v501
  %v968 = vunpack.c.l.b16 %v47
  %v969 = vunpack.c.h.b16 %v47
  %v970 = vunpack.c.l.b16 %v48
  %v971 = vunpack.c.h.b16 %v48
  %v972 = vunpack.c.l.b16 %v49
  %v973 = vunpack.c.h.b16 %v49
  %v974 = vunpack.c.l.b16 %v50
  %v975 = vunpack.c.h.b16 %v50
  %v976 = vunpack.c.l.b16 %v51
  %v977 = vunpack.c.h.b16 %v51
  %v978 = vunpack.c.l.b16 %v52
  %v979 = vunpack.c.h.b16 %v52
  %v980 = vunpack.c.l.b16 %v53
  %v981 = vunpack.c.h.b16 %v53
  %v982 = vunpack.c.l.b16 %v54
  %v983 = vunpack.c.h.b16 %v54
  %v984 = vunpack.c.l.b16 %v55
  %v985 = vunpack.c.h.b16 %v55
  %v986 = vunpack.c.l.b16 %v56
  %v987 = vunpack.c.h.b16 %v56
  %v988 = vunpack.c.l.b16 %v57
  %v989 = vunpack.c.h.b16 %v57
  %v990 = vunpack.c.l.b16 %v58
  %v991 = vunpack.c.h.b16 %v58
  %v992 = vunpack.c.l.b16 %v59
  %v993 = vunpack.c.h.b16 %v59
  %v994 = vunpack.c.l.b16 %v60
  %v995 = vunpack.c.h.b16 %v60
  %v996 = vunpack.c.l.b16 %v61
  %v997 = vunpack.c.h.b16 %v61
  %v998 = vunpack.c.l.b16 %v62
  %v999 = vunpack.c.h.b16 %v62
  %v1000 = vunpack.c.l.b16 %v63
  %v1001 = vunpack.c.h.b16 %v63
  %v1002 = vunpack.c.l.b16 %v64
  %v1003 = vunpack.c.h.b16 %v64
  %v1004 = vunpack.c.l.b16 %v65
  %v1005 = vunpack.c.h.b16 %v65
  %v1006 = vunpack.c.l.b16 %v66
  %v1007 = vunpack.c.h.b16 %v66
  %v1008 = vunpack.c.l.b16 %v67
  %v1009 = vunpack.c.h.b16 %v67
  %v1010 = vunpack.c.l.b16 %v68
  %v1011 = vunpack.c.h.b16 %v68
  %v1012 = vunpack.c.l.b16 %v69
  %v1013 = vunpack.c.h.b16 %v69
  %v1014 = vunpack.c.l.b16 %v70
  %v1015 = vunpack.c.h.b16 %v70
  %v1016 = vunpack.c.l.b16 %v71
  %v1017 = vunpack.c.h.b16 %v71
  %v1018 = vunpack.c.l.b16 %v72
  %v1019 = vunpack.c.h.b16 %v72
  %v1020 = vunpack.c.l.b16 %v73
  %v1021 = vunpack.c.h.b16 %v73
  %v1022 = vunpack.c.l.b16 %v74
  %v1023 = vunpack.c.h.b16 %v74
  %v1024 = vunpack.c.l.b16 %v75
  %v1025 = vunpack.c.h.b16 %v75
  %v1026 = vunpack.c.l.b16 %v76
  %v1027 = vunpack.c.h.b16 %v76
  %v1028 = vunpack.c.l.b16 %v77
  %v1029 = vunpack.c.h.b16 %v77
  %v1030 = vunpack.c.l.b16 %v78
  %v1031 = vunpack.c.h.b16 %v78
  %v1032 = vunpack.c.l.b16 %v79
  %v1033 = vunpack.c.h.b16 %v79
  %v1034 = vunpack.c.l.b16 %v80
  %v1035 = vunpack.c.h.b16 %v80
  %v1036 = vunpack.c.l.b16 %v81
  %v1037 = vunpack.c.h.b16 %v81
  %v1038 = vunpack.c.l.b16 %v82
  %v1039 = vunpack.c.h.b16 %v82
  %v1040 = vunpack.c.l.b16 %v83
  %v1041 = vunpack.c.h.b16 %v83
  %v1042 = vunpack.c.l.b16 %v84
  %v1043 = vunpack.c.h.b16 %v84
  %v1044 = vunpack.c.l.b16 %v85
  %v1045 = vunpack.c.h.b16 %v85
  %v1046 = vunpack.c.l.b16 %v86
  %v1047 = vunpack.c.h.b16 %v86
  %v1048 = vunpack.c.l.b16 %v87
  %v1049 = vunpack.c.h.b16 %v87
  %v1050 = vunpack.c.l.b16 %v88
  %v1051 = vunpack.c.h.b16 %v88
  %v1052 = vunpack.c.l.b16 %v89
  %v1053 = vunpack.c.h.b16 %v89
  %v1054 = vunpack.c.l.b16 %v90
  %v1055 = vunpack.c.h.b16 %v90
  %v1056 = vunpack.c.l.b16 %v91
  %v1057 = vunpack.c.h.b16 %v91
  %v1058 = vunpack.c.l.b16 %v92
  %v1059 = vunpack.c.h.b16 %v92
  %v1060 = vunpack.c.l.b16 %v93
  %v1061 = vunpack.c.h.b16 %v93
  %v1062 = vunpack.c.l.b16 %v94
  %v1063 = vunpack.c.h.b16 %v94
  %v1064 = vunpack.c.l.b16 %v95
  %v1065 = vunpack.c.h.b16 %v95
  %v1066 = vunpack.c.l.b16 %v96
  %v1067 = vunpack.c.h.b16 %v96
  %v1068 = vunpack.c.l.b16 %v97
  %v1069 = vunpack.c.h.b16 %v97
  %v1070 = vunpack.c.l.b16 %v98
  %v1071 = vunpack.c.h.b16 %v98
  %v1072 = vunpack.c.l.b16 %v99
  %v1073 = vunpack.c.h.b16 %v99
  %v1074 = vunpack.c.l.b16 %v100
  %v1075 = vunpack.c.h.b16 %v100
  %v1076 = vunpack.c.l.b16 %v101
  %v1077 = vunpack.c.h.b16 %v101
  %v1078 = vunpack.c.l.b16 %v102
  %v1079 = vunpack.c.h.b16 %v102
  %v1080 = vunpack.c.l.b16 %v103
  %v1081 = vunpack.c.h.b16 %v103
  %v1082 = vunpack.c.l.b16 %v104
  %v1083 = vunpack.c.h.b16 %v104
  %v1084 = vunpack.c.l.b16 %v105
  %v1085 = vunpack.c.h.b16 %v105
  %v1086 = vunpack.c.l.b16 %v106
  %v1087 = vunpack.c.h.b16 %v106
  %v1088 = vunpack.c.l.b16 %v107
  %v1089 = vunpack.c.h.b16 %v107
  %v1090 = vunpack.c.l.b16 %v108
  %v1091 = vunpack.c.h.b16 %v108
  %v1092 = vunpack.c.l.b16 %v109
  %v1093 = vunpack.c.h.b16 %v109
  %v1094 = vunpack.c.l.b16 %v110
  %v1095 = vunpack.c.h.b16 %v110
  %v1096 = vunpack.c.l.b16 %v111
  %v1097 = vunpack.c.h.b16 %v111
  %v1098 = vunpack.c.l.b16 %v112
  %v1099 = vunpack.c.h.b16 %v112
  %v1100 = vunpack.c.l.b16 %v113
  %v1101 = vunpack.c.h.b16 %v113
  %v1102 = vunpack.c.l.b16 %v114
  %v1103 = vunpack.c.h.b16 %v114
  %v1104 = vunpack.c.l.b16 %v115
  %v1105 = vunpack.c.h.b16 %v115
  %v1106 = vunpack.c.l.b16 %v116
  %v1107 = vunpack.c.h.b16 %v116
  %v1108 = vunpack.c.l.b16 %v117
  %v1109 = vunpack.c.h.b16 %v117
  %v1110 = vunpack.c.l.b16 %v118
  %v1111 = vunpack.c.h.b16 %v118
  %v1112 = vunpack.c.l.b16 %v119
  %v1113 = vunpack.c.h.b16 %v119
  %v1114 = vunpack.c.l.b16 %v120
  %v1115 = vunpack.c.h.b16 %v120
  %v1116 = vunpack.c.l.b16 %v121
  %v1117 = vunpack.c.h.b16 %v121
  %v1118 = vunpack.c.l.b16 %v122
  %v1119 = vunpack.c.h.b16 %v122
  %v1120 = vunpack.c.l.b16 %v123
  %v1121 = vunpack.c.h.b16 %v123
  %v1122 = vunpack.c.l.b16 %v124
  %v1123 = vunpack.c.h.b16 %v124
  %v1124 = vunpack.c.l.b16 %v125
  %v1125 = vunpack.c.h.b16 %v125
  %v1126 = vunpack.c.l.b16 %v126
  %v1127 = vunpack.c.h.b16 %v126
  %v1128 = vunpack.c.l.b16 %v127
  %v1129 = vunpack.c.h.b16 %v127
  %v1130 = vunpack.c.l.b16 %v128
  %v1131 = vunpack.c.h.b16 %v128
  %v1132 = vunpack.c.l.b16 %v129
  %v1133 = vunpack.c.h.b16 %v129
  %v1134 = vunpack.c.l.b16 %v130
  %v1135 = vunpack.c.h.b16 %v130
  %v1136 = vunpack.c.l.b16 %v131
  %v1137 = vunpack.c.h.b16 %v131
  %v1138 = vunpack.c.l.b16 %v132
  %v1139 = vunpack.c.h.b16 %v132
  %v1140 = vunpack.c.l.b16 %v133
  %v1141 = vunpack.c.h.b16 %v133
  %v1142 = vunpack.c.l.b16 %v134
  %v1143 = vunpack.c.h.b16 %v134
  %v1144 = vunpack.c.l.b16 %v135
  %v1145 = vunpack.c.h.b16 %v135
  %v1146 = vunpack.c.l.b16 %v136
  %v1147 = vunpack.c.h.b16 %v136
  %v1148 = vunpack.c.l.b16 %v137
  %v1149 = vunpack.c.h.b16 %v137
  %v1150 = vunpack.c.l.b16 %v138
  %v1151 = vunpack.c.h.b16 %v138
  %v1152 = vunpack.c.l.b16 %v139
  %v1153 = vunpack.c.h.b16 %v139
  %v1154 = vunpack.c.l.b16 %v140
  %v1155 = vunpack.c.h.b16 %v140
  %v1156 = vunpack.c.l.b16 %v141
  %v1157 = vunpack.c.h.b16 %v141
  %v1158 = vunpack.c.l.b16 %v142
  %v1159 = vunpack.c.h.b16 %v142
  %v1160 = vunpack.c.l.b16 %v143
  %v1161 = vunpack.c.h.b16 %v143
  %v1162 = vunpack.c.l.b16 %v144
  %v1163 = vunpack.c.h.b16 %v144
  %v1164 = vunpack.c.l.b16 %v145
  %v1165 = vunpack.c.h.b16 %v145
  %v1166 = vunpack.c.l.b16 %v146
  %v1167 = vunpack.c.h.b16 %v146
  %v1168 = vunpack.c.l.b16 %v147
  %v1169 = vunpack.c.h.b16 %v147
  %v1170 = vunpack.c.l.b16 %v148
  %v1171 = vunpack.c.h.b16 %v148
  %v1172 = vunpack.c.l.b16 %v149
  %v1173 = vunpack.c.h.b16 %v149
  %v1174 = vunpack.c.l.b16 %v150
  %v1175 = vunpack.c.h.b16 %v150
  %v1176 = vunpack.c.l.b16 %v151
  %v1177 = vunpack.c.h.b16 %v151
  %v1178 = vunpack.c.l.b16 %v152
  %v1179 = vunpack.c.h.b16 %v152
  %v1180 = vunpack.c.l.b16 %v153
  %v1181 = vunpack.c.h.b16 %v153
  %v1182 = vunpack.c.l.b16 %v154
  %v1183 = vunpack.c.h.b16 %v154
  %v1184 = vunpack.c.l.b16 %v155
  %v1185 = vunpack.c.h.b16 %v155
  %v1186 = vunpack.c.l.b16 %v156
  %v1187 = vunpack.c.h.b16 %v156
  %v1188 = vunpack.c.l.b16 %v157
  %v1189 = vunpack.c.h.b16 %v157
  %v1190 = vunpack.c.l.b16 %v158
  %v1191 = vunpack.c.h.b16 %v158
  %v1192 = vunpack.c.l.b16 %v159
  %v1193 = vunpack.c.h.b16 %v159
  %v1194 = vunpack.c.l.b16 %v160
  %v1195 = vunpack.c.h.b16 %v160
  %v1196 = vunpack.c.l.b16 %v161
  %v1197 = vunpack.c.h.b16 %v161
  %v1198 = vunpack.c.l.b16 %v162
  %v1199 = vunpack.c.h.b16 %v162
  %v1200 = vunpack.c.l.b16 %v163
  %v1201 = vunpack.c.h.b16 %v163
  %v1202 = vunpack.c.l.b16 %v164
  %v1203 = vunpack.c.h.b16 %v164
  %v1204 = vunpack.c.l.b16 %v165
  %v1205 = vunpack.c.h.b16 %v165
  %v1206 = vunpack.c.l.b16 %v166
  %v1207 = vunpack.c.h.b16 %v166
  %v1208 = vunpack.c.l.b16 %v167
  %v1209 = vunpack.c.h.b16 %v167
  %v1210 = vunpack.c.l.b16 %v168
  %v1211 = vunpack.c.h.b16 %v168
  %v1212 = vunpack.c.l.b16 %v169
  %v1213 = vunpack.c.h.b16 %v169
  %v1214 = vunpack.c.l.b16 %v170
  %v1215 = vunpack.c.h.b16 %v170
  %v1216 = vunpack.c.l.b16 %v171
  %v1217 = vunpack.c.h.b16 %v171
  %v1218 = vunpack.c.l.b16 %v172
  %v1219 = vunpack.c.h.b16 %v172
  %v1220 = vunpack.c.l.b16 %v173
  %v1221 = vunpack.c.h.b16 %v173
  %v1222 = vunpack.c.l.b16 %v174
  %v1223 = vunpack.c.h.b16 %v174
  %v1224 = vunpack.c.l.b16 %v175
  %v1225 = vunpack.c.h.b16 %v175
  %v1226 = vunpack.c.l.b16 %v176
  %v1227 = vunpack.c.h.b16 %v176
  %v1228 = vunpack.c.l.b16 %v177
  %v1229 = vunpack.c.h.b16 %v177
  %v1230 = vunpack.c.l.b16 %v178
  %v1231 = vunpack.c.h.b16 %v178
  %v1232 = vunpack.c.l.b16 %v179
  %v1233 = vunpack.c.h.b16 %v179
  %v1234 = vunpack.c.l.b16 %v180
  %v1235 = vunpack.c.h.b16 %v180
  %v1236 = vunpack.c.l.b16 %v181
  %v1237 = vunpack.c.h.b16 %v181
  %v1238 = vunpack.c.l.b16 %v182
  %v1239 = vunpack.c.h.b16 %v182
  %v1240 = vunpack.c.l.b16 %v183
  %v1241 = vunpack.c.h.b16 %v183
  %v1242 = vunpack.c.l.b16 %v184
  %v1243 = vunpack.c.h.b16 %v184
  %v1244 = vunpack.c.l.b16 %v185
  %v1245 = vunpack.c.h.b16 %v185
  %v1246 = vunpack.c.l.b16 %v186
  %v1247 = vunpack.c.h.b16 %v186
  %v1248 = vunpack.c.l.b16 %v187
  %v1249 = vunpack.c.h.b16 %v187
  %v1250 = vunpack.c.l.b16 %v188
  %v1251 = vunpack.c.h.b16 %v188
  %v1252 = vunpack.c.l.b16 %v189
  %v1253 = vunpack.c.h.b16 %v189
  %v1254 = vunpack.c.l.b16 %v190
  %v1255 = vunpack.c.h.b16 %v190
  %v1256 = vunpack.c.l.b16 %v191
  %v1257 = vunpack.c.h.b16 %v191
  %v1258 = vunpack.c.l.b16 %v192
  %v1259 = vunpack.c.h.b16 %v192
  %v1260 = vunpack.c.l.b16 %v193
  %v1261 = vunpack.c.h.b16 %v193
  %v1262 = vunpack.c.l.b16 %v194
  %v1263 = vunpack.c.h.b16 %v194
  %v1264 = vunpack.c.l.b16 %v195
  %v1265 = vunpack.c.h.b16 %v195
  %v1266 = vunpack.c.l.b16 %v196
  %v1267 = vunpack.c.h.b16 %v196
  %v1268 = vunpack.c.l.b16 %v197
  %v1269 = vunpack.c.h.b16 %v197
  %v1270 = vunpack.c.l.b16 %v198
  %v1271 = vunpack.c.h.b16 %v198
  %v1272 = vunpack.c.l.b16 %v199
  %v1273 = vunpack.c.h.b16 %v199
  %v1274 = vunpack.c.l.b16 %v200
  %v1275 = vunpack.c.h.b16 %v200
  %v1276 = vunpack.c.l.b16 %v201
  %v1277 = vunpack.c.h.b16 %v201
  %v1278 = vunpack.c.l.b16 %v202
  %v1279 = vunpack.c.h.b16 %v202
  %v1280 = vunpack.c.l.b16 %v203
  %v1281 = vunpack.c.h.b16 %v203
  %v1282 = vunpack.c.l.b16 %v204
  %v1283 = vunpack.c.h.b16 %v204
  %v1284 = vunpack.c.l.b16 %v205
  %v1285 = vunpack.c.h.b16 %v205
  %v1286 = vunpack.c.l.b16 %v206
  %v1287 = vunpack.c.h.b16 %v206
  %v1288 = vunpack.c.l.b16 %v207
  %v1289 = vunpack.c.h.b16 %v207
  %v1290 = vunpack.c.l.b16 %v208
  %v1291 = vunpack.c.h.b16 %v208
  %v1292 = vunpack.c.l.b16 %v209
  %v1293 = vunpack.c.h.b16 %v209
  %v1294 = vunpack.c.l.b16 %v210
  %v1295 = vunpack.c.h.b16 %v210
  %v1296 = vunpack.c.l.b16 %v211
  %v1297 = vunpack.c.h.b16 %v211
  %v1298 = vunpack.c.l.b16 %v212
  %v1299 = vunpack.c.h.b16 %v212
  %v1300 = vunpack.c.l.b16 %v213
  %v1301 = vunpack.c.h.b16 %v213
  %v1302 = vunpack.c.l.b16 %v214
  %v1303 = vunpack.c.h.b16 %v214
  %v1304 = vunpack.c.l.b16 %v215
  %v1305 = vunpack.c.h.b16 %v215
  %v1306 = vunpack.c.l.b16 %v216
  %v1307 = vunpack.c.h.b16 %v216
  %v1308 = vunpack.c.l.b16 %v217
  %v1309 = vunpack.c.h.b16 %v217
  %v1310 = vunpack.c.l.b16 %v218
  %v1311 = vunpack.c.h.b16 %v218
  %v1312 = vunpack.c.l.b16 %v219
  %v1313 = vunpack.c.h.b16 %v219
  %v1314 = vunpack.c.l.b16 %v220
  %v1315 = vunpack.c.h.b16 %v220
  %v1316 = vunpack.c.l.b16 %v221
  %v1317 = vunpack.c.h.b16 %v221
  %v1318 = vunpack.c.l.b16 %v222
  %v1319 = vunpack.c.h.b16 %v222
  %v1320 = vunpack.c.l.b16 %v223
  %v1321 = vunpack.c.h.b16 %v223
  %v1322 = vunpack.c.l.b16 %v224
  %v1323 = vunpack.c.h.b16 %v224
  %v1324 = vunpack.c.l.b16 %v225
  %v1325 = vunpack.c.h.b16 %v225
  %v1326 = vunpack.c.l.b16 %v226
  %v1327 = vunpack.c.h.b16 %v226
  %v1328 = vunpack.c.l.b16 %v227
  %v1329 = vunpack.c.h.b16 %v227
  %v1330 = vunpack.c.l.b16 %v228
  %v1331 = vunpack.c.h.b16 %v228
  %v1332 = vunpack.c.l.b16 %v229
  %v1333 = vunpack.c.h.b16 %v229
  %v1334 = vunpack.c.l.b16 %v230
  %v1335 = vunpack.c.h.b16 %v230
  %v1336 = vunpack.c.l.b16 %v231
  %v1337 = vunpack.c.h.b16 %v231
  %v1338 = vunpack.c.l.b16 %v232
  %v1339 = vunpack.c.h.b16 %v232
  %v1340 = vunpack.c.l.b16 %v233
  %v1341 = vunpack.c.h.b16 %v233
  %v1342 = vunpack.c.l.b16 %v234
  %v1343 = vunpack.c.h.b16 %v234
  %v1344 = vunpack.c.l.b16 %v235
  %v1345 = vunpack.c.h.b16 %v235
  %v1346 = vunpack.c.l.b16 %v236
  %v1347 = vunpack.c.h.b16 %v236
  %v1348 = vunpack.c.l.b16 %v237
  %v1349 = vunpack.c.h.b16 %v237
  %v1350 = vunpack.c.l.b16 %v238
  %v1351 = vunpack.c.h.b16 %v238
  %v1352 = vunpack.c.l.b16 %v239
  %v1353 = vunpack.c.h.b16 %v239
  %v1354 = vunpack.c.l.b16 %v240
  %v1355 = vunpack.c.h.b16 %v240
  %v1356 = vunpack.c.l.b16 %v241
  %v1357 = vunpack.c.h.b16 %v241
  %v1358 = vunpack.c.l.b16 %v242
  %v1359 = vunpack.c.h.b16 %v242
  %v1360 = vunpack.c.l.b16 %v243
  %v1361 = vunpack.c.h.b16 %v243
  %v1362 = vunpack.c.l.b16 %v244
  %v1363 = vunpack.c.h.b16 %v244
  %v1364 = vunpack.c.l.b16 %v245
  %v1365 = vunpack.c.h.b16 %v245
  %v1366 = vunpack.c.l.b16 %v246
  %v1367 = vunpack.c.h.b16 %v246
  %v1368 = vunpack.c.l.b16 %v247
  %v1369 = vunpack.c.h.b16 %v247
  %v1370 = vunpack.c.l.b16 %v248
  %v1371 = vunpack.c.h.b16 %v248
  %v1372 = vunpack.c.l.b16 %v249
  %v1373 = vunpack.c.h.b16 %v249
  %v1374 = vunpack.c.l.b16 %v250
  %v1375 = vunpack.c.h.b16 %v250
  %v1376 = vunpack.c.l.b16 %v251
  %v1377 = vunpack.c.h.b16 %v251
  %v1378 = vunpack.c.l.b16 %v252
  %v1379 = vunpack.c.h.b16 %v252
  %v1380 = vunpack.c.l.b16 %v253
  %v1381 = vunpack.c.h.b16 %v253
  %v1382 = vunpack.c.l.b16 %v254
  %v1383 = vunpack.c.h.b16 %v254
  %v1384 = vunpack.c.l.b16 %v255
  %v1385 = vunpack.c.h.b16 %v255
  %v1386 = vunpack.c.l.b16 %v256
  %v1387 = vunpack.c.h.b16 %v256
  %v1388 = vunpack.c.l.b16 %v257
  %v1389 = vunpack.c.h.b16 %v257
  %v1390 = vunpack.c.l.b16 %v258
  %v1391 = vunpack.c.h.b16 %v258
  %v1392 = vunpack.c.l.b16 %v259
  %v1393 = vunpack.c.h.b16 %v259
  %v1394 = vunpack.c.l.b16 %v260
  %v1395 = vunpack.c.h.b16 %v260
  %v1396 = vunpack.c.l.b16 %v261
  %v1397 = vunpack.c.h.b16 %v261
  %v1398 = vunpack.c.l.b16 %v262
  %v1399 = vunpack.c.h.b16 %v262
  %v1400 = vunpack.c.l.b16 %v263
  %v1401 = vunpack.c.h.b16 %v263
  %v1402 = vunpack.c.l.b16 %v264
  %v1403 = vunpack.c.h.b16 %v264
  %v1404 = vunpack.c.l.b16 %v265
  %v1405 = vunpack.c.h.b16 %v265
  %v1406 = vunpack.c.l.b16 %v266
  %v1407 = vunpack.c.h.b16 %v266
  %v1408 = vunpack.c.l.b16 %v267
  %v1409 = vunpack.c.h.b16 %v267
  %v1410 = vunpack.c.l.b16 %v268
  %v1411 = vunpack.c.h.b16 %v268
  %v1412 = vunpack.c.l.b16 %v269
  %v1413 = vunpack.c.h.b16 %v269
  %v1414 = vunpack.c.l.b16 %v270
  %v1415 = vunpack.c.h.b16 %v270
  %v1416 = vunpack.c.l.b16 %v271
  %v1417 = vunpack.c.h.b16 %v271
  %v1418 = vunpack.c.l.b16 %v272
  %v1419 = vunpack.c.h.b16 %v272
  %v1420 = vunpack.c.l.b16 %v273
  %v1421 = vunpack.c.h.b16 %v273
  %v1422 = vunpack.c.l.b16 %v274
  %v1423 = vunpack.c.h.b16 %v274
  %v1424 = vunpack.c.l.b16 %v275
  %v1425 = vunpack.c.h.b16 %v275
  %v1426 = vunpack.c.l.b16 %v276
  %v1427 = vunpack.c.h.b16 %v276
  %v1428 = vunpack.c.l.b16 %v277
  %v1429 = vunpack.c.h.b16 %v277
  %v1430 = vunpack.c.l.b16 %v278
  %v1431 = vunpack.c.h.b16 %v278
  %v1432 = vunpack.c.l.b16 %v279
  %v1433 = vunpack.c.h.b16 %v279
  %v1434 = vunpack.c.l.b16 %v280
  %v1435 = vunpack.c.h.b16 %v280
  %v1436 = vunpack.c.l.b16 %v281
  %v1437 = vunpack.c.h.b16 %v281
  %v1438 = vunpack.c.l.b16 %v282
  %v1439 = vunpack.c.h.b16 %v282
  %v1440 = vunpack.c.l.b16 %v283
  %v1441 = vunpack.c.h.b16 %v283
  %v1442 = vunpack.c.l.b16 %v284
  %v1443 = vunpack.c.h.b16 %v284
  %v1444 = vunpack.c.l.b16 %v285
  %v1445 = vunpack.c.h.b16 %v285
  %v1446 = vunpack.c.l.b16 %v286
  %v1447 = vunpack.c.h.b16 %v286
  %v1448 = vunpack.c.l.b16 %v287
  %v1449 = vunpack.c.h.b16 %v287
  %v1450 = vunpack.c.l.b16 %v288
  %v1451 = vunpack.c.h.b16 %v288
  %v1452 = vunpack.c.l.b16 %v289
  %v1453 = vunpack.c.h.b16 %v289
  %v1454 = vunpack.c.l.b16 %v290
  %v1455 = vunpack.c.h.b16 %v290
  %v1456 = vunpack.c.l.b16 %v291
  %v1457 = vunpack.c.h.b16 %v291
  %v1458 = vunpack.c.l.b16 %v292
  %v1459 = vunpack.c.h.b16 %v292
  %v1460 = vunpack.c.l.b16 %v293
  %v1461 = vunpack.c.h.b16 %v293
  %v1462 = vunpack.c.l.b16 %v294
  %v1463 = vunpack.c.h.b16 %v294
  %v1464 = vunpack.c.l.b16 %v295
  %v1465 = vunpack.c.h.b16 %v295
  %v1466 = vunpack.c.l.b16 %v296
  %v1467 = vunpack.c.h.b16 %v296
  %v1468 = vunpack.c.l.b16 %v297
  %v1469 = vunpack.c.h.b16 %v297
  %v1470 = vunpack.c.l.b16 %v298
  %v1471 = vunpack.c.h.b16 %v298
  %v1472 = vunpack.c.l.b16 %v299
  %v1473 = vunpack.c.h.b16 %v299
  %v1474 = vunpack.c.l.b16 %v300
  %v1475 = vunpack.c.h.b16 %v300
  %v1476 = vunpack.c.l.b16 %v301
  %v1477 = vunpack.c.h.b16 %v301
  %v1478 = vunpack.c.l.b16 %v302
  %v1479 = vunpack.c.h.b16 %v302
  %v1480 = vunpack.c.l.b16 %v303
  %v1481 = vunpack.c.h.b16 %v303
  %v1482 = vunpack.c.l.b16 %v304
  %v1483 = vunpack.c.h.b16 %v304
  %v1484 = vunpack.c.l.b16 %v305
  %v1485 = vunpack.c.h.b16 %v305
  %v1486 = vunpack.c.l.b16 %v306
  %v1487 = vunpack.c.h.b16 %v306
  %v1488 = vunpack.c.l.b16 %v307
  %v1489 = vunpack.c.h.b16 %v307
  %v1490 = vunpack.c.l.b16 %v308
  %v1491 = vunpack.c.h.b16 %v308
  %v1492 = vunpack.c.l.b16 %v309
  %v1493 = vunpack.c.h.b16 %v309
  %v1494 = vunpack.c.l.b16 %v310
  %v1495 = vunpack.c.h.b16 %v310
  %v1496 = vunpack.c.l.b16 %v311
  %v1497 = vunpack.c.h.b16 %v311
  %v1498 = vunpack.c.l.b16 %v312
  %v1499 = vunpack.c.h.b16 %v312
  %v1500 = vunpack.c.l.b16 %v313
  %v1501 = vunpack.c.h.b16 %v313
  %v1502 = vunpack.c.l.b16 %v314
  %v1503 = vunpack.c.h.b16 %v314
  %v1504 = vunpack.c.l.b16 %v315
  %v1505 = vunpack.c.h.b16 %v315
  %v1506 = vunpack.c.l.b16 %v316
  %v1507 = vunpack.c.h.b16 %v316
  %v1508 = vunpack.c.l.b16 %v317
  %v1509 = vunpack.c.h.b16 %v317
  %v1510 = vunpack.c.l.b16 %v318
  %v1511 = vunpack.c.h.b16 %v318
  %v1512 = vunpack.c.l.b16 %v319
  %v1513 = vunpack.c.h.b16 %v319
  %v1514 = vunpack.c.l.b16 %v320
  %v1515 = vunpack.c.h.b16 %v320
  %v1516 = vunpack.c.l.b16 %v321
  %v1517 = vunpack.c.h.b16 %v321
  %v1518 = vunpack.c.l.b16 %v322
  %v1519 = vunpack.c.h.b16 %v322
  %v1520 = vunpack.c.l.b16 %v323
  %v1521 = vunpack.c.h.b16 %v323
  %v1522 = vunpack.c.l.b16 %v324
  %v1523 = vunpack.c.h.b16 %v324
  %v1524 = vunpack.c.l.b16 %v325
  %v1525 = vunpack.c.h.b16 %v325
  %v1526 = vunpack.c.l.b16 %v326
  %v1527 = vunpack.c.h.b16 %v326
  %v1528 = vunpack.c.l.b16 %v327
  %v1529 = vunpack.c.h.b16 %v327
  %v1530 = vunpack.c.l.b16 %v328
  %v1531 = vunpack.c.h.b16 %v328
  %v1532 = vunpack.c.l.b16 %v329
  %v1533 = vunpack.c.h.b16 %v329
  %v1534 = vunpack.c.l.b16 %v330
  %v1535 = vunpack.c.h.b16 %v330
  %v1536 = vunpack.c.l.b16 %v331
  %v1537 = vunpack.c.h.b16 %v331
  %v1538 = vunpack.c.l.b16 %v332
  %v1539 = vunpack.c.h.b16 %v332
  %v1540 = vunpack.c.l.b16 %v333
  %v1541 = vunpack.c.h.b16 %v333
  %v1542 = vunpack.c.l.b16 %v334
  %v1543 = vunpack.c.h.b16 %v334
  %v1544 = vunpack.c.l.b16 %v335
  %v1545 = vunpack.c.h.b16 %v335
  %v1546 = vunpack.c.l.b16 %v336
  %v1547 = vunpack.c.h.b16 %v336
  %v1548 = vunpack.c.l.b16 %v337
  %v1549 = vunpack.c.h.b16 %v337
  %v1550 = vunpack.c.l.b16 %v338
  %v1551 = vunpack.c.h.b16 %v338
  %v1552 = vunpack.c.l.b16 %v339
  %v1553 = vunpack.c.h.b16 %v339
  %v1554 = vunpack.c.l.b16 %v340
  %v1555 = vunpack.c.h.b16 %v340
  %v1556 = vunpack.c.l.b16 %v341
  %v1557 = vunpack.c.h.b16 %v341
  %v1558 = vunpack.c.l.b16 %v342
  %v1559 = vunpack.c.h.b16 %v342
  %v1560 = vunpack.c.l.b16 %v343
  %v1561 = vunpack.c.h.b16 %v343
  %v1562 = vunpack.c.l.b16 %v344
  %v1563 = vunpack.c.h.b16 %v344
  %v1564 = vunpack.c.l.b16 %v345
  %v1565 = vunpack.c.h.b16 %v345
  %v1566 = vunpack.c.l.b16 %v346
  %v1567 = vunpack.c.h.b16 %v346
  %v1568 = vunpack.c.l.b16 %v347
  %v1569 = vunpack.c.h.b16 %v347
  %v1570 = vunpack.c.l.b16 %v348
  %v1571 = vunpack.c.h.b16 %v348
  %v1572 = vunpack.c.l.b16 %v349
  %v1573 = vunpack.c.h.b16 %v349
  %v1574 = vunpack.c.l.b16 %v350
  %v1575 = vunpack.c.h.b16 %v350
  %v1576 = vunpack.c.l.b16 %v351
  %v1577 = vunpack.c.h.b16 %v351
  %v1578 = vunpack.c.l.b16 %v352
  %v1579 = vunpack.c.h.b16 %v352
  %v1580 = vunpack.c.l.b16 %v353
  %v1581 = vunpack.c.h.b16 %v353
  %v1582 = vunpack.c.l.b16 %v354
  %v1583 = vunpack.c.h.b16 %v354
  %v1584 = vunpack.c.l.b16 %v355
  %v1585 = vunpack.c.h.b16 %v355
  %v1586 = vunpack.c.l.b16 %v356
  %v1587 = vunpack.c.h.b16 %v356
  %v1588 = vunpack.c.l.b16 %v357
  %v1589 = vunpack.c.h.b16 %v357
  %v1590 = vunpack.c.l.b16 %v358
  %v1591 = vunpack.c.h.b16 %v358
  %v1592 = vunpack.c.l.b16 %v359
  %v1593 = vunpack.c.h.b16 %v359
  %v1594 = vunpack.c.l.b16 %v360
  %v1595 = vunpack.c.h.b16 %v360
  %v1596 = vunpack.c.l.b16 %v361
  %v1597 = vunpack.c.h.b16 %v361
  %v1598 = vunpack.c.l.b16 %v362
  %v1599 = vunpack.c.h.b16 %v362
  %v1600 = vunpack.c.l.b16 %v363
  %v1601 = vunpack.c.h.b16 %v363
  %v1602 = vunpack.c.l.b16 %v364
  %v1603 = vunpack.c.h.b16 %v364
  %v1604 = vunpack.c.l.b16 %v365
  %v1605 = vunpack.c.h.b16 %v365
  %v1606 = vunpack.c.l.b16 %v366
  %v1607 = vunpack.c.h.b16 %v366
  %v1608 = vunpack.c.l.b16 %v367
  %v1609 = vunpack.c.h.b16 %v367
  %v1610 = vunpack.c.l.b16 %v368
  %v1611 = vunpack.c.h.b16 %v368
  %v1612 = vunpack.c.l.b16 %v369
  %v1613 = vunpack.c.h.b16 %v369
  %v1614 = vunpack.c.l.b16 %v370
  %v1615 = vunpack.c.h.b16 %v370
  %v1616 = vunpack.c.l.b16 %v371
  %v1617 = vunpack.c.h.b16 %v371
  %v1618 = vunpack.c.l.b16 %v372
  %v1619 = vunpack.c.h.b16 %v372
  %v1620 = vunpack.c.l.b16 %v373
  %v1621 = vunpack.c.h.b16 %v373
  %v1622 = vunpack.c.l.b16 %v374
  %v1623 = vunpack.c.h.b16 %v374
  %v1624 = vunpack.c.l.b16 %v375
  %v1625 = vunpack.c.h.b16 %v375
  %v1626 = vunpack.c.l.b16 %v376
  %v1627 = vunpack.c.h.b16 %v376
  %v1628 = vunpack.c.l.b16 %v377
  %v1629 = vunpack.c.h.b16 %v377
  %v1630 = vunpack.c.l.b16 %v378
  %v1631 = vunpack.c.h.b16 %v378
  %v1632 = vunpack.c.l.b16 %v379
  %v1633 = vunpack.c.h.b16 %v379
  %v1634 = vunpack.c.l.b16 %v380
  %v1635 = vunpack.c.h.b16 %v380
  %v1636 = vunpack.c.l.b16 %v381
  %v1637 = vunpack.c.h.b16 %v381
  %v1638 = vunpack.c.l.b16 %v382
  %v1639 = vunpack.c.h.b16 %v382
  %v1640 = vunpack.c.l.b16 %v383
  %v1641 = vunpack.c.h.b16 %v383
  %v1642 = vunpack.c.l.b16 %v384
  %v1643 = vunpack.c.h.b16 %v384
  %v1644 = vunpack.c.l.b16 %v385
  %v1645 = vunpack.c.h.b16 %v385
  %v1646 = vunpack.c.l.b16 %v386
  %v1647 = vunpack.c.h.b16 %v386
  %v1648 = vunpack.c.l.b16 %v387
  %v1649 = vunpack.c.h.b16 %v387
  %v1650 = vunpack.c.l.b16 %v388
  %v1651 = vunpack.c.h.b16 %v388
  %v1652 = vunpack.c.l.b16 %v389
  %v1653 = vunpack.c.h.b16 %v389
  %v1654 = vunpack.c.l.b16 %v390
  %v1655 = vunpack.c.h.b16 %v390
  %v1656 = vunpack.c.l.b16 %v391
  %v1657 = vunpack.c.h.b16 %v391
  %v1658 = vunpack.c.l.b16 %v392
  %v1659 = vunpack.c.h.b16 %v392
  %v1660 = vunpack.c.l.b16 %v393
  %v1661 = vunpack.c.h.b16 %v393
  %v1662 = vunpack.c.l.b16 %v394
  %v1663 = vunpack.c.h.b16 %v394
  %v1664 = vunpack.c.l.b16 %v395
  %v1665 = vunpack.c.h.b16 %v395
  %v1666 = vunpack.c.l.b16 %v396
  %v1667 = vunpack.c.h.b16 %v396
  %v1668 = vunpack.c.l.b16 %v397
  %v1669 = vunpack.c.h.b16 %v397
  %v1670 = vunpack.c.l.b16 %v398
  %v1671 = vunpack.c.h.b16 %v398
  %v1672 = vunpack.c.l.b16 %v399
  %v1673 = vunpack.c.h.b16 %v399
  %v1674 = vunpack.c.l.b16 %v400
  %v1675 = vunpack.c.h.b16 %v400
  %v1676 = vunpack.c.l.b16 %v401
  %v1677 = vunpack.c.h.b16 %v401
  %v1678 = vunpack.c.l.b16 %v402
  %v1679 = vunpack.c.h.b16 %v402
  %v1680 = vunpack.c.l.b16 %v403
  %v1681 = vunpack.c.h.b16 %v403
  %v1682 = vunpack.c.l.b16 %v404
  %v1683 = vunpack.c.h.b16 %v404
  %v1684 = vunpack.c.l.b16 %v405
  %v1685 = vunpack.c.h.b16 %v405
  %v1686 = vunpack.c.l.b16 %v406
  %v1687 = vunpack.c.h.b16 %v406
  %v1688 = vunpack.c.l.b16 %v407
  %v1689 = vunpack.c.h.b16 %v407
  %v1690 = vunpack.c.l.b16 %v408
  %v1691 = vunpack.c.h.b16 %v408
  %v1692 = vunpack.c.l.b16 %v409
  %v1693 = vunpack.c.h.b16 %v409
  %v1694 = vunpack.c.l.b16 %v410
  %v1695 = vunpack.c.h.b16 %v410
  %v1696 = vunpack.c.l.b16 %v411
  %v1697 = vunpack.c.h.b16 %v411
  %v1698 = vunpack.c.l.b16 %v412
  %v1699 = vunpack.c.h.b16 %v412
  %v1700 = vunpack.c.l.b16 %v413
  %v1701 = vunpack.c.h.b16 %v413
  %v1702 = vunpack.c.l.b16 %v414
  %v1703 = vunpack.c.h.b16 %v414
  %v1704 = vunpack.c.l.b16 %v415
  %v1705 = vunpack.c.h.b16 %v415
  %v1706 = vunpack.c.l.b16 %v416
  %v1707 = vunpack.c.h.b16 %v416
  %v1708 = vunpack.c.l.b16 %v417
  %v1709 = vunpack.c.h.b16 %v417
  %v1710 = vunpack.c.l.b16 %v418
  %v1711 = vunpack.c.h.b16 %v418
  %v1712 = vunpack.c.l.b16 %v419
  %v1713 = vunpack.c.h.b16 %v419
  %v1714 = vunpack.c.l.b16 %v420
  %v1715 = vunpack.c.h.b16 %v420
  %v1716 = vunpack.c.l.b16 %v421
  %v1717 = vunpack.c.h.b16 %v421
  %v1718 = vunpack.c.l.b16 %v422
  %v1719 = vunpack.c.h.b16 %v422
  %v1720 = vunpack.c.l.b16 %v423
  %v1721 = vunpack.c.h.b16 %v423
  %v1722 = vunpack.c.l.b16 %v424
  %v1723 = vunpack.c.h.b16 %v424
  %v1724 = vunpack.c.l.b16 %v425
  %v1725 = vunpack.c.h.b16 %v425
  %v1726 = vunpack.c.l.b16 %v426
  %v1727 = vunpack.c.h.b16 %v426
  %v1728 = vunpack.c.l.b16 %v427
  %v1729 = vunpack.c.h.b16 %v427
  %v1730 = vunpack.c.l.b16 %v428
  %v1731 = vunpack.c.h.b16 %v428
  %v1732 = vunpack.c.l.b16 %v429
  %v1733 = vunpack.c.h.b16 %v429
  %v1734 = vunpack.c.l.b16 %v430
  %v1735 = vunpack.c.h.b16 %v430
  %v1736 = vunpack.c.l.b16 %v431
  %v1737 = vunpack.c.h.b16 %v431
  %v1738 = vunpack.c.l.b16 %v432
  %v1739 = vunpack.c.h.b16 %v432
  %v1740 = vunpack.c.l.b16 %v433
  %v1741 = vunpack.c.h.b16 %v433
  %v1742 = vunpack.c.l.b16 %v434
  %v1743 = vunpack.c.h.b16 %v434
  %v1744 = vunpack.c.l.b16 %v435
  %v1745 = vunpack.c.h.b16 %v435
  %v1746 = vunpack.c.l.b16 %v436
  %v1747 = vunpack.c.h.b16 %v436
  %v1748 = vunpack.c.l.b16 %v437
  %v1749 = vunpack.c.h.b16 %v437
  %v1750 = vunpack.c.l.b16 %v438
  %v1751 = vunpack.c.h.b16 %v438
  %v1752 = vpack.c.b16 %v970, %v968
  %v1753 = vpack.c.b16 %v971, %v969
  %v1754 = vpack.c.b16 %v974, %v972
  %v1755 = vpack.c.b16 %v975, %v973
  %v1756 = vpack.c.b16 %v978, %v976
  %v1757 = vpack.c.b16 %v979, %v977
  %v1758 = vpack.c.b16 %v982, %v980
  %v1759 = vpack.c.b16 %v983, %v981
  %v1760 = vpack.c.b16 %v986, %v984
  %v1761 = vpack.c.b16 %v987, %v985
  %v1762 = vpack.c.b16 %v990, %v988
  %v1763 = vpack.c.b16 %v991, %v989
  %v1764 = vpack.c.b16 %v994, %v992
  %v1765 = vpack.c.b16 %v995, %v993
  %v1766 = vpack.c.b16 %v998, %v996
  %v1767 = vpack.c.b16 %v999, %v997
  %v1768 = vpack.c.b16 %v1002, %v1000
  %v1769 = vpack.c.b16 %v1003, %v1001
  %v1770 = vpack.c.b16 %v1006, %v1004
  %v1771 = vpack.c.b16 %v1007, %v1005
  %v1772 = vpack.c.b16 %v1010, %v1008
  %v1773 = vpack.c.b16 %v1011, %v1009
  %v1774 = vpack.c.b16 %v1014, %v1012
  %v1775 = vpack.c.b16 %v1015, %v1013
  %v1776 = vpack.c.b16 %v1018, %v1016
  %v1777 = vpack.c.b16 %v1019, %v1017
  %v1778 = vpack.c.b16 %v1022, %v1020
  %v1779 = vpack.c.b16 %v1023, %v1021
  %v1780 = vpack.c.b16 %v1026, %v1024
  %v1781 = vpack.c.b16 %v1027, %v1025
  %v1782 = vpack.c.b16 %v1030, %v1028
  %v1783 = vpack.c.b16 %v1031, %v1029
  %v1784 = vpack.c.b16 %v1034, %v1032
  %v1785 = vpack.c.b16 %v1035, %v1033
  %v1786 = vpack.c.b16 %v1038, %v1036
  %v1787 = vpack.c.b16 %v1039, %v1037
  %v1788 = vpack.c.b16 %v1042, %v1040
  %v1789 = vpack.c.b16 %v1043, %v1041
  %v1790 = vpack.c.b16 %v1046, %v1044
  %v1791 = vpack.c.b16 %v1047, %v1045
  %v1792 = vpack.c.b16 %v1050, %v1048
  %v1793 = vpack.c.b16 %v1051, %v1049
  %v1794 = vpack.c.b16 %v1054, %v1052
  %v1795 = vpack.c.b16 %v1055, %v1053
  %v1796 = vpack.c.b16 %v1058, %v1056
  %v1797 = vpack.c.b16 %v1059, %v1057
  %v1798 = vpack.c.b16 %v1062, %v1060
  %v1799 = vpack.c.b16 %v1063, %v1061
  %v1800 = vpack.c.b16 %v1066, %v1064
  %v1801 = vpack.c.b16 %v1067, %v1065
  %v1802 = vpack.c.b16 %v1070, %v1068
  %v1803 = vpack.c.b16 %v1071, %v1069
  %v1804 = vpack.c.b16 %v1074, %v1072
  %v1805 = vpack.c.b16 %v1075, %v1073
  %v1806 = vpack.c.b16 %v1078, %v1076
  %v1807 = vpack.c.b16 %v1079, %v1077
  %v1808 = vpack.c.b16 %v1082, %v1080
  %v1809 = vpack.c.b16 %v1083, %v1081
  %v1810 = vpack.c.b16 %v1086, %v1084
  %v1811 = vpack.c.b16 %v1087, %v1085
  %v1812 = vpack.c.b16 %v1090, %v1088
  %v1813 = vpack.c.b16 %v1091, %v1089
  %v1814 = vpack.c.b16 %v1094, %v1092
  %v1815 = vpack.c.b16 %v1095, %v1093
  %v1816 = vpack.c.b16 %v1098, %v1096
  %v1817 = vpack.c.b16 %v1099, %v1097
  %v1818 = vpack.c.b16 %v1102, %v1100
  %v1819 = vpack.c.b16 %v1103, %v1101
  %v1820 = vpack.c.b16 %v1106, %v1104
  %v1821 = vpack.c.b16 %v1107, %v1105
  %v1822 = vpack.c.b16 %v1110, %v1108
  %v1823 = vpack.c.b16 %v1111, %v1109
  %v1824 = vpack.c.b16 %v1114, %v1112
  %v1825 = vpack.c.b16 %v1115, %v1113
  %v1826 = vpack.c.b16 %v1118, %v1116
  %v1827 = vpack.c.b16 %v1119, %v1117
  %v1828 = vpack.c.b16 %v1122, %v1120
  %v1829 = vpack.c.b16 %v1123, %v1121
  %v1830 = vpack.c.b16 %v1126, %v1124
  %v1831 = vpack.c.b16 %v1127, %v1125
  %v1832 = vpack.c.b16 %v1130, %v1128
  %v1833 = vpack.c.b16 %v1131, %v1129
  %v1834 = vpack.c.b16 %v1134, %v1132
  %v1835 = vpack.c.b16 %v1135, %v1133
  %v1836 = vpack.c.b16 %v1138, %v1136
  %v1837 = vpack.c.b16 %v1139, %v1137
  %v1838 = vpack.c.b16 %v1142, %v1140
  %v1839 = vpack.c.b16 %v1143, %v1141
  %v1840 = vpack.c.b16 %v1146, %v1144
  %v1841 = vpack.c.b16 %v1147, %v1145
  %v1842 = vpack.c.b16 %v1150, %v1148
  %v1843 = vpack.c.b16 %v1151, %v1149
  %v1844 = vpack.c.b16 %v1154, %v1152
  %v1845 = vpack.c.b16 %v1155, %v1153
  %v1846 = vpack.c.b16 %v1158, %v1156
  %v1847 = vpack.c.b16 %v1159, %v1157
  %v1848 = vpack.c.b16 %v1162, %v1160
  %v1849 = vpack.c.b16 %v1163, %v1161
  %v1850 = vpack.c.b16 %v1166, %v1164
  %v1851 = vpack.c.b16 %v1167, %v1165
  %v1852 = vpack.c.b16 %v1170, %v1168
  %v1853 = vpack.c.b16 %v1171, %v1169
  %v1854 = vpack.c.b16 %v1174, %v1172
  %v1855 = vpack.c.b16 %v1175, %v1173
  %v1856 = vpack.c.b16 %v1178, %v1176
  %v1857 = vpack.c.b16 %v1179, %v1177
  %v1858 = vpack.c.b16 %v1182, %v1180
  %v1859 = vpack.c.b16 %v1183, %v1181
  %v1860 = vpack.c.b16 %v1186, %v1184
  %v1861 = vpack.c.b16 %v1187, %v1185
  %v1862 = vpack.c.b16 %v1190, %v1188
  %v1863 = vpack.c.b16 %v1191, %v1189
  %v1864 = vpack.c.b16 %v1194, %v1192
  %v1865 = vpack.c.b16 %v1195, %v1193
  %v1866 = vpack.c.b16 %v1198, %v1196
  %v1867 = vpack.c.b16 %v1199, %v1197
  %v1868 = vpack.c.b16 %v1202, %v1200
  %v1869 = vpack.c.b16 %v1203, %v1201
  %v1870 = vpack.c.b16 %v1206, %v1204
  %v1871 = vpack.c.b16 %v1207, %v1205
  %v1872 = vpack.c.b16 %v1210, %v1208
  %v1873 = vpack.c.b16 %v1211, %v1209
  %v1874 = vpack.c.b16 %v1214, %v1212
  %v1875 = vpack.c.b16 %v1215, %v1213
  %v1876 = vpack.c.b16 %v1218, %v1216
  %v1877 = vpack.c.b16 %v1219, %v1217
  %v1878 = vpack.c.b16 %v1222, %v1220
  %v1879 = vpack.c.b16 %v1223, %v1221
  %v1880 = vpack.c.b16 %v1226, %v1224
  %v1881 = vpack.c.b16 %v1227, %v1225
  %v1882 = vpack.c.b16 %v1230, %v1228
  %v1883 = vpack.c.b16 %v1231, %v1229
  %v1884 = vpack.c.b16 %v1234, %v1232
  %v1885 = vpack.c.b16 %v1235, %v1233
  %v1886 = vpack.c.b16 %v1238, %v1236
  %v1887 = vpack.c.b16 %v1239, %v1237
  %v1888 = vpack.c.b16 %v1242, %v1240
  %v1889 = vpack.c.b16 %v1243, %v1241
  %v1890 = vpack.c.b16 %v1246, %v1244
  %v1891 = vpack.c.b16 %v1247, %v1245
  %v1892 = vpack.c.b16 %v1250, %v1248
  %v1893 = vpack.c.b16 %v1251, %v1249
  %v1894 = vpack.c.b16 %v1254, %v1252
  %v1895 = vpack.c.b16 %v1255, %v1253
  %v1896 = vpack.c.b16 %v1258, %v1256
  %v1897 = vpack.c.b16 %v1259, %v1257
  %v1898 = vpack.c.b16 %v1262, %v1260
  %v1899 = vpack.c.b16 %v1263, %v1261
  %v1900 = vpack.c.b16 %v1266, %v1264
  %v1901 = vpack.c.b16 %v1267, %v1265
  %v1902 = vpack.c.b16 %v1270, %v1268
  %v1903 = vpack.c.b16 %v1271, %v1269
  %v1904 = vpack.c.b16 %v1274, %v1272
  %v1905 = vpack.c.b16 %v1275, %v1273
  %v1906 = vpack.c.b16 %v1278, %v1276
  %v1907 = vpack.c.b16 %v1279, %v1277
  %v1908 = vpack.c.b16 %v1282, %v1280
  %v1909 = vpack.c.b16 %v1283, %v1281
  %v1910 = vpack.c.b16 %v1286, %v1284
  %v1911 = vpack.c.b16 %v1287, %v1285
  %v1912 = vpack.c.b16 %v1290, %v1288
  %v1913 = vpack.c.b16 %v1291, %v1289
  %v1914 = vpack.c.b16 %v1294, %v1292
  %v1915 = vpack.c.b16 %v1295, %v1293
  %v1916 = vpack.c.b16 %v1298, %v1296
  %v1917 = vpack.c.b16 %v1299, %v1297
  %v1918 = vpack.c.b16 %v1302, %v1300
  %v1919 = vpack.c.b16 %v1303, %v1301
  %v1920 = vpack.c.b16 %v1306, %v1304
  %v1921 = vpack.c.b16 %v1307, %v1305
  %v1922 = vpack.c.b16 %v1310, %v1308
  %v1923 = vpack.c.b16 %v1311, %v1309
  %v1924 = vpack.c.b16 %v1314, %v1312
  %v1925 = vpack.c.b16 %v1315, %v1313
  %v1926 = vpack.c.b16 %v1318, %v1316
  %v1927 = vpack.c.b16 %v1319, %v1317
  %v1928 = vpack.c.b16 %v1322, %v1320
  %v1929 = vpack.c.b16 %v1323, %v1321
  %v1930 = vpack.c.b16 %v1326, %v1324
  %v1931 = vpack.c.b16 %v1327, %v1325
  %v1932 = vpack.c.b16 %v1330, %v1328
  %v1933 = vpack.c.b16 %v1331, %v1329
  %v1934 = vpack.c.b16 %v1334, %v1332
  %v1935 = vpack.c.b16 %v1335, %v1333
  %v1936 = vpack.c.b16 %v1338, %v1336
  %v1937 = vpack.c.b16 %v1339, %v1337
  %v1938 = vpack.c.b16 %v1342, %v1340
  %v1939 = vpack.c.b16 %v1343, %v1341
  %v1940 = vpack.c.b16 %v1346, %v1344
  %v1941 = vpack.c.b16 %v1347, %v1345
  %v1942 = vpack.c.b16 %v1350, %v1348
  %v1943 = vpack.c.b16 %v1351, %v1349
  %v1944 = vpack.c.b16 %v1354, %v1352
  %v1945 = vpack.c.b16 %v1355, %v1353
  %v1946 = vpack.c.b16 %v1358, %v1356
  %v1947 = vpack.c.b16 %v1359, %v1357
  %v1948 = vpack.c.b16 %v1362, %v1360
  %v1949 = vpack.c.b16 %v1363, %v1361
  %v1950 = vpack.c.b16 %v1366, %v1364
  %v1951 = vpack.c.b16 %v1367, %v1365
  %v1952 = vpack.c.b16 %v1370, %v1368
  %v1953 = vpack.c.b16 %v1371, %v1369
  %v1954 = vpack.c.b16 %v1374, %v1372
  %v1955 = vpack.c.b16 %v1375, %v1373
  %v1956 = vpack.c.b16 %v1378, %v1376
  %v1957 = vpack.c.b16 %v1379, %v1377
  %v1958 = vpack.c.b16 %v1382, %v1380
  %v1959 = vpack.c.b16 %v1383, %v1381
  %v1960 = vpack.c.b16 %v1386, %v1384
  %v1961 = vpack.c.b16 %v1387, %v1385
  %v1962 = vpack.c.b16 %v1390, %v1388
  %v1963 = vpack.c.b16 %v1391, %v1389
  %v1964 = vpack.c.b16 %v1394, %v1392
  %v1965 = vpack.c.b16 %v1395, %v1393
  %v1966 = vpack.c.b16 %v1398, %v1396
  %v1967 = vpack.c.b16 %v1399, %v1397
  %v1968 = vpack.c.b16 %v1402, %v1400
  %v1969 = vpack.c.b16 %v1403, %v1401
  %v1970 = vpack.c.b16 %v1406, %v1404
  %v1971 = vpack.c.b16 %v1407, %v1405
  %v1972 = vpack.c.b16 %v1410, %v1408
  %v1973 = vpack.c.b16 %v1411, %v1409
  %v1974 = vpack.c.b16 %v1414, %v1412
  %v1975 = vpack.c.b16 %v1415, %v1413
  %v1976 = vpack.c.b16 %v1418, %v1416
  %v1977 = vpack.c.b16 %v1419, %v1417
  %v1978 = vpack.c.b16 %v1422, %v1420
  %v1979 = vpack.c.b16 %v1423, %v1421
  %v1980 = vpack.c.b16 %v1426, %v1424
  %v1981 = vpack.c.b16 %v1427, %v1425
  %v1982 = vpack.c.b16 %v1430, %v1428
  %v1983 = vpack.c.b16 %v1431, %v1429
  %v1984 = vpack.c.b16 %v1434, %v1432
  %v1985 = vpack.c.b16 %v1435, %v1433
  %v1986 = vpack.c.b16 %v1438, %v1436
  %v1987 = vpack.c.b16 %v1439, %v1437
  %v1988 = vpack.c.b16 %v1442, %v1440
  %v1989 = vpack.c.b16 %v1443, %v1441
  %v1990 = vpack.c.b16 %v1446, %v1444
  %v1991 = vpack.c.b16 %v1447, %v1445
  %v1992 = vpack.c.b16 %v1450, %v1448
  %v1993 = vpack.c.b16 %v1451, %v1449
  %v1994 = vpack.c.b16 %v1454, %v1452
  %v1995 = vpack.c.b16 %v1455, %v1453
  %v1996 = vpack.c.b16 %v1458, %v1456
  %v1997 = vpack.c.b16 %v1459, %v1457
  %v1998 = vpack.c.b16 %v1462, %v1460
  %v1999 = vpack.c.b16 %v1463, %v1461
  %v2000 = vpack.c.b16 %v1466, %v1464
  %v2001 = vpack.c.b16 %v1467, %v1465
  %v2002 = vpack.c.b16 %v1470, %v1468
  %v2003 = vpack.c.b16 %v1471, %v1469
  %v2004 = vpack.c.b16 %v1474, %v1472
  %v2005 = vpack.c.b16 %v1475, %v1473
  %v2006 = vpack.c.b16 %v1478, %v1476
  %v2007 = vpack.c.b16 %v1479, %v1477
  %v2008 = vpack.c.b16 %v1482, %v1480
  %v2009 = vpack.c.b16 %v1483, %v1481
  %v2010 = vpack.c.b16 %v1486, %v1484
  %v2011 = vpack.c.b16 %v1487, %v1485
  %v2012 = vpack.c.b16 %v1490, %v1488
  %v2013 = vpack.c.b16 %v1491, %v1489
  %v2014 = vpack.c.b16 %v1494, %v1492
  %v2015 = vpack.c.b16 %v1495, %v1493
  %v2016 = vpack.c.b16 %v1498, %v1496
  %v2017 = vpack.c.b16 %v1499, %v1497
  %v2018 = vpack.c.b16 %v1502, %v1500
  %v2019 = vpack.c.b16 %v1503, %v1501
  %v2020 = vpack.c.b16 %v1506, %v1504
  %v2021 = vpack.c.b16 %v1507, %v1505
  %v2022 = vpack.c.b16 %v1510, %v1508
  %v2023 = vpack.c.b16 %v1511, %v1509
  %v2024 = vpack.c.b16 %v1514, %v1512
  %v2025 = vpack.c.b16 %v1515, %v1513
  %v2026 = vpack.c.b16 %v1518, %v1516
  %v2027 = vpack.c.b16 %v1519, %v1517
  %v2028 = vpack.c.b16 %v1522, %v1520
  %v2029 = vpack.c.b16 %v1523, %v1521
  %v2030 = vpack.c.b16 %v1526, %v1524
  %v2031 = vpack.c.b16 %v1527, %v1525
  %v2032 = vpack.c.b16 %v1530, %v1528
  %v2033 = vpack.c.b16 %v1531, %v1529
  %v2034 = vpack.c.b16 %v1534, %v1532
  %v2035 = vpack.c.b16 %v1535, %v1533
  %v2036 = vpack.c.b16 %v1538, %v1536
  %v2037 = vpack.c.b16 %v1539, %v1537
  %v2038 = vpack.c.b16 %v1542, %v1540
  %v2039 = vpack.c.b16 %v1543, %v1541
  %v2040 = vpack.c.b16 %v1546, %v1544
  %v2041 = vpack.c.b16 %v1547, %v1545
  %v2042 = vpack.c.b16 %v1550, %v1548
  %v2043 = vpack.c.b16 %v1551, %v1549
  %v2044 = vpack.c.b16 %v1554, %v1552
  %v2045 = vpack.c.b16 %v1555, %v1553
  %v2046 = vpack.c.b16 %v1558, %v1556
  %v2047 = vpack.c.b16 %v1559, %v1557
  %v2048 = vpack.c.b16 %v1562, %v1560
  %v2049 = vpack.c.b16 %v1563, %v1561
  %v2050 = vpack.c.b16 %v1566, %v1564
  %v2051 = vpack.c.b16 %v1567, %v1565
  %v2052 = vpack.c.b16 %v1570, %v1568
  %v2053 = vpack.c.b16 %v1571, %v1569
  %v2054 = vpack.c.b16 %v1574, %v1572
  %v2055 = vpack.c.b16 %v1575, %v1573
  %v2056 = vpack.c.b16 %v1578, %v1576
  %v2057 = vpack.c.b16 %v1579, %v1577
  %v2058 = vpack.c.b16 %v1582, %v1580
  %v2059 = vpack.c.b16 %v1583, %v1581
  %v2060 = vpack.c.b16 %v1586, %v1584
  %v2061 = vpack.c.b16 %v1587, %v1585
  %v2062 = vpack.c.b16 %v1590, %v1588
  %v2063 = vpack.c.b16 %v1591, %v1589
  %v2064 = vpack.c.b16 %v1594, %v1592
  %v2065 = vpack.c.b16 %v1595, %v1593
  %v2066 = vpack.c.b16 %v1598, %v1596
  %v2067 = vpack.c.b16 %v1599, %v1597
  %v2068 = vpack.c.b16 %v1602, %v1600
  %v2069 = vpack.c.b16 %v1603, %v1601
  %v2070 = vpack.c.b16 %v1606, %v1604
  %v2071 = vpack.c.b16 %v1607, %v1605
  %v2072 = vpack.c.b16 %v1610, %v1608
  %v2073 = vpack.c.b16 %v1611, %v1609
  %v2074 = vpack.c.b16 %v1614, %v1612
  %v2075 = vpack.c.b16 %v1615, %v1613
  %v2076 = vpack.c.b16 %v1618, %v1616
  %v2077 = vpack.c.b16 %v1619, %v1617
  %v2078 = vpack.c.b16 %v1622, %v1620
  %v2079 = vpack.c.b16 %v1623, %v1621
  %v2080 = vpack.c.b16 %v1626, %v1624
  %v2081 = vpack.c.b16 %v1627, %v1625
  %v2082 = vpack.c.b16 %v1630, %v1628
  %v2083 = vpack.c.b16 %v1631, %v1629
  %v2084 = vpack.c.b16 %v1634, %v1632
  %v2085 = vpack.c.b16 %v1635, %v1633
  %v2086 = vpack.c.b16 %v1638, %v1636
  %v2087 = vpack.c.b16 %v1639, %v1637
  %v2088 = vpack.c.b16 %v1642, %v1640
  %v2089 = vpack.c.b16 %v1643, %v1641
  %v2090 = vpack.c.b16 %v1646, %v1644
  %v2091 = vpack.c.b16 %v1647, %v1645
  %v2092 = vpack.c.b16 %v1650, %v1648
  %v2093 = vpack.c.b16 %v1651, %v1649
  %v2094 = vpack.c.b16 %v1654, %v1652
  %v2095 = vpack.c.b16 %v1655, %v1653
  %v2096 = vpack.c.b16 %v1658, %v1656
  %v2097 = vpack.c.b16 %v1659, %v1657
  %v2098 = vpack.c.b16 %v1662, %v1660
  %v2099 = vpack.c.b16 %v1663, %v1661
  %v2100 = vpack.c.b16 %v1666, %v1664
  %v2101 = vpack.c.b16 %v1667, %v1665
  %v2102 = vpack.c.b16 %v1670, %v1668
  %v2103 = vpack.c.b16 %v1671, %v1669
  %v2104 = vpack.c.b16 %v1674, %v1672
  %v2105 = vpack.c.b16 %v1675, %v1673
  %v2106 = vpack.c.b16 %v1678, %v1676
  %v2107 = vpack.c.b16 %v1679, %v1677
  %v2108 = vpack.c.b16 %v1682, %v1680
  %v2109 = vpack.c.b16 %v1683, %v1681
  %v2110 = vpack.c.b16 %v1686, %v1684
  %v2111 = vpack.c.b16 %v1687, %v1685
  %v2112 = vpack.c.b16 %v1690, %v1688
  %v2113 = vpack.c.b16 %v1691, %v1689
  %v2114 = vpack.c.b16 %v1694, %v1692
  %v2115 = vpack.c.b16 %v1695, %v1693
  %v2116 = vpack.c.b16 %v1698, %v1696
  %v2117 = vpack.c.b16 %v1699, %v1697
  %v2118 = vpack.c.b16 %v1702, %v1700
  %v2119 = vpack.c.b16 %v1703, %v1701
  %v2120 = vpack.c.b16 %v1706, %v1704
  %v2121 = vpack.c.b16 %v1707, %v1705
  %v2122 = vpack.c.b16 %v1710, %v1708
  %v2123 = vpack.c.b16 %v1711, %v1709
  %v2124 = vpack.c.b16 %v1714, %v1712
  %v2125 = vpack.c.b16 %v1715, %v1713
  %v2126 = vpack.c.b16 %v1718, %v1716
  %v2127 = vpack.c.b16 %v1719, %v1717
  %v2128 = vpack.c.b16 %v1722, %v1720
  %v2129 = vpack.c.b16 %v1723, %v1721
  %v2130 = vpack.c.b16 %v1726, %v1724
  %v2131 = vpack.c.b16 %v1727, %v1725
  %v2132 = vpack.c.b16 %v1730, %v1728
  %v2133 = vpack.c.b16 %v1731, %v1729
  %v2134 = vpack.c.b16 %v1734, %v1732
  %v2135 = vpack.c.b16 %v1735, %v1733
  %v2136 = vpack.c.b16 %v1738, %v1736
  %v2137 = vpack.c.b16 %v1739, %v1737
  %v2138 = vpack.c.b16 %v1742, %v1740
  %v2139 = vpack.c.b16 %v1743, %v1741
  %v2140 = vpack.c.b16 %v1746, %v1744
  %v2141 = vpack.c.b16 %v1747, %v1745
  %v2142 = vpack.c.b16 %v1750, %v1748
  %v2143 = vpack.c.b16 %v1751, %v1749
  %vm2536 = vcmask 523264
  %v2538 = vsel %vm2536, %v551, 0
  %2540 = vmatprep.subr.bf16.mxu0 %v1767
  %2541 = vmatpush1.bf16.msra.mxu0 %v1766
  %2542 = vmatprep.subr.bf16.mxu0 %v1765
  %2543 = vmatpush1.bf16.msra.mxu0 %v1764
  %2544 = vmatprep.subr.bf16.mxu0 %v1763
  %2545 = vmatpush1.bf16.msra.mxu0 %v1762
  %2546 = vmatprep.subr.bf16.mxu0 %v1761
  %2547 = vmatpush1.bf16.msra.mxu0 %v1760
  %2548 = vmatprep.subr.bf16.mxu0 %v1759
  %2549 = vmatpush1.bf16.msra.mxu0 %v1758
  %2550 = vmatprep.subr.bf16.mxu0 %v1757
  %2551 = vmatpush1.bf16.msra.mxu0 %v1756
  %2552 = vmatprep.subr.bf16.mxu0 %v1755
  %2553 = vmatpush1.bf16.msra.mxu0 %v1754
  %2554 = vmatprep.subr.bf16.mxu0 %v1753
  %2555 = vmatpush1.bf16.msra.mxu0 %v1752
  %2556 = vmatprep.subr.bf16.mxu0 %v1783
  %2557 = vmatpush2.bf16.msra.mxu0 %v1782
  %2558 = vmatprep.subr.bf16.mxu0 %v1781
  %2559 = vmatpush2.bf16.msra.mxu0 %v1780
  %2560 = vmatprep.subr.bf16.mxu0 %v1779
  %2561 = vmatpush2.bf16.msra.mxu0 %v1778
  %2562 = vmatprep.subr.bf16.mxu0 %v1777
  %2563 = vmatpush2.bf16.msra.mxu0 %v1776
  %2564 = vmatprep.subr.bf16.mxu0 %v1775
  %2565 = vmatpush2.bf16.msra.mxu0 %v1774
  %2566 = vmatprep.subr.bf16.mxu0 %v1773
  %2567 = vmatpush2.bf16.msra.mxu0 %v1772
  %2568 = vmatprep.subr.bf16.mxu0 %v1771
  %2569 = vmatpush2.bf16.msra.mxu0 %v1770
  %2570 = vmatprep.subr.bf16.mxu0 %v1769
  %2571 = vmatpush2.bf16.msra.mxu0 %v1768
  %2572 = vmatprep.mubr.bf16.mxu0 %v528
  %2573 = vmatmul.mubr.bf16.gmra.mxu0 %v527
  %v2574 = vpop.f32.mrf.mxu0
  %v2575 = vadd.f32 %v444, %v2574
  %v2576 = vpop.f32.mrf.mxu0
  %v2577 = vadd.f32 %v448, %v2576
  %v2578 = vpop.f32.mrf.mxu0
  %v2579 = vadd.f32 %v444, %v2578
  %v2580 = vpop.f32.mrf.mxu0
  %v2581 = vadd.f32 %v448, %v2580
  %2582 = vdwg.mxu0
  %2583 = vmatprep.subr.bf16.mxu0 %v1799
  %2584 = vmatpush1.bf16.msra.mxu0 %v1798
  %2585 = vmatprep.subr.bf16.mxu0 %v1797
  %2586 = vmatpush1.bf16.msra.mxu0 %v1796
  %2587 = vmatprep.subr.bf16.mxu0 %v1795
  %2588 = vmatpush1.bf16.msra.mxu0 %v1794
  %2589 = vmatprep.subr.bf16.mxu0 %v1793
  %2590 = vmatpush1.bf16.msra.mxu0 %v1792
  %2591 = vmatprep.subr.bf16.mxu0 %v1791
  %2592 = vmatpush1.bf16.msra.mxu0 %v1790
  %2593 = vmatprep.subr.bf16.mxu0 %v1789
  %2594 = vmatpush1.bf16.msra.mxu0 %v1788
  %2595 = vmatprep.subr.bf16.mxu0 %v1787
  %2596 = vmatpush1.bf16.msra.mxu0 %v1786
  %2597 = vmatprep.subr.bf16.mxu0 %v1785
  %2598 = vmatpush1.bf16.msra.mxu0 %v1784
  %2599 = vmatprep.subr.bf16.mxu0 %v1815
  %2600 = vmatpush2.bf16.msra.mxu0 %v1814
  %2601 = vmatprep.subr.bf16.mxu0 %v1813
  %2602 = vmatpush2.bf16.msra.mxu0 %v1812
  %2603 = vmatprep.subr.bf16.mxu0 %v1811
  %2604 = vmatpush2.bf16.msra.mxu0 %v1810
  %2605 = vmatprep.subr.bf16.mxu0 %v1809
  %2606 = vmatpush2.bf16.msra.mxu0 %v1808
  %2607 = vmatprep.subr.bf16.mxu0 %v1807
  %2608 = vmatpush2.bf16.msra.mxu0 %v1806
  %2609 = vmatprep.subr.bf16.mxu0 %v1805
  %2610 = vmatpush2.bf16.msra.mxu0 %v1804
  %2611 = vmatprep.subr.bf16.mxu0 %v1803
  %2612 = vmatpush2.bf16.msra.mxu0 %v1802
  %2613 = vmatprep.subr.bf16.mxu0 %v1801
  %2614 = vmatpush2.bf16.msra.mxu0 %v1800
  %2615 = vmatprep.mubr.bf16.mxu0 %v530
  %2616 = vmatmul.mubr.bf16.gmra.mxu0 %v529
  %v2617 = vpop.f32.mrf.mxu0
  %v2618 = vadd.f32 %v2575, %v2617
  %v2619 = vpop.f32.mrf.mxu0
  %v2620 = vadd.f32 %v2577, %v2619
  %v2621 = vpop.f32.mrf.mxu0
  %v2622 = vadd.f32 %v2579, %v2621
  %v2623 = vpop.f32.mrf.mxu0
  %v2624 = vadd.f32 %v2581, %v2623
  %2625 = vdwg.mxu0
  %2626 = vmatprep.subr.bf16.mxu0 %v1831
  %2627 = vmatpush1.bf16.msra.mxu0 %v1830
  %2628 = vmatprep.subr.bf16.mxu0 %v1829
  %2629 = vmatpush1.bf16.msra.mxu0 %v1828
  %2630 = vmatprep.subr.bf16.mxu0 %v1827
  %2631 = vmatpush1.bf16.msra.mxu0 %v1826
  %2632 = vmatprep.subr.bf16.mxu0 %v1825
  %2633 = vmatpush1.bf16.msra.mxu0 %v1824
  %2634 = vmatprep.subr.bf16.mxu0 %v1823
  %2635 = vmatpush1.bf16.msra.mxu0 %v1822
  %2636 = vmatprep.subr.bf16.mxu0 %v1821
  %2637 = vmatpush1.bf16.msra.mxu0 %v1820
  %2638 = vmatprep.subr.bf16.mxu0 %v1819
  %2639 = vmatpush1.bf16.msra.mxu0 %v1818
  %2640 = vmatprep.subr.bf16.mxu0 %v1817
  %2641 = vmatpush1.bf16.msra.mxu0 %v1816
  %2642 = vmatprep.subr.bf16.mxu0 %v1847
  %2643 = vmatpush2.bf16.msra.mxu0 %v1846
  %2644 = vmatprep.subr.bf16.mxu0 %v1845
  %2645 = vmatpush2.bf16.msra.mxu0 %v1844
  %2646 = vmatprep.subr.bf16.mxu0 %v1843
  %2647 = vmatpush2.bf16.msra.mxu0 %v1842
  %2648 = vmatprep.subr.bf16.mxu0 %v1841
  %2649 = vmatpush2.bf16.msra.mxu0 %v1840
  %2650 = vmatprep.subr.bf16.mxu0 %v1839
  %2651 = vmatpush2.bf16.msra.mxu0 %v1838
  %2652 = vmatprep.subr.bf16.mxu0 %v1837
  %2653 = vmatpush2.bf16.msra.mxu0 %v1836
  %2654 = vmatprep.subr.bf16.mxu0 %v1835
  %2655 = vmatpush2.bf16.msra.mxu0 %v1834
  %2656 = vmatprep.subr.bf16.mxu0 %v1833
  %2657 = vmatpush2.bf16.msra.mxu0 %v1832
  %2658 = vmatprep.mubr.bf16.mxu0 %v532
  %2659 = vmatmul.mubr.bf16.gmra.mxu0 %v531
  %v2660 = vpop.f32.mrf.mxu0
  %v2661 = vadd.f32 %v2618, %v2660
  %v2662 = vpop.f32.mrf.mxu0
  %v2663 = vadd.f32 %v2620, %v2662
  %v2664 = vpop.f32.mrf.mxu0
  %v2665 = vadd.f32 %v2622, %v2664
  %v2666 = vpop.f32.mrf.mxu0
  %v2667 = vadd.f32 %v2624, %v2666
  %2668 = vdwg.mxu0
  %2669 = vmatprep.subr.bf16.mxu0 %v1863
  %2670 = vmatpush1.bf16.msra.mxu0 %v1862
  %2671 = vmatprep.subr.bf16.mxu0 %v1861
  %2672 = vmatpush1.bf16.msra.mxu0 %v1860
  %2673 = vmatprep.subr.bf16.mxu0 %v1859
  %2674 = vmatpush1.bf16.msra.mxu0 %v1858
  %2675 = vmatprep.subr.bf16.mxu0 %v1857
  %2676 = vmatpush1.bf16.msra.mxu0 %v1856
  %2677 = vmatprep.subr.bf16.mxu0 %v1855
  %2678 = vmatpush1.bf16.msra.mxu0 %v1854
  %2679 = vmatprep.subr.bf16.mxu0 %v1853
  %2680 = vmatpush1.bf16.msra.mxu0 %v1852
  %2681 = vmatprep.subr.bf16.mxu0 %v1851
  %2682 = vmatpush1.bf16.msra.mxu0 %v1850
  %2683 = vmatprep.subr.bf16.mxu0 %v1849
  %2684 = vmatpush1.bf16.msra.mxu0 %v1848
  %2685 = vmatprep.subr.bf16.mxu0 %v1879
  %2686 = vmatpush2.bf16.msra.mxu0 %v1878
  %2687 = vmatprep.subr.bf16.mxu0 %v1877
  %2688 = vmatpush2.bf16.msra.mxu0 %v1876
  %2689 = vmatprep.subr.bf16.mxu0 %v1875
  %2690 = vmatpush2.bf16.msra.mxu0 %v1874
  %2691 = vmatprep.subr.bf16.mxu0 %v1873
  %2692 = vmatpush2.bf16.msra.mxu0 %v1872
  %2693 = vmatprep.subr.bf16.mxu0 %v1871
  %2694 = vmatpush2.bf16.msra.mxu0 %v1870
  %2695 = vmatprep.subr.bf16.mxu0 %v1869
  %2696 = vmatpush2.bf16.msra.mxu0 %v1868
  %2697 = vmatprep.subr.bf16.mxu0 %v1867
  %2698 = vmatpush2.bf16.msra.mxu0 %v1866
  %2699 = vmatprep.subr.bf16.mxu0 %v1865
  %2700 = vmatpush2.bf16.msra.mxu0 %v1864
  %2701 = vmatprep.mubr.bf16.mxu0 %v534
  %2702 = vmatmul.mubr.bf16.gmra.mxu0 %v533
  %v2703 = vpop.f32.mrf.mxu0
  %v2704 = vadd.f32 %v2661, %v2703
  %v2705 = vpop.f32.mrf.mxu0
  %v2706 = vadd.f32 %v2663, %v2705
  %v2707 = vpop.f32.mrf.mxu0
  %v2708 = vadd.f32 %v2665, %v2707
  %v2709 = vpop.f32.mrf.mxu0
  %v2710 = vadd.f32 %v2667, %v2709
  %2711 = vdwg.mxu0
  %2712 = vmatprep.subr.bf16.mxu0 %v1895
  %2713 = vmatpush1.bf16.msra.mxu0 %v1894
  %2714 = vmatprep.subr.bf16.mxu0 %v1893
  %2715 = vmatpush1.bf16.msra.mxu0 %v1892
  %2716 = vmatprep.subr.bf16.mxu0 %v1891
  %2717 = vmatpush1.bf16.msra.mxu0 %v1890
  %2718 = vmatprep.subr.bf16.mxu0 %v1889
  %2719 = vmatpush1.bf16.msra.mxu0 %v1888
  %2720 = vmatprep.subr.bf16.mxu0 %v1887
  %2721 = vmatpush1.bf16.msra.mxu0 %v1886
  %2722 = vmatprep.subr.bf16.mxu0 %v1885
  %2723 = vmatpush1.bf16.msra.mxu0 %v1884
  %2724 = vmatprep.subr.bf16.mxu0 %v1883
  %2725 = vmatpush1.bf16.msra.mxu0 %v1882
  %2726 = vmatprep.subr.bf16.mxu0 %v1881
  %2727 = vmatpush1.bf16.msra.mxu0 %v1880
  %2728 = vmatprep.subr.bf16.mxu0 %v1911
  %2729 = vmatpush2.bf16.msra.mxu0 %v1910
  %2730 = vmatprep.subr.bf16.mxu0 %v1909
  %2731 = vmatpush2.bf16.msra.mxu0 %v1908
  %2732 = vmatprep.subr.bf16.mxu0 %v1907
  %2733 = vmatpush2.bf16.msra.mxu0 %v1906
  %2734 = vmatprep.subr.bf16.mxu0 %v1905
  %2735 = vmatpush2.bf16.msra.mxu0 %v1904
  %2736 = vmatprep.subr.bf16.mxu0 %v1903
  %2737 = vmatpush2.bf16.msra.mxu0 %v1902
  %2738 = vmatprep.subr.bf16.mxu0 %v1901
  %2739 = vmatpush2.bf16.msra.mxu0 %v1900
  %2740 = vmatprep.subr.bf16.mxu0 %v1899
  %2741 = vmatpush2.bf16.msra.mxu0 %v1898
  %2742 = vmatprep.subr.bf16.mxu0 %v1897
  %2743 = vmatpush2.bf16.msra.mxu0 %v1896
  %2744 = vmatprep.mubr.bf16.mxu0 %v536
  %2745 = vmatmul.mubr.bf16.gmra.mxu0 %v535
  %v2746 = vpop.f32.mrf.mxu0
  %v2747 = vadd.f32 %v2704, %v2746
  %v2748 = vpop.f32.mrf.mxu0
  %v2749 = vadd.f32 %v2706, %v2748
  %v2750 = vpop.f32.mrf.mxu0
  %v2751 = vadd.f32 %v2708, %v2750
  %v2752 = vpop.f32.mrf.mxu0
  %v2753 = vadd.f32 %v2710, %v2752
  %2754 = vdwg.mxu0
  %2755 = vmatprep.subr.bf16.mxu0 %v1927
  %2756 = vmatpush1.bf16.msra.mxu0 %v1926
  %2757 = vmatprep.subr.bf16.mxu0 %v1925
  %2758 = vmatpush1.bf16.msra.mxu0 %v1924
  %2759 = vmatprep.subr.bf16.mxu0 %v1923
  %2760 = vmatpush1.bf16.msra.mxu0 %v1922
  %2761 = vmatprep.subr.bf16.mxu0 %v1921
  %2762 = vmatpush1.bf16.msra.mxu0 %v1920
  %2763 = vmatprep.subr.bf16.mxu0 %v1919
  %2764 = vmatpush1.bf16.msra.mxu0 %v1918
  %2765 = vmatprep.subr.bf16.mxu0 %v1917
  %2766 = vmatpush1.bf16.msra.mxu0 %v1916
  %2767 = vmatprep.subr.bf16.mxu0 %v1915
  %2768 = vmatpush1.bf16.msra.mxu0 %v1914
  %2769 = vmatprep.subr.bf16.mxu0 %v1913
  %2770 = vmatpush1.bf16.msra.mxu0 %v1912
  %2771 = vmatprep.subr.bf16.mxu0 %v1943
  %2772 = vmatpush2.bf16.msra.mxu0 %v1942
  %2773 = vmatprep.subr.bf16.mxu0 %v1941
  %2774 = vmatpush2.bf16.msra.mxu0 %v1940
  %2775 = vmatprep.subr.bf16.mxu0 %v1939
  %2776 = vmatpush2.bf16.msra.mxu0 %v1938
  %2777 = vmatprep.subr.bf16.mxu0 %v1937
  %2778 = vmatpush2.bf16.msra.mxu0 %v1936
  %2779 = vmatprep.subr.bf16.mxu0 %v1935
  %2780 = vmatpush2.bf16.msra.mxu0 %v1934
  %2781 = vmatprep.subr.bf16.mxu0 %v1933
  %2782 = vmatpush2.bf16.msra.mxu0 %v1932
  %2783 = vmatprep.subr.bf16.mxu0 %v1931
  %2784 = vmatpush2.bf16.msra.mxu0 %v1930
  %2785 = vmatprep.subr.bf16.mxu0 %v1929
  %2786 = vmatpush2.bf16.msra.mxu0 %v1928
  %2787 = vmatprep.mubr.bf16.mxu0 %v538
  %2788 = vmatmul.mubr.bf16.gmra.mxu0 %v537
  %v2789 = vpop.f32.mrf.mxu0
  %v2790 = vadd.f32 %v2747, %v2789
  %v2791 = vpop.f32.mrf.mxu0
  %v2792 = vadd.f32 %v2749, %v2791
  %v2793 = vpop.f32.mrf.mxu0
  %v2794 = vadd.f32 %v2751, %v2793
  %v2795 = vpop.f32.mrf.mxu0
  %v2796 = vadd.f32 %v2753, %v2795
  %2797 = vdwg.mxu0
  %2798 = vmatprep.subr.bf16.mxu0 %v1959
  %2799 = vmatpush1.bf16.msra.mxu0 %v1958
  %2800 = vmatprep.subr.bf16.mxu0 %v1957
  %2801 = vmatpush1.bf16.msra.mxu0 %v1956
  %2802 = vmatprep.subr.bf16.mxu0 %v1955
  %2803 = vmatpush1.bf16.msra.mxu0 %v1954
  %2804 = vmatprep.subr.bf16.mxu0 %v1953
  %2805 = vmatpush1.bf16.msra.mxu0 %v1952
  %2806 = vmatprep.subr.bf16.mxu0 %v1951
  %2807 = vmatpush1.bf16.msra.mxu0 %v1950
  %2808 = vmatprep.subr.bf16.mxu0 %v1949
  %2809 = vmatpush1.bf16.msra.mxu0 %v1948
  %2810 = vmatprep.subr.bf16.mxu0 %v1947
  %2811 = vmatpush1.bf16.msra.mxu0 %v1946
  %2812 = vmatprep.subr.bf16.mxu0 %v1945
  %2813 = vmatpush1.bf16.msra.mxu0 %v1944
  %2814 = vmatprep.subr.bf16.mxu0 %v1975
  %2815 = vmatpush2.bf16.msra.mxu0 %v1974
  %2816 = vmatprep.subr.bf16.mxu0 %v1973
  %2817 = vmatpush2.bf16.msra.mxu0 %v1972
  %2818 = vmatprep.subr.bf16.mxu0 %v1971
  %2819 = vmatpush2.bf16.msra.mxu0 %v1970
  %2820 = vmatprep.subr.bf16.mxu0 %v1969
  %2821 = vmatpush2.bf16.msra.mxu0 %v1968
  %2822 = vmatprep.subr.bf16.mxu0 %v1967
  %2823 = vmatpush2.bf16.msra.mxu0 %v1966
  %2824 = vmatprep.subr.bf16.mxu0 %v1965
  %2825 = vmatpush2.bf16.msra.mxu0 %v1964
  %2826 = vmatprep.subr.bf16.mxu0 %v1963
  %2827 = vmatpush2.bf16.msra.mxu0 %v1962
  %2828 = vmatprep.subr.bf16.mxu0 %v1961
  %2829 = vmatpush2.bf16.msra.mxu0 %v1960
  %2830 = vmatprep.mubr.bf16.mxu0 %v540
  %2831 = vmatmul.mubr.bf16.gmra.mxu0 %v539
  %v2832 = vpop.f32.mrf.mxu0
  %v2833 = vadd.f32 %v2790, %v2832
  %v2834 = vpop.f32.mrf.mxu0
  %v2835 = vadd.f32 %v2792, %v2834
  %v2836 = vpop.f32.mrf.mxu0
  %v2837 = vadd.f32 %v2794, %v2836
  %v2838 = vpop.f32.mrf.mxu0
  %v2839 = vadd.f32 %v2796, %v2838
  %2840 = vdwg.mxu0
  %2841 = vmatprep.subr.bf16.mxu0 %v1991
  %2842 = vmatpush1.bf16.msra.mxu0 %v1990
  %2843 = vmatprep.subr.bf16.mxu0 %v1989
  %2844 = vmatpush1.bf16.msra.mxu0 %v1988
  %2845 = vmatprep.subr.bf16.mxu0 %v1987
  %2846 = vmatpush1.bf16.msra.mxu0 %v1986
  %2847 = vmatprep.subr.bf16.mxu0 %v1985
  %2848 = vmatpush1.bf16.msra.mxu0 %v1984
  %2849 = vmatprep.subr.bf16.mxu0 %v1983
  %2850 = vmatpush1.bf16.msra.mxu0 %v1982
  %2851 = vmatprep.subr.bf16.mxu0 %v1981
  %2852 = vmatpush1.bf16.msra.mxu0 %v1980
  %2853 = vmatprep.subr.bf16.mxu0 %v1979
  %2854 = vmatpush1.bf16.msra.mxu0 %v1978
  %2855 = vmatprep.subr.bf16.mxu0 %v1977
  %2856 = vmatpush1.bf16.msra.mxu0 %v1976
  %2857 = vmatprep.subr.bf16.mxu0 %v2007
  %2858 = vmatpush2.bf16.msra.mxu0 %v2006
  %2859 = vmatprep.subr.bf16.mxu0 %v2005
  %2860 = vmatpush2.bf16.msra.mxu0 %v2004
  %2861 = vmatprep.subr.bf16.mxu0 %v2003
  %2862 = vmatpush2.bf16.msra.mxu0 %v2002
  %2863 = vmatprep.subr.bf16.mxu0 %v2001
  %2864 = vmatpush2.bf16.msra.mxu0 %v2000
  %2865 = vmatprep.subr.bf16.mxu0 %v1999
  %2866 = vmatpush2.bf16.msra.mxu0 %v1998
  %2867 = vmatprep.subr.bf16.mxu0 %v1997
  %2868 = vmatpush2.bf16.msra.mxu0 %v1996
  %2869 = vmatprep.subr.bf16.mxu0 %v1995
  %2870 = vmatpush2.bf16.msra.mxu0 %v1994
  %2871 = vmatprep.subr.bf16.mxu0 %v1993
  %2872 = vmatpush2.bf16.msra.mxu0 %v1992
  %2873 = vmatprep.mubr.bf16.mxu0 %v542
  %2874 = vmatmul.mubr.bf16.gmra.mxu0 %v541
  %v2875 = vpop.f32.mrf.mxu0
  %v2876 = vadd.f32 %v2833, %v2875
  %v2877 = vpop.f32.mrf.mxu0
  %v2878 = vadd.f32 %v2835, %v2877
  %v2879 = vpop.f32.mrf.mxu0
  %v2880 = vadd.f32 %v2837, %v2879
  %v2881 = vpop.f32.mrf.mxu0
  %v2882 = vadd.f32 %v2839, %v2881
  %2883 = vdwg.mxu0
  %2884 = vmatprep.subr.bf16.mxu0 %v2023
  %2885 = vmatpush1.bf16.msra.mxu0 %v2022
  %2886 = vmatprep.subr.bf16.mxu0 %v2021
  %2887 = vmatpush1.bf16.msra.mxu0 %v2020
  %2888 = vmatprep.subr.bf16.mxu0 %v2019
  %2889 = vmatpush1.bf16.msra.mxu0 %v2018
  %2890 = vmatprep.subr.bf16.mxu0 %v2017
  %2891 = vmatpush1.bf16.msra.mxu0 %v2016
  %2892 = vmatprep.subr.bf16.mxu0 %v2015
  %2893 = vmatpush1.bf16.msra.mxu0 %v2014
  %2894 = vmatprep.subr.bf16.mxu0 %v2013
  %2895 = vmatpush1.bf16.msra.mxu0 %v2012
  %2896 = vmatprep.subr.bf16.mxu0 %v2011
  %2897 = vmatpush1.bf16.msra.mxu0 %v2010
  %2898 = vmatprep.subr.bf16.mxu0 %v2009
  %2899 = vmatpush1.bf16.msra.mxu0 %v2008
  %2900 = vmatprep.subr.bf16.mxu0 %v2039
  %2901 = vmatpush2.bf16.msra.mxu0 %v2038
  %2902 = vmatprep.subr.bf16.mxu0 %v2037
  %2903 = vmatpush2.bf16.msra.mxu0 %v2036
  %2904 = vmatprep.subr.bf16.mxu0 %v2035
  %2905 = vmatpush2.bf16.msra.mxu0 %v2034
  %2906 = vmatprep.subr.bf16.mxu0 %v2033
  %2907 = vmatpush2.bf16.msra.mxu0 %v2032
  %2908 = vmatprep.subr.bf16.mxu0 %v2031
  %2909 = vmatpush2.bf16.msra.mxu0 %v2030
  %2910 = vmatprep.subr.bf16.mxu0 %v2029
  %2911 = vmatpush2.bf16.msra.mxu0 %v2028
  %2912 = vmatprep.subr.bf16.mxu0 %v2027
  %2913 = vmatpush2.bf16.msra.mxu0 %v2026
  %2914 = vmatprep.subr.bf16.mxu0 %v2025
  %2915 = vmatpush2.bf16.msra.mxu0 %v2024
  %2916 = vmatprep.mubr.bf16.mxu0 %v544
  %2917 = vmatmul.mubr.bf16.gmra.mxu0 %v543
  %v2918 = vpop.f32.mrf.mxu0
  %v2919 = vadd.f32 %v2876, %v2918
  %v2920 = vpop.f32.mrf.mxu0
  %v2921 = vadd.f32 %v2878, %v2920
  %v2922 = vpop.f32.mrf.mxu0
  %v2923 = vadd.f32 %v2880, %v2922
  %v2924 = vpop.f32.mrf.mxu0
  %v2925 = vadd.f32 %v2882, %v2924
  %2926 = vdwg.mxu0
  %2927 = vmatprep.subr.bf16.mxu0 %v2055
  %2928 = vmatpush1.bf16.msra.mxu0 %v2054
  %2929 = vmatprep.subr.bf16.mxu0 %v2053
  %2930 = vmatpush1.bf16.msra.mxu0 %v2052
  %2931 = vmatprep.subr.bf16.mxu0 %v2051
  %2932 = vmatpush1.bf16.msra.mxu0 %v2050
  %2933 = vmatprep.subr.bf16.mxu0 %v2049
  %2934 = vmatpush1.bf16.msra.mxu0 %v2048
  %2935 = vmatprep.subr.bf16.mxu0 %v2047
  %2936 = vmatpush1.bf16.msra.mxu0 %v2046
  %2937 = vmatprep.subr.bf16.mxu0 %v2045
  %2938 = vmatpush1.bf16.msra.mxu0 %v2044
  %2939 = vmatprep.subr.bf16.mxu0 %v2043
  %2940 = vmatpush1.bf16.msra.mxu0 %v2042
  %2941 = vmatprep.subr.bf16.mxu0 %v2041
  %2942 = vmatpush1.bf16.msra.mxu0 %v2040
  %2943 = vmatprep.subr.bf16.mxu0 %v2071
  %2944 = vmatpush2.bf16.msra.mxu0 %v2070
  %2945 = vmatprep.subr.bf16.mxu0 %v2069
  %2946 = vmatpush2.bf16.msra.mxu0 %v2068
  %2947 = vmatprep.subr.bf16.mxu0 %v2067
  %2948 = vmatpush2.bf16.msra.mxu0 %v2066
  %2949 = vmatprep.subr.bf16.mxu0 %v2065
  %2950 = vmatpush2.bf16.msra.mxu0 %v2064
  %2951 = vmatprep.subr.bf16.mxu0 %v2063
  %2952 = vmatpush2.bf16.msra.mxu0 %v2062
  %2953 = vmatprep.subr.bf16.mxu0 %v2061
  %2954 = vmatpush2.bf16.msra.mxu0 %v2060
  %2955 = vmatprep.subr.bf16.mxu0 %v2059
  %2956 = vmatpush2.bf16.msra.mxu0 %v2058
  %2957 = vmatprep.subr.bf16.mxu0 %v2057
  %2958 = vmatpush2.bf16.msra.mxu0 %v2056
  %2959 = vmatprep.mubr.bf16.mxu0 %v546
  %2960 = vmatmul.mubr.bf16.gmra.mxu0 %v545
  %v2961 = vpop.f32.mrf.mxu0
  %v2962 = vadd.f32 %v2919, %v2961
  %v2963 = vpop.f32.mrf.mxu0
  %v2964 = vadd.f32 %v2921, %v2963
  %v2965 = vpop.f32.mrf.mxu0
  %v2966 = vadd.f32 %v2923, %v2965
  %v2967 = vpop.f32.mrf.mxu0
  %v2968 = vadd.f32 %v2925, %v2967
  %2969 = vdwg.mxu0
  %2970 = vmatprep.subr.bf16.mxu0 %v2087
  %2971 = vmatpush1.bf16.msra.mxu0 %v2086
  %2972 = vmatprep.subr.bf16.mxu0 %v2085
  %2973 = vmatpush1.bf16.msra.mxu0 %v2084
  %2974 = vmatprep.subr.bf16.mxu0 %v2083
  %2975 = vmatpush1.bf16.msra.mxu0 %v2082
  %2976 = vmatprep.subr.bf16.mxu0 %v2081
  %2977 = vmatpush1.bf16.msra.mxu0 %v2080
  %2978 = vmatprep.subr.bf16.mxu0 %v2079
  %2979 = vmatpush1.bf16.msra.mxu0 %v2078
  %2980 = vmatprep.subr.bf16.mxu0 %v2077
  %2981 = vmatpush1.bf16.msra.mxu0 %v2076
  %2982 = vmatprep.subr.bf16.mxu0 %v2075
  %2983 = vmatpush1.bf16.msra.mxu0 %v2074
  %2984 = vmatprep.subr.bf16.mxu0 %v2073
  %2985 = vmatpush1.bf16.msra.mxu0 %v2072
  %2986 = vmatprep.subr.bf16.mxu0 %v2103
  %2987 = vmatpush2.bf16.msra.mxu0 %v2102
  %2988 = vmatprep.subr.bf16.mxu0 %v2101
  %2989 = vmatpush2.bf16.msra.mxu0 %v2100
  %2990 = vmatprep.subr.bf16.mxu0 %v2099
  %2991 = vmatpush2.bf16.msra.mxu0 %v2098
  %2992 = vmatprep.subr.bf16.mxu0 %v2097
  %2993 = vmatpush2.bf16.msra.mxu0 %v2096
  %2994 = vmatprep.subr.bf16.mxu0 %v2095
  %2995 = vmatpush2.bf16.msra.mxu0 %v2094
  %2996 = vmatprep.subr.bf16.mxu0 %v2093
  %2997 = vmatpush2.bf16.msra.mxu0 %v2092
  %2998 = vmatprep.subr.bf16.mxu0 %v2091
  %2999 = vmatpush2.bf16.msra.mxu0 %v2090
  %3000 = vmatprep.subr.bf16.mxu0 %v2089
  %3001 = vmatpush2.bf16.msra.mxu0 %v2088
  %3002 = vmatprep.mubr.bf16.mxu0 %v548
  %3003 = vmatmul.mubr.bf16.gmra.mxu0 %v547
  %v3004 = vpop.f32.mrf.mxu0
  %v3005 = vadd.f32 %v2962, %v3004
  %v3006 = vpop.f32.mrf.mxu0
  %v3007 = vadd.f32 %v2964, %v3006
  %v3008 = vpop.f32.mrf.mxu0
  %v3009 = vadd.f32 %v2966, %v3008
  %v3010 = vpop.f32.mrf.mxu0
  %v3011 = vadd.f32 %v2968, %v3010
  %3012 = vdwg.mxu0
  %3013 = vmatprep.subr.bf16.mxu0 %v2119
  %3014 = vmatpush1.bf16.msra.mxu0 %v2118
  %3015 = vmatprep.subr.bf16.mxu0 %v2117
  %3016 = vmatpush1.bf16.msra.mxu0 %v2116
  %3017 = vmatprep.subr.bf16.mxu0 %v2115
  %3018 = vmatpush1.bf16.msra.mxu0 %v2114
  %3019 = vmatprep.subr.bf16.mxu0 %v2113
  %3020 = vmatpush1.bf16.msra.mxu0 %v2112
  %3021 = vmatprep.subr.bf16.mxu0 %v2111
  %3022 = vmatpush1.bf16.msra.mxu0 %v2110
  %3023 = vmatprep.subr.bf16.mxu0 %v2109
  %3024 = vmatpush1.bf16.msra.mxu0 %v2108
  %3025 = vmatprep.subr.bf16.mxu0 %v2107
  %3026 = vmatpush1.bf16.msra.mxu0 %v2106
  %3027 = vmatprep.subr.bf16.mxu0 %v2105
  %3028 = vmatpush1.bf16.msra.mxu0 %v2104
  %3029 = vmatprep.subr.bf16.mxu0 %v2135
  %3030 = vmatpush2.bf16.msra.mxu0 %v2134
  %3031 = vmatprep.subr.bf16.mxu0 %v2133
  %3032 = vmatpush2.bf16.msra.mxu0 %v2132
  %3033 = vmatprep.subr.bf16.mxu0 %v2131
  %3034 = vmatpush2.bf16.msra.mxu0 %v2130
  %3035 = vmatprep.subr.bf16.mxu0 %v2129
  %3036 = vmatpush2.bf16.msra.mxu0 %v2128
  %3037 = vmatprep.subr.bf16.mxu0 %v2127
  %3038 = vmatpush2.bf16.msra.mxu0 %v2126
  %3039 = vmatprep.subr.bf16.mxu0 %v2125
  %3040 = vmatpush2.bf16.msra.mxu0 %v2124
  %3041 = vmatprep.subr.bf16.mxu0 %v2123
  %3042 = vmatpush2.bf16.msra.mxu0 %v2122
  %3043 = vmatprep.subr.bf16.mxu0 %v2121
  %3044 = vmatpush2.bf16.msra.mxu0 %v2120
  %3045 = vmatprep.mubr.bf16.mxu0 %v550
  %3046 = vmatmul.mubr.bf16.gmra.mxu0 %v549
  %v3047 = vpop.f32.mrf.mxu0
  %v3048 = vadd.f32 %v3005, %v3047
  %v3049 = vpop.f32.mrf.mxu0
  %v3050 = vadd.f32 %v3007, %v3049
  %v3051 = vpop.f32.mrf.mxu0
  %v3052 = vadd.f32 %v3009, %v3051
  %v3053 = vpop.f32.mrf.mxu0
  %v3054 = vadd.f32 %v3011, %v3053
  %3055 = vdwg.mxu0
  %3056 = vmatprep.subr.bf16.mxu0 0
  %3057 = vmatpush1.bf16.msra.mxu0 0
  %3058 = vmatprep.subr.bf16.mxu0 0
  %3059 = vmatpush1.bf16.msra.mxu0 0
  %3060 = vmatprep.subr.bf16.mxu0 0
  %3061 = vmatpush1.bf16.msra.mxu0 0
  %3062 = vmatprep.subr.bf16.mxu0 0
  %3063 = vmatpush1.bf16.msra.mxu0 0
  %3064 = vmatprep.subr.bf16.mxu0 %v2143
  %3065 = vmatpush1.bf16.msra.mxu0 %v2142
  %3066 = vmatprep.subr.bf16.mxu0 %v2141
  %3067 = vmatpush1.bf16.msra.mxu0 %v2140
  %3068 = vmatprep.subr.bf16.mxu0 %v2139
  %3069 = vmatpush1.bf16.msra.mxu0 %v2138
  %3070 = vmatprep.subr.bf16.mxu0 %v2137
  %3071 = vmatpush1.bf16.msra.mxu0 %v2136
  %3072 = vmatprep.subr.bf16.mxu0 0
  %3073 = vmatpush2.bf16.msra.mxu0 0
  %3074 = vmatprep.subr.bf16.mxu0 0
  %3075 = vmatpush2.bf16.msra.mxu0 0
  %3076 = vmatprep.subr.bf16.mxu0 0
  %3077 = vmatpush2.bf16.msra.mxu0 0
  %3078 = vmatprep.subr.bf16.mxu0 0
  %3079 = vmatpush2.bf16.msra.mxu0 0
  %3080 = vmatprep.subr.bf16.mxu0 0
  %3081 = vmatpush2.bf16.msra.mxu0 0
  %3082 = vmatprep.subr.bf16.mxu0 0
  %3083 = vmatpush2.bf16.msra.mxu0 0
  %3084 = vmatprep.subr.bf16.mxu0 0
  %3085 = vmatpush2.bf16.msra.mxu0 0
  %3086 = vmatprep.subr.bf16.mxu0 0
  %3087 = vmatpush2.bf16.msra.mxu0 0
  %3088 = vmatprep.mubr.bf16.mxu0 0
  %3089 = vmatmul.mubr.bf16.gmra.mxu0 %v2538
  %v3090 = vpop.f32.mrf.mxu0
  %v3091 = vadd.f32 %v3048, %v3090
  %v3092 = vpop.f32.mrf.mxu0
  %v3093 = vadd.f32 %v3050, %v3092
  %v3094 = vpop.f32.mrf.mxu0
  %v3095 = vadd.f32 %v3052, %v3094
  %v3096 = vpop.f32.mrf.mxu0
  %v3097 = vadd.f32 %v3054, %v3096
  %3098 = vdwg.mxu0
  %v3099 = vmax.f32 %v3091, 0.0
  %v3100 = vmax.f32 %v3093, 0.0
  %v3101 = vmax.f32 %v3095, 0.0
  %v3102 = vmax.f32 %v3097, 0.0
  %v3103 = vpack.c.bf16 %v3101, %v3099
  %v3104 = vpack.c.bf16 %v3102, %v3100
  %v3105 = vld [vmem:[%s3] sm:$0xf]
  %v3106 = vld [vmem:[%s3 + $0x4] sm:$0xf]
  %v3107 = vld [vmem:[%s3 + $0x8] sm:$0xf]
  %v3108 = vld [vmem:[%s3 + $0xc] sm:$0xf]
  %v3109 = vld [vmem:[%s3 + $0x10] sm:$0xf]
  %v3110 = vld [vmem:[%s3 + $0x14] sm:$0xf]
  %v3111 = vld [vmem:[%s3 + $0x18] sm:$0xf]
  %v3112 = vld [vmem:[%s3 + $0x1c] sm:$0xf]
  %v3113 = vld [vmem:[%s3 + $0x20] sm:$0xf]
  %v3114 = vld [vmem:[%s3 + $0x24] sm:$0xf]
  %v3115 = vld [vmem:[%s3 + $0x28] sm:$0xf]
  %v3116 = vld [vmem:[%s3 + $0x2c] sm:$0xf]
  %v3117 = vld [vmem:[%s3 + $0x30] sm:$0xf]
  %v3118 = vld [vmem:[%s3 + $0x34] sm:$0xf]
  %v3119 = vld [vmem:[%s3 + $0x38] sm:$0xf]
  %v3120 = vld [vmem:[%s3 + $0x3c] sm:$0xf]
  %v3121 = vld [vmem:[%s3 + $0x40] sm:$0xf]
  %v3122 = vld [vmem:[%s3 + $0x44] sm:$0xf]
  %v3123 = vld [vmem:[%s3 + $0x48] sm:$0xf]
  %v3124 = vld [vmem:[%s3 + $0x4c] sm:$0xf]
  %v3125 = vld [vmem:[%s3 + $0x50] sm:$0xf]
  %v3126 = vld [vmem:[%s3 + $0x54] sm:$0xf]
  %v3127 = vld [vmem:[%s3 + $0x58] sm:$0xf]
  %v3128 = vld [vmem:[%s3 + $0x5c] sm:$0xf]
  %v3129 = vld [vmem:[%s3 + $0x60] sm:$0xf]
  %v3130 = vld [vmem:[%s3 + $0x64] sm:$0xf]
  %v3131 = vld [vmem:[%s3 + $0x68] sm:$0xf]
  %v3132 = vld [vmem:[%s3 + $0x6c] sm:$0xf]
  %v3133 = vld [vmem:[%s3 + $0x70] sm:$0xf]
  %v3134 = vld [vmem:[%s3 + $0x74] sm:$0xf]
  %v3135 = vld [vmem:[%s3 + $0x78] sm:$0xf]
  %v3136 = vld [vmem:[%s3 + $0x7c] sm:$0xf]
  %v3137 = vld [vmem:[%s4] sm:$0x1]
  %v3139 = vlaneseq
  %v3140 = vshrl.u32 %v3139, 7
  %v3141 = vsub.s32 0, %v3140
  %v3142 = vrot.slane %v3137, %v3141
  %v3176 = vunpack.c.l.b16 %v3105
  %v3177 = vunpack.c.l.b16 %v3106
  %v3178 = vunpack.c.l.b16 %v3107
  %v3179 = vunpack.c.l.b16 %v3108
  %v3180 = vunpack.c.l.b16 %v3109
  %v3181 = vunpack.c.l.b16 %v3110
  %v3182 = vunpack.c.l.b16 %v3111
  %v3183 = vunpack.c.l.b16 %v3112
  %v3184 = vunpack.c.l.b16 %v3113
  %v3185 = vunpack.c.l.b16 %v3114
  %v3186 = vunpack.c.l.b16 %v3115
  %v3187 = vunpack.c.l.b16 %v3116
  %v3188 = vunpack.c.l.b16 %v3117
  %v3189 = vunpack.c.l.b16 %v3118
  %v3190 = vunpack.c.l.b16 %v3119
  %v3191 = vunpack.c.l.b16 %v3120
  %v3192 = vunpack.c.l.b16 %v3121
  %v3193 = vunpack.c.l.b16 %v3122
  %v3194 = vunpack.c.l.b16 %v3123
  %v3195 = vunpack.c.l.b16 %v3124
  %v3196 = vunpack.c.l.b16 %v3125
  %v3197 = vunpack.c.l.b16 %v3126
  %v3198 = vunpack.c.l.b16 %v3127
  %v3199 = vunpack.c.l.b16 %v3128
  %v3200 = vunpack.c.l.b16 %v3129
  %v3201 = vunpack.c.l.b16 %v3130
  %v3202 = vunpack.c.l.b16 %v3131
  %v3203 = vunpack.c.l.b16 %v3132
  %v3204 = vunpack.c.l.b16 %v3133
  %v3205 = vunpack.c.l.b16 %v3134
  %v3206 = vunpack.c.l.b16 %v3135
  %v3207 = vunpack.c.l.b16 %v3136
  %v3208 = vpack.c.b16 %v3177, %v3176
  %v3209 = vpack.c.b16 %v3179, %v3178
  %v3210 = vpack.c.b16 %v3181, %v3180
  %v3211 = vpack.c.b16 %v3183, %v3182
  %v3212 = vpack.c.b16 %v3185, %v3184
  %v3213 = vpack.c.b16 %v3187, %v3186
  %v3214 = vpack.c.b16 %v3189, %v3188
  %v3215 = vpack.c.b16 %v3191, %v3190
  %v3216 = vpack.c.b16 %v3193, %v3192
  %v3217 = vpack.c.b16 %v3195, %v3194
  %v3218 = vpack.c.b16 %v3197, %v3196
  %v3219 = vpack.c.b16 %v3199, %v3198
  %v3220 = vpack.c.b16 %v3201, %v3200
  %v3221 = vpack.c.b16 %v3203, %v3202
  %v3222 = vpack.c.b16 %v3205, %v3204
  %v3223 = vpack.c.b16 %v3207, %v3206
  %3240 = vmatprep.subr.bf16.mxu0 0
  %3241 = vmatpush1.bf16.msra.mxu0 %v3215
  %3242 = vmatprep.subr.bf16.mxu0 0
  %3243 = vmatpush1.bf16.msra.mxu0 %v3214
  %3244 = vmatprep.subr.bf16.mxu0 0
  %3245 = vmatpush1.bf16.msra.mxu0 %v3213
  %3246 = vmatprep.subr.bf16.mxu0 0
  %3247 = vmatpush1.bf16.msra.mxu0 %v3212
  %3248 = vmatprep.subr.bf16.mxu0 0
  %3249 = vmatpush1.bf16.msra.mxu0 %v3211
  %3250 = vmatprep.subr.bf16.mxu0 0
  %3251 = vmatpush1.bf16.msra.mxu0 %v3210
  %3252 = vmatprep.subr.bf16.mxu0 0
  %3253 = vmatpush1.bf16.msra.mxu0 %v3209
  %3254 = vmatprep.subr.bf16.mxu0 0
  %3255 = vmatpush1.bf16.msra.mxu0 %v3208
  %3256 = vmatprep.subr.bf16.mxu0 0
  %3257 = vmatpush2.bf16.msra.mxu0 %v3223
  %3258 = vmatprep.subr.bf16.mxu0 0
  %3259 = vmatpush2.bf16.msra.mxu0 %v3222
  %3260 = vmatprep.subr.bf16.mxu0 0
  %3261 = vmatpush2.bf16.msra.mxu0 %v3221
  %3262 = vmatprep.subr.bf16.mxu0 0
  %3263 = vmatpush2.bf16.msra.mxu0 %v3220
  %3264 = vmatprep.subr.bf16.mxu0 0
  %3265 = vmatpush2.bf16.msra.mxu0 %v3219
  %3266 = vmatprep.subr.bf16.mxu0 0
  %3267 = vmatpush2.bf16.msra.mxu0 %v3218
  %3268 = vmatprep.subr.bf16.mxu0 0
  %3269 = vmatpush2.bf16.msra.mxu0 %v3217
  %3270 = vmatprep.subr.bf16.mxu0 0
  %3271 = vmatpush2.bf16.msra.mxu0 %v3216
  %3272 = vmatprep.mubr.bf16.mxu0 %v3104
  %3273 = vmatmul.mubr.bf16.gmra.mxu0 %v3103
  %v3274 = vpop.f32.mrf.mxu0
  %v3275 = vadd.f32 %v3142, %v3274
  %v3276 = vpop.f32.mrf.mxu0
  %v3277 = vpop.f32.mrf.mxu0
  %v3278 = vadd.f32 %v3142, %v3277
  %v3279 = vpop.f32.mrf.mxu0
  %3280 = vdwg.mxu0
  %3281 = vst [vmem:[%s5] sm:$0xff] %v3275
  %3282 = vst [vmem:[%s5 + $0x8] sm:$0xff] %v3278
  // Predicated region
  $region22: #{forward.7} parent=0 // pred_check
    _
  $region23: #{forward.7} parent=0 // pred_check_branch
    %3284 = sbr.rel (0) target = $region25
  $region24: #{forward.7} parent=0 // pred_region
    _
  $region25: #{forward.7} parent=0 // pred_fallthru
    _
  // Predicated region
  $region26: #{forward.7} parent=0 // pred_check
    _
  $region27: #{forward.7} parent=0 // pred_check_branch
    %3286 = sbr.rel (0) target = $region29
  $region28: #{forward.7} parent=0 // pred_region
    _
  $region29: #{forward.7} parent=0 // pred_fallthru
    _

</llo_original>
